<compile_context>
chip_gen: v7x
topology: tpu7x:2x2x1
jax: 0.10.0
libtpu: 0.0.40
codegen_flags: <defaults>
</compile_context>

<pallas_src>
import functools

import jax
import jax.numpy as jnp
from jax import lax
from jax.experimental import pallas as pl
from jax.experimental.pallas import tpu as pltpu


def _bilstm_kernel(x_ref,              # (T*Bp, nIn)        compute dtype
                   wih_ref,            # (nIn, 8*Hp)        cd  [fwd gates | bwd gates]
                   whh_f_ref,          # (Hp, 4*Hp)         cd
                   whh_b_ref,          # (Hp, 4*Hp)         cd
                   b_ref,              # (1, 8*Hp)          f32 [fwd bias  | bwd bias ]
                   wfc_ref,            # (2*Hp, nOutP)      cd
                   bfc_ref,            # (1, nOutP)         f32
                   out_ref,            # (T*Bp, nOutP)      f32
                   gx_ref,             # scratch (T*Bp, 8*Hp)  cd
                   rec_ref,            # scratch (T*Bp, 2*Hp)  cd  [h_fwd | h_bwd]
                   *, T, Bp, unroll):
    Hp = whh_f_ref.shape[0]
    G = 4 * Hp
    cd = whh_f_ref.dtype                       # matmul-operand dtype

    # ---- (1) Hoisted + fused input projection: ONE large-M MXU matmul covers
    #          both directions; biases folded; stored in compute dtype.
    gx_ref[...] = (jnp.dot(x_ref[...], wih_ref[...],
                           preferred_element_type=jnp.float32)
                   + b_ref[...]).astype(cd)

    def sig(z):
        # sigmoid via tanh: one EUP push instead of exp + reciprocal (two).
        return 0.5 * jnp.tanh(0.5 * z) + 0.5

    def cell(gx, h, c, whh_ref):
        # gates: (Bp, 4*Hp), PyTorch gate order i, f, g, o.
        gates = gx.astype(jnp.float32) + jnp.dot(
            h.astype(cd), whh_ref[...], preferred_element_type=jnp.float32)
        i = sig(gates[:, 0 * Hp:1 * Hp])
        f = sig(gates[:, 1 * Hp:2 * Hp])
        g = jnp.tanh(gates[:, 2 * Hp:3 * Hp])
        o = sig(gates[:, 3 * Hp:4 * Hp])
        c = f * c + i * g
        h = o * jnp.tanh(c)
        return h, c

    z = jnp.zeros((Bp, Hp), jnp.float32)

    # ---- (2) Fused fwd+bwd recurrence: iteration k handles forward step t=k
    #          and backward step t=T-1-k (two independent chains / iteration).
    def body(k, carry):
        hf, cf, hb, cb = carry
        rf = pl.multiple_of(k * Bp, Bp)
        rb = pl.multiple_of((T - 1 - k) * Bp, Bp)
        hf, cf = cell(gx_ref[pl.ds(rf, Bp), pl.ds(0, G)], hf, cf, whh_f_ref)
        hb, cb = cell(gx_ref[pl.ds(rb, Bp), pl.ds(G, G)], hb, cb, whh_b_ref)
        rec_ref[pl.ds(rf, Bp), pl.ds(0, Hp)] = hf.astype(cd)
        rec_ref[pl.ds(rb, Bp), pl.ds(Hp, Hp)] = hb.astype(cd)
        return hf, cf, hb, cb

    lax.fori_loop(0, T, body, (z, z, z, z), unroll=unroll)

    # ---- (3) Fused FC after the recurrence: one lane-dense large-M matmul
    #          over the concatenated [h_fwd | h_bwd] hidden states.
    out_ref[...] = (jnp.dot(rec_ref[...], wfc_ref[...],
                            preferred_element_type=jnp.float32)
                    + bfc_ref[...])


def _round_up(v, m):
    return (v + m - 1) // m * m


def _pad_axis(a, axis, target):
    pad = target - a.shape[axis]
    if pad == 0:
        return a
    widths = [(0, 0)] * a.ndim
    widths[axis] = (0, pad)
    return jnp.pad(a, widths)


def _pack_dir(w_ih, w_hh, b_ih, b_hh, H, Hp, cd):
    # PyTorch layout: w_ih (4H, nIn), w_hh (4H, H), biases (4H,), gates i,f,g,o.
    # Pad each gate block to Hp lanes (zeros), fold the two biases together.
    nIn = w_ih.shape[1]
    wih = _pad_axis(w_ih.reshape(4, H, nIn), 1, Hp).reshape(4 * Hp, nIn)
    whh = _pad_axis(_pad_axis(w_hh.reshape(4, H, H), 1, Hp), 2, Hp).reshape(4 * Hp, Hp)
    b = _pad_axis((b_ih + b_hh).reshape(4, H), 1, Hp).reshape(4 * Hp)
    return wih.T.astype(cd), whh.T.astype(cd), b.astype(jnp.float32)


def bidirectional_lstm(x, params, *, compute_dtype=jnp.bfloat16):
    """x: (T, B, nIn) float32 -> (T, B, nOut) float32.

    compute_dtype is the MXU matmul-operand dtype.  Default bfloat16: the MXU
    is bf16-native on v5e/v6e/v7x (f32 operands are multi-pass emulated and
    double VMEM traffic).  Cell state, gating non-linearities and all
    accumulations stay float32 either way; pass jnp.float32 for bit-tight
    validation.  Note: in the bf16 path the recurrent state is rounded to bf16
    every step — validate at production T if drift matters.
    """
    T, B, nIn = x.shape
    H = params["w_hh_f"].shape[1]
    nOut = params["w_fc"].shape[0]
    cd = compute_dtype

    # Kernel-side padded layout.
    #   Hp: per-gate hidden width.  Pad to 128 lanes only when H >= 128
    #       (lane-aligned gate slices at <=2x waste); for small H keep gates
    #       compact — 128-padding would inflate whh / the per-step matmul by up
    #       to 16x on the serial critical path for zero useful output.
    #   nOutP: output lanes padded to 128 (unmasked lane-dense stores).
    #   Bp: batch padded to a sublane multiple of 8.
    # nIn is left unpadded: x is lane-sparse when nIn << 128, but it only feeds
    # the one-time prologue projection (minor).
    Hp = _round_up(H, 128) if H >= 128 else _round_up(H, 8)
    nOutP = _round_up(nOut, 128)
    Bp = _round_up(B, 8)

    wih_f, whh_f, b_f = _pack_dir(
        params["w_ih_f"], params["w_hh_f"], params["b_ih_f"], params["b_hh_f"], H, Hp, cd)
    wih_b, whh_b, b_b = _pack_dir(
        params["w_ih_b"], params["w_hh_b"], params["b_ih_b"], params["b_hh_b"], H, Hp, cd)
    wih = jnp.concatenate([wih_f, wih_b], axis=1)                    # (nIn, 8*Hp)
    b = jnp.concatenate([b_f, b_b])[None, :].astype(jnp.float32)     # (1, 8*Hp)

    wfc_f = _pad_axis(_pad_axis(params["w_fc"][:, :H], 0, nOutP), 1, Hp)   # (nOutP, Hp)
    wfc_b = _pad_axis(_pad_axis(params["w_fc"][:, H:], 0, nOutP), 1, Hp)
    wfc = jnp.concatenate([wfc_f, wfc_b], axis=1).T.astype(cd)             # (2*Hp, nOutP)
    bfc = _pad_axis(params["b_fc"], 0, nOutP)[None, :].astype(jnp.float32)

    x_p = _pad_axis(x, 1, Bp).reshape(T * Bp, nIn).astype(cd)

    # VMEM budget (everything resident, no grid -> no input double-buffering).
    isz = jnp.dtype(cd).itemsize
    vmem_needed = (
        T * Bp * nIn * isz                       # x
        + nIn * 8 * Hp * isz                     # fused W_ih (both dirs)
        + 2 * Hp * 4 * Hp * isz                  # W_hh (both dirs)
        + 8 * Hp * 4                             # folded LSTM biases (f32)
        + 2 * Hp * nOutP * isz + nOutP * 4       # FC weight + bias
        + T * Bp * nOutP * 4                     # out (f32)
        + T * Bp * 8 * Hp * isz                  # gates_x scratch (compute dtype)
        + T * Bp * 2 * Hp * isz)                 # rec scratch (compute dtype)
    try:
        vmem_cap = int(getattr(pltpu.get_tpu_info(), "vmem_capacity_bytes",
                               64 * 1024 * 1024))
    except Exception:
        vmem_cap = 64 * 1024 * 1024              # conservative: v7x per-TC physical
    vmem_limit = max(int(vmem_needed * 1.25), 16 * 1024 * 1024)
    vmem_limit = int(min(vmem_limit, int(vmem_cap * 0.85)))

    vmem = pl.BlockSpec(memory_space=pltpu.MemorySpace.VMEM)
    kernel = functools.partial(_bilstm_kernel, T=T, Bp=Bp,
                               unroll=(True if T <= 16 else 4))
    out_p = pl.pallas_call(
        kernel,
        out_shape=jax.ShapeDtypeStruct((T * Bp, nOutP), jnp.float32),
        in_specs=[vmem] * 7,
        out_specs=vmem,
        scratch_shapes=[
            pltpu.VMEM((T * Bp, 8 * Hp), cd),    # gates_x (both directions)
            pltpu.VMEM((T * Bp, 2 * Hp), cd),    # [h_fwd | h_bwd]
        ],
        compiler_params=pltpu.CompilerParams(vmem_limit_bytes=vmem_limit),
    )(x_p, wih, whh_f, whh_b, b, wfc, bfc)

    return out_p.reshape(T, Bp, nOutP)[:, :B, :nOut]


def init_params(key, nIn, nHidden, nOut):
    """Deterministic init with PyTorch-style uniform ranges."""
    H = nHidden
    ks = jax.random.split(key, 10)
    s_lstm = 1.0 / jnp.sqrt(H)
    s_fc = 1.0 / jnp.sqrt(2 * H)
    u = lambda k, shape, s: jax.random.uniform(k, shape, jnp.float32, -s, s)
    return {
        "w_ih_f": u(ks[0], (4 * H, nIn), s_lstm),
        "w_hh_f": u(ks[1], (4 * H, H), s_lstm),
        "b_ih_f": u(ks[2], (4 * H,), s_lstm),
        "b_hh_f": u(ks[3], (4 * H,), s_lstm),
        "w_ih_b": u(ks[4], (4 * H, nIn), s_lstm),
        "w_hh_b": u(ks[5], (4 * H, H), s_lstm),
        "b_ih_b": u(ks[6], (4 * H,), s_lstm),
        "b_hh_b": u(ks[7], (4 * H,), s_lstm),
        "w_fc": u(ks[8], (nOut, 2 * H), s_fc),
        "b_fc": u(ks[9], (nOut,), s_fc),
    }


def reference(x, p):
    """Pure-JAX reference matching torch.nn.LSTM(bidirectional=True) + Linear."""
    T, B, _ = x.shape
    H = p["w_hh_f"].shape[1]

    def run(x_seq, w_ih, w_hh, b_ih, b_hh):
        def step(carry, x_t):
            h, c = carry
            gates = x_t @ w_ih.T + h @ w_hh.T + b_ih + b_hh
            i, f, g, o = jnp.split(gates, 4, axis=-1)
            i, f, o = jax.nn.sigmoid(i), jax.nn.sigmoid(f), jax.nn.sigmoid(o)
            g = jnp.tanh(g)
            c = f * c + i * g
            h = o * jnp.tanh(c)
            return (h, c), h

        init = (jnp.zeros((B, H), jnp.float32), jnp.zeros((B, H), jnp.float32))
        _, hs = lax.scan(step, init, x_seq)
        return hs

    h_f = run(x, p["w_ih_f"], p["w_hh_f"], p["b_ih_f"], p["b_hh_f"])
    h_b = run(x[::-1], p["w_ih_b"], p["w_hh_b"], p["b_ih_b"], p["b_hh_b"])[::-1]
    rec = jnp.concatenate([h_f, h_b], axis=-1)        # (T, B, 2H)
    out = rec.reshape(T * B, 2 * H) @ p["w_fc"].T + p["b_fc"]
    return out.reshape(T, B, -1)


if __name__ == "__main__":
    T, B, nIn, nHidden, nOut = 8, 2, 16, 32, 16
    key = jax.random.PRNGKey(0)
    k_x, k_p = jax.random.split(key)
    x = jax.random.normal(k_x, (T, B, nIn), jnp.float32)
    params = init_params(k_p, nIn, nHidden, nOut)
    ref = reference(x, params)

    # Full-precision operand path (exact-match validation).
    out_f32 = jax.block_until_ready(
        bidirectional_lstm(x, params, compute_dtype=jnp.float32))
    assert out_f32.shape == (T, B, nOut)
    assert jnp.max(jnp.abs(out_f32 - ref)) < 2e-3, "f32 mismatch vs reference"

    # Default bf16 matmul-operand path (bf16-native MXU on v5e/v6e/v7x);
    # f32 gating / cell state / accumulation. Typical |err| ~1e-2 at these shapes.
    out_bf16 = jax.block_until_ready(bidirectional_lstm(x, params))
    assert out_bf16.shape == (T, B, nOut)
    assert jnp.max(jnp.abs(out_bf16 - ref)) < 1e-1, "bf16 mismatch vs reference"

    print("KERNEL_OK")
</pallas_src>

<mosaic_0001>
module attributes {stable_mosaic.version = 11 : i64} {
  func.func @_bilstm_kernel(%arg0: memref<64x16xf32, #tpu.memory_space<vmem>>, %arg1: memref<16x256xf32, #tpu.memory_space<vmem>>, %arg2: memref<32x128xf32, #tpu.memory_space<vmem>>, %arg3: memref<32x128xf32, #tpu.memory_space<vmem>>, %arg4: memref<1x256xf32, #tpu.memory_space<vmem>>, %arg5: memref<64x128xf32, #tpu.memory_space<vmem>>, %arg6: memref<1x128xf32, #tpu.memory_space<vmem>>, %arg7: memref<64x128xf32, #tpu.memory_space<vmem>>, %arg8: memref<64x256xf32, #tpu.memory_space<vmem>>, %arg9: memref<64x64xf32, #tpu.memory_space<vmem>>) attributes {dimension_semantics = [], scalar_prefetch = 0 : i64, scratch_operands = 2 : i64, tpu.core_type = #tpu.core_type<tc>} {
    %c0 = arith.constant 0 : index
    %c0_0 = arith.constant 0 : index
    %0 = vector.load %arg0[%c0, %c0_0] : memref<64x16xf32, #tpu.memory_space<vmem>>, vector<64x16xf32>
    %c0_1 = arith.constant 0 : index
    %c0_2 = arith.constant 0 : index
    %1 = vector.load %arg1[%c0_1, %c0_2] : memref<16x256xf32, #tpu.memory_space<vmem>>, vector<16x256xf32>
    %cst = arith.constant dense<0.000000e+00> : vector<64x256xf32>
    %2 = tpu.matmul %0, %1, %cst {dimension_numbers = #tpu.dot_dimension_numbers<[1], [0], [0], [1], [0, 0, 1, 1], [], []>} : vector<64x16xf32>, vector<16x256xf32>, vector<64x256xf32> -> vector<64x256xf32>
    %c0_3 = arith.constant 0 : index
    %c0_4 = arith.constant 0 : index
    %3 = vector.load %arg4[%c0_3, %c0_4] : memref<1x256xf32, #tpu.memory_space<vmem>>, vector<1x256xf32>
    %4 = vector.broadcast %3 : vector<1x256xf32> to vector<64x256xf32>
    %5 = arith.addf %2, %4 : vector<64x256xf32>
    %c0_5 = arith.constant 0 : index
    %c0_6 = arith.constant 0 : index
    %6 = vector.load %arg8[%c0_5, %c0_6] : memref<64x256xf32, #tpu.memory_space<vmem>>, vector<64x256xf32>
    tpu.vector_store %arg8[%c0_5, %c0_6], %5 {strides = array<i32>} : memref<64x256xf32, #tpu.memory_space<vmem>>, vector<64x256xf32>,
    %cst_7 = arith.constant 0.000000e+00 : f32
    %7 = vector.broadcast %cst_7 : f32 to vector<8x32xf32>
    %c0_i32 = arith.constant 0 : i32
    %c8_i32 = arith.constant 8 : i32
    %8 = arith.muli %c0_i32, %c8_i32 : i32
    %9 = tpu.assume_multiple %8, 8 : i32
    %c7_i32 = arith.constant 7 : i32
    %10 = arith.subi %c7_i32, %c0_i32 : i32
    %c8_i32_8 = arith.constant 8 : i32
    %11 = arith.muli %10, %c8_i32_8 : i32
    %12 = tpu.assume_multiple %11, 8 : i32
    %13 = arith.index_cast %9 : i32 to index
    %c0_9 = arith.constant 0 : index
    %14 = vector.load %arg8[%13, %c0_9] : memref<64x256xf32, #tpu.memory_space<vmem>>, vector<8x128xf32>
    %c0_10 = arith.constant 0 : index
    %c0_11 = arith.constant 0 : index
    %15 = vector.load %arg2[%c0_10, %c0_11] : memref<32x128xf32, #tpu.memory_space<vmem>>, vector<32x128xf32>
    %cst_12 = arith.constant dense<0.000000e+00> : vector<8x128xf32>
    %16 = tpu.matmul %7, %15, %cst_12 {dimension_numbers = #tpu.dot_dimension_numbers<[1], [0], [0], [1], [0, 0, 1, 1], [], []>} : vector<8x32xf32>, vector<32x128xf32>, vector<8x128xf32> -> vector<8x128xf32>
    %17 = arith.addf %14, %16 : vector<8x128xf32>
    %18 = vector.extract_strided_slice %17 {offsets = [0, 0], sizes = [8, 32], strides = [1, 1]} : vector<8x128xf32> to vector<8x32xf32>
    %cst_13 = arith.constant 5.000000e-01 : f32
    %19 = vector.broadcast %cst_13 : f32 to vector<8x32xf32>
    %20 = arith.mulf %19, %18 : vector<8x32xf32>
    %21 = math.tanh %20 : vector<8x32xf32>
    %cst_14 = arith.constant 5.000000e-01 : f32
    %22 = vector.broadcast %cst_14 : f32 to vector<8x32xf32>
    %23 = arith.mulf %22, %21 : vector<8x32xf32>
    %cst_15 = arith.constant 5.000000e-01 : f32
    %24 = vector.broadcast %cst_15 : f32 to vector<8x32xf32>
    %25 = arith.addf %23, %24 : vector<8x32xf32>
    %26 = vector.extract_strided_slice %17 {offsets = [0, 32], sizes = [8, 32], strides = [1, 1]} : vector<8x128xf32> to vector<8x32xf32>
    %cst_16 = arith.constant 5.000000e-01 : f32
    %27 = vector.broadcast %cst_16 : f32 to vector<8x32xf32>
    %28 = arith.mulf %27, %26 : vector<8x32xf32>
    %29 = math.tanh %28 : vector<8x32xf32>
    %cst_17 = arith.constant 5.000000e-01 : f32
    %30 = vector.broadcast %cst_17 : f32 to vector<8x32xf32>
    %31 = arith.mulf %30, %29 : vector<8x32xf32>
    %cst_18 = arith.constant 5.000000e-01 : f32
    %32 = vector.broadcast %cst_18 : f32 to vector<8x32xf32>
    %33 = arith.addf %31, %32 : vector<8x32xf32>
    %34 = vector.extract_strided_slice %17 {offsets = [0, 64], sizes = [8, 32], strides = [1, 1]} : vector<8x128xf32> to vector<8x32xf32>
    %35 = math.tanh %34 : vector<8x32xf32>
    %36 = vector.extract_strided_slice %17 {offsets = [0, 96], sizes = [8, 32], strides = [1, 1]} : vector<8x128xf32> to vector<8x32xf32>
    %cst_19 = arith.constant 5.000000e-01 : f32
    %37 = vector.broadcast %cst_19 : f32 to vector<8x32xf32>
    %38 = arith.mulf %37, %36 : vector<8x32xf32>
    %39 = math.tanh %38 : vector<8x32xf32>
    %cst_20 = arith.constant 5.000000e-01 : f32
    %40 = vector.broadcast %cst_20 : f32 to vector<8x32xf32>
    %41 = arith.mulf %40, %39 : vector<8x32xf32>
    %cst_21 = arith.constant 5.000000e-01 : f32
    %42 = vector.broadcast %cst_21 : f32 to vector<8x32xf32>
    %43 = arith.addf %41, %42 : vector<8x32xf32>
    %44 = arith.mulf %33, %7 : vector<8x32xf32>
    %45 = arith.mulf %25, %35 : vector<8x32xf32>
    %46 = arith.addf %44, %45 : vector<8x32xf32>
    %47 = math.tanh %46 : vector<8x32xf32>
    %48 = arith.mulf %43, %47 : vector<8x32xf32>
    %49 = arith.index_cast %12 : i32 to index
    %c128 = arith.constant 128 : index
    %50 = vector.load %arg8[%49, %c128] : memref<64x256xf32, #tpu.memory_space<vmem>>, vector<8x128xf32>
    %c0_22 = arith.constant 0 : index
    %c0_23 = arith.constant 0 : index
    %51 = vector.load %arg3[%c0_22, %c0_23] : memref<32x128xf32, #tpu.memory_space<vmem>>, vector<32x128xf32>
    %cst_24 = arith.constant dense<0.000000e+00> : vector<8x128xf32>
    %52 = tpu.matmul %7, %51, %cst_24 {dimension_numbers = #tpu.dot_dimension_numbers<[1], [0], [0], [1], [0, 0, 1, 1], [], []>} : vector<8x32xf32>, vector<32x128xf32>, vector<8x128xf32> -> vector<8x128xf32>
    %53 = arith.addf %50, %52 : vector<8x128xf32>
    %54 = vector.extract_strided_slice %53 {offsets = [0, 0], sizes = [8, 32], strides = [1, 1]} : vector<8x128xf32> to vector<8x32xf32>
    %cst_25 = arith.constant 5.000000e-01 : f32
    %55 = vector.broadcast %cst_25 : f32 to vector<8x32xf32>
    %56 = arith.mulf %55, %54 : vector<8x32xf32>
    %57 = math.tanh %56 : vector<8x32xf32>
    %cst_26 = arith.constant 5.000000e-01 : f32
    %58 = vector.broadcast %cst_26 : f32 to vector<8x32xf32>
    %59 = arith.mulf %58, %57 : vector<8x32xf32>
    %cst_27 = arith.constant 5.000000e-01 : f32
    %60 = vector.broadcast %cst_27 : f32 to vector<8x32xf32>
    %61 = arith.addf %59, %60 : vector<8x32xf32>
    %62 = vector.extract_strided_slice %53 {offsets = [0, 32], sizes = [8, 32], strides = [1, 1]} : vector<8x128xf32> to vector<8x32xf32>
    %cst_28 = arith.constant 5.000000e-01 : f32
    %63 = vector.broadcast %cst_28 : f32 to vector<8x32xf32>
    %64 = arith.mulf %63, %62 : vector<8x32xf32>
    %65 = math.tanh %64 : vector<8x32xf32>
    %cst_29 = arith.constant 5.000000e-01 : f32
    %66 = vector.broadcast %cst_29 : f32 to vector<8x32xf32>
    %67 = arith.mulf %66, %65 : vector<8x32xf32>
    %cst_30 = arith.constant 5.000000e-01 : f32
    %68 = vector.broadcast %cst_30 : f32 to vector<8x32xf32>
    %69 = arith.addf %67, %68 : vector<8x32xf32>
    %70 = vector.extract_strided_slice %53 {offsets = [0, 64], sizes = [8, 32], strides = [1, 1]} : vector<8x128xf32> to vector<8x32xf32>
    %71 = math.tanh %70 : vector<8x32xf32>
    %72 = vector.extract_strided_slice %53 {offsets = [0, 96], sizes = [8, 32], strides = [1, 1]} : vector<8x128xf32> to vector<8x32xf32>
    %cst_31 = arith.constant 5.000000e-01 : f32
    %73 = vector.broadcast %cst_31 : f32 to vector<8x32xf32>
    %74 = arith.mulf %73, %72 : vector<8x32xf32>
    %75 = math.tanh %74 : vector<8x32xf32>
    %cst_32 = arith.constant 5.000000e-01 : f32
    %76 = vector.broadcast %cst_32 : f32 to vector<8x32xf32>
    %77 = arith.mulf %76, %75 : vector<8x32xf32>
    %cst_33 = arith.constant 5.000000e-01 : f32
    %78 = vector.broadcast %cst_33 : f32 to vector<8x32xf32>
    %79 = arith.addf %77, %78 : vector<8x32xf32>
    %80 = arith.mulf %69, %7 : vector<8x32xf32>
    %81 = arith.mulf %61, %71 : vector<8x32xf32>
    %82 = arith.addf %80, %81 : vector<8x32xf32>
    %83 = math.tanh %82 : vector<8x32xf32>
    %84 = arith.mulf %79, %83 : vector<8x32xf32>
    %85 = arith.index_cast %9 : i32 to index
    %c0_34 = arith.constant 0 : index
    %86 = vector.load %arg9[%85, %c0_34] : memref<64x64xf32, #tpu.memory_space<vmem>>, vector<8x32xf32>
    tpu.vector_store %arg9[%85, %c0_34], %48 {strides = array<i32>} : memref<64x64xf32, #tpu.memory_space<vmem>>, vector<8x32xf32>,
    %87 = arith.index_cast %12 : i32 to index
    %c32 = arith.constant 32 : index
    %88 = vector.load %arg9[%87, %c32] : memref<64x64xf32, #tpu.memory_space<vmem>>, vector<8x32xf32>
    tpu.vector_store %arg9[%87, %c32], %84 {strides = array<i32>} : memref<64x64xf32, #tpu.memory_space<vmem>>, vector<8x32xf32>,
    %c1_i32 = arith.constant 1 : i32
    %c8_i32_35 = arith.constant 8 : i32
    %89 = arith.muli %c1_i32, %c8_i32_35 : i32
    %90 = tpu.assume_multiple %89, 8 : i32
    %c7_i32_36 = arith.constant 7 : i32
    %91 = arith.subi %c7_i32_36, %c1_i32 : i32
    %c8_i32_37 = arith.constant 8 : i32
    %92 = arith.muli %91, %c8_i32_37 : i32
    %93 = tpu.assume_multiple %92, 8 : i32
    %94 = arith.index_cast %90 : i32 to index
    %c0_38 = arith.constant 0 : index
    %95 = vector.load %arg8[%94, %c0_38] : memref<64x256xf32, #tpu.memory_space<vmem>>, vector<8x128xf32>
    %c0_39 = arith.constant 0 : index
    %c0_40 = arith.constant 0 : index
    %96 = vector.load %arg2[%c0_39, %c0_40] : memref<32x128xf32, #tpu.memory_space<vmem>>, vector<32x128xf32>
    %cst_41 = arith.constant dense<0.000000e+00> : vector<8x128xf32>
    %97 = tpu.matmul %48, %96, %cst_41 {dimension_numbers = #tpu.dot_dimension_numbers<[1], [0], [0], [1], [0, 0, 1, 1], [], []>} : vector<8x32xf32>, vector<32x128xf32>, vector<8x128xf32> -> vector<8x128xf32>
    %98 = arith.addf %95, %97 : vector<8x128xf32>
    %99 = vector.extract_strided_slice %98 {offsets = [0, 0], sizes = [8, 32], strides = [1, 1]} : vector<8x128xf32> to vector<8x32xf32>
    %cst_42 = arith.constant 5.000000e-01 : f32
    %100 = vector.broadcast %cst_42 : f32 to vector<8x32xf32>
    %101 = arith.mulf %100, %99 : vector<8x32xf32>
    %102 = math.tanh %101 : vector<8x32xf32>
    %cst_43 = arith.constant 5.000000e-01 : f32
    %103 = vector.broadcast %cst_43 : f32 to vector<8x32xf32>
    %104 = arith.mulf %103, %102 : vector<8x32xf32>
    %cst_44 = arith.constant 5.000000e-01 : f32
    %105 = vector.broadcast %cst_44 : f32 to vector<8x32xf32>
    %106 = arith.addf %104, %105 : vector<8x32xf32>
    %107 = vector.extract_strided_slice %98 {offsets = [0, 32], sizes = [8, 32], strides = [1, 1]} : vector<8x128xf32> to vector<8x32xf32>
    %cst_45 = arith.constant 5.000000e-01 : f32
    %108 = vector.broadcast %cst_45 : f32 to vector<8x32xf32>
    %109 = arith.mulf %108, %107 : vector<8x32xf32>
    %110 = math.tanh %109 : vector<8x32xf32>
    %cst_46 = arith.constant 5.000000e-01 : f32
    %111 = vector.broadcast %cst_46 : f32 to vector<8x32xf32>
    %112 = arith.mulf %111, %110 : vector<8x32xf32>
    %cst_47 = arith.constant 5.000000e-01 : f32
    %113 = vector.broadcast %cst_47 : f32 to vector<8x32xf32>
    %114 = arith.addf %112, %113 : vector<8x32xf32>
    %115 = vector.extract_strided_slice %98 {offsets = [0, 64], sizes = [8, 32], strides = [1, 1]} : vector<8x128xf32> to vector<8x32xf32>
    %116 = math.tanh %115 : vector<8x32xf32>
    %117 = vector.extract_strided_slice %98 {offsets = [0, 96], sizes = [8, 32], strides = [1, 1]} : vector<8x128xf32> to vector<8x32xf32>
    %cst_48 = arith.constant 5.000000e-01 : f32
    %118 = vector.broadcast %cst_48 : f32 to vector<8x32xf32>
    %119 = arith.mulf %118, %117 : vector<8x32xf32>
    %120 = math.tanh %119 : vector<8x32xf32>
    %cst_49 = arith.constant 5.000000e-01 : f32
    %121 = vector.broadcast %cst_49 : f32 to vector<8x32xf32>
    %122 = arith.mulf %121, %120 : vector<8x32xf32>
    %cst_50 = arith.constant 5.000000e-01 : f32
    %123 = vector.broadcast %cst_50 : f32 to vector<8x32xf32>
    %124 = arith.addf %122, %123 : vector<8x32xf32>
    %125 = arith.mulf %114, %46 : vector<8x32xf32>
    %126 = arith.mulf %106, %116 : vector<8x32xf32>
    %127 = arith.addf %125, %126 : vector<8x32xf32>
    %128 = math.tanh %127 : vector<8x32xf32>
    %129 = arith.mulf %124, %128 : vector<8x32xf32>
    %130 = arith.index_cast %93 : i32 to index
    %c128_51 = arith.constant 128 : index
    %131 = vector.load %arg8[%130, %c128_51] : memref<64x256xf32, #tpu.memory_space<vmem>>, vector<8x128xf32>
    %c0_52 = arith.constant 0 : index
    %c0_53 = arith.constant 0 : index
    %132 = vector.load %arg3[%c0_52, %c0_53] : memref<32x128xf32, #tpu.memory_space<vmem>>, vector<32x128xf32>
    %cst_54 = arith.constant dense<0.000000e+00> : vector<8x128xf32>
    %133 = tpu.matmul %84, %132, %cst_54 {dimension_numbers = #tpu.dot_dimension_numbers<[1], [0], [0], [1], [0, 0, 1, 1], [], []>} : vector<8x32xf32>, vector<32x128xf32>, vector<8x128xf32> -> vector<8x128xf32>
    %134 = arith.addf %131, %133 : vector<8x128xf32>
    %135 = vector.extract_strided_slice %134 {offsets = [0, 0], sizes = [8, 32], strides = [1, 1]} : vector<8x128xf32> to vector<8x32xf32>
    %cst_55 = arith.constant 5.000000e-01 : f32
    %136 = vector.broadcast %cst_55 : f32 to vector<8x32xf32>
    %137 = arith.mulf %136, %135 : vector<8x32xf32>
    %138 = math.tanh %137 : vector<8x32xf32>
    %cst_56 = arith.constant 5.000000e-01 : f32
    %139 = vector.broadcast %cst_56 : f32 to vector<8x32xf32>
    %140 = arith.mulf %139, %138 : vector<8x32xf32>
    %cst_57 = arith.constant 5.000000e-01 : f32
    %141 = vector.broadcast %cst_57 : f32 to vector<8x32xf32>
    %142 = arith.addf %140, %141 : vector<8x32xf32>
    %143 = vector.extract_strided_slice %134 {offsets = [0, 32], sizes = [8, 32], strides = [1, 1]} : vector<8x128xf32> to vector<8x32xf32>
    %cst_58 = arith.constant 5.000000e-01 : f32
    %144 = vector.broadcast %cst_58 : f32 to vector<8x32xf32>
    %145 = arith.mulf %144, %143 : vector<8x32xf32>
    %146 = math.tanh %145 : vector<8x32xf32>
    %cst_59 = arith.constant 5.000000e-01 : f32
    %147 = vector.broadcast %cst_59 : f32 to vector<8x32xf32>
    %148 = arith.mulf %147, %146 : vector<8x32xf32>
    %cst_60 = arith.constant 5.000000e-01 : f32
    %149 = vector.broadcast %cst_60 : f32 to vector<8x32xf32>
    %150 = arith.addf %148, %149 : vector<8x32xf32>
    %151 = vector.extract_strided_slice %134 {offsets = [0, 64], sizes = [8, 32], strides = [1, 1]} : vector<8x128xf32> to vector<8x32xf32>
    %152 = math.tanh %151 : vector<8x32xf32>
    %153 = vector.extract_strided_slice %134 {offsets = [0, 96], sizes = [8, 32], strides = [1, 1]} : vector<8x128xf32> to vector<8x32xf32>
    %cst_61 = arith.constant 5.000000e-01 : f32
    %154 = vector.broadcast %cst_61 : f32 to vector<8x32xf32>
    %155 = arith.mulf %154, %153 : vector<8x32xf32>
    %156 = math.tanh %155 : vector<8x32xf32>
    %cst_62 = arith.constant 5.000000e-01 : f32
    %157 = vector.broadcast %cst_62 : f32 to vector<8x32xf32>
    %158 = arith.mulf %157, %156 : vector<8x32xf32>
    %cst_63 = arith.constant 5.000000e-01 : f32
    %159 = vector.broadcast %cst_63 : f32 to vector<8x32xf32>
    %160 = arith.addf %158, %159 : vector<8x32xf32>
    %161 = arith.mulf %150, %82 : vector<8x32xf32>
    %162 = arith.mulf %142, %152 : vector<8x32xf32>
    %163 = arith.addf %161, %162 : vector<8x32xf32>
    %164 = math.tanh %163 : vector<8x32xf32>
    %165 = arith.mulf %160, %164 : vector<8x32xf32>
    %166 = arith.index_cast %90 : i32 to index
    %c0_64 = arith.constant 0 : index
    %167 = vector.load %arg9[%166, %c0_64] : memref<64x64xf32, #tpu.memory_space<vmem>>, vector<8x32xf32>
    tpu.vector_store %arg9[%166, %c0_64], %129 {strides = array<i32>} : memref<64x64xf32, #tpu.memory_space<vmem>>, vector<8x32xf32>,
    %168 = arith.index_cast %93 : i32 to index
    %c32_65 = arith.constant 32 : index
    %169 = vector.load %arg9[%168, %c32_65] : memref<64x64xf32, #tpu.memory_space<vmem>>, vector<8x32xf32>
    tpu.vector_store %arg9[%168, %c32_65], %165 {strides = array<i32>} : memref<64x64xf32, #tpu.memory_space<vmem>>, vector<8x32xf32>,
    %c2_i32 = arith.constant 2 : i32
    %c8_i32_66 = arith.constant 8 : i32
    %170 = arith.muli %c2_i32, %c8_i32_66 : i32
    %171 = tpu.assume_multiple %170, 8 : i32
    %c7_i32_67 = arith.constant 7 : i32
    %172 = arith.subi %c7_i32_67, %c2_i32 : i32
    %c8_i32_68 = arith.constant 8 : i32
    %173 = arith.muli %172, %c8_i32_68 : i32
    %174 = tpu.assume_multiple %173, 8 : i32
    %175 = arith.index_cast %171 : i32 to index
    %c0_69 = arith.constant 0 : index
    %176 = vector.load %arg8[%175, %c0_69] : memref<64x256xf32, #tpu.memory_space<vmem>>, vector<8x128xf32>
    %c0_70 = arith.constant 0 : index
    %c0_71 = arith.constant 0 : index
    %177 = vector.load %arg2[%c0_70, %c0_71] : memref<32x128xf32, #tpu.memory_space<vmem>>, vector<32x128xf32>
    %cst_72 = arith.constant dense<0.000000e+00> : vector<8x128xf32>
    %178 = tpu.matmul %129, %177, %cst_72 {dimension_numbers = #tpu.dot_dimension_numbers<[1], [0], [0], [1], [0, 0, 1, 1], [], []>} : vector<8x32xf32>, vector<32x128xf32>, vector<8x128xf32> -> vector<8x128xf32>
    %179 = arith.addf %176, %178 : vector<8x128xf32>
    %180 = vector.extract_strided_slice %179 {offsets = [0, 0], sizes = [8, 32], strides = [1, 1]} : vector<8x128xf32> to vector<8x32xf32>
    %cst_73 = arith.constant 5.000000e-01 : f32
    %181 = vector.broadcast %cst_73 : f32 to vector<8x32xf32>
    %182 = arith.mulf %181, %180 : vector<8x32xf32>
    %183 = math.tanh %182 : vector<8x32xf32>
    %cst_74 = arith.constant 5.000000e-01 : f32
    %184 = vector.broadcast %cst_74 : f32 to vector<8x32xf32>
    %185 = arith.mulf %184, %183 : vector<8x32xf32>
    %cst_75 = arith.constant 5.000000e-01 : f32
    %186 = vector.broadcast %cst_75 : f32 to vector<8x32xf32>
    %187 = arith.addf %185, %186 : vector<8x32xf32>
    %188 = vector.extract_strided_slice %179 {offsets = [0, 32], sizes = [8, 32], strides = [1, 1]} : vector<8x128xf32> to vector<8x32xf32>
    %cst_76 = arith.constant 5.000000e-01 : f32
    %189 = vector.broadcast %cst_76 : f32 to vector<8x32xf32>
    %190 = arith.mulf %189, %188 : vector<8x32xf32>
    %191 = math.tanh %190 : vector<8x32xf32>
    %cst_77 = arith.constant 5.000000e-01 : f32
    %192 = vector.broadcast %cst_77 : f32 to vector<8x32xf32>
    %193 = arith.mulf %192, %191 : vector<8x32xf32>
    %cst_78 = arith.constant 5.000000e-01 : f32
    %194 = vector.broadcast %cst_78 : f32 to vector<8x32xf32>
    %195 = arith.addf %193, %194 : vector<8x32xf32>
    %196 = vector.extract_strided_slice %179 {offsets = [0, 64], sizes = [8, 32], strides = [1, 1]} : vector<8x128xf32> to vector<8x32xf32>
    %197 = math.tanh %196 : vector<8x32xf32>
    %198 = vector.extract_strided_slice %179 {offsets = [0, 96], sizes = [8, 32], strides = [1, 1]} : vector<8x128xf32> to vector<8x32xf32>
    %cst_79 = arith.constant 5.000000e-01 : f32
    %199 = vector.broadcast %cst_79 : f32 to vector<8x32xf32>
    %200 = arith.mulf %199, %198 : vector<8x32xf32>
    %201 = math.tanh %200 : vector<8x32xf32>
    %cst_80 = arith.constant 5.000000e-01 : f32
    %202 = vector.broadcast %cst_80 : f32 to vector<8x32xf32>
    %203 = arith.mulf %202, %201 : vector<8x32xf32>
    %cst_81 = arith.constant 5.000000e-01 : f32
    %204 = vector.broadcast %cst_81 : f32 to vector<8x32xf32>
    %205 = arith.addf %203, %204 : vector<8x32xf32>
    %206 = arith.mulf %195, %127 : vector<8x32xf32>
    %207 = arith.mulf %187, %197 : vector<8x32xf32>
    %208 = arith.addf %206, %207 : vector<8x32xf32>
    %209 = math.tanh %208 : vector<8x32xf32>
    %210 = arith.mulf %205, %209 : vector<8x32xf32>
    %211 = arith.index_cast %174 : i32 to index
    %c128_82 = arith.constant 128 : index
    %212 = vector.load %arg8[%211, %c128_82] : memref<64x256xf32, #tpu.memory_space<vmem>>, vector<8x128xf32>
    %c0_83 = arith.constant 0 : index
    %c0_84 = arith.constant 0 : index
    %213 = vector.load %arg3[%c0_83, %c0_84] : memref<32x128xf32, #tpu.memory_space<vmem>>, vector<32x128xf32>
    %cst_85 = arith.constant dense<0.000000e+00> : vector<8x128xf32>
    %214 = tpu.matmul %165, %213, %cst_85 {dimension_numbers = #tpu.dot_dimension_numbers<[1], [0], [0], [1], [0, 0, 1, 1], [], []>} : vector<8x32xf32>, vector<32x128xf32>, vector<8x128xf32> -> vector<8x128xf32>
    %215 = arith.addf %212, %214 : vector<8x128xf32>
    %216 = vector.extract_strided_slice %215 {offsets = [0, 0], sizes = [8, 32], strides = [1, 1]} : vector<8x128xf32> to vector<8x32xf32>
    %cst_86 = arith.constant 5.000000e-01 : f32
    %217 = vector.broadcast %cst_86 : f32 to vector<8x32xf32>
    %218 = arith.mulf %217, %216 : vector<8x32xf32>
    %219 = math.tanh %218 : vector<8x32xf32>
    %cst_87 = arith.constant 5.000000e-01 : f32
    %220 = vector.broadcast %cst_87 : f32 to vector<8x32xf32>
    %221 = arith.mulf %220, %219 : vector<8x32xf32>
    %cst_88 = arith.constant 5.000000e-01 : f32
    %222 = vector.broadcast %cst_88 : f32 to vector<8x32xf32>
    %223 = arith.addf %221, %222 : vector<8x32xf32>
    %224 = vector.extract_strided_slice %215 {offsets = [0, 32], sizes = [8, 32], strides = [1, 1]} : vector<8x128xf32> to vector<8x32xf32>
    %cst_89 = arith.constant 5.000000e-01 : f32
    %225 = vector.broadcast %cst_89 : f32 to vector<8x32xf32>
    %226 = arith.mulf %225, %224 : vector<8x32xf32>
    %227 = math.tanh %226 : vector<8x32xf32>
    %cst_90 = arith.constant 5.000000e-01 : f32
    %228 = vector.broadcast %cst_90 : f32 to vector<8x32xf32>
    %229 = arith.mulf %228, %227 : vector<8x32xf32>
    %cst_91 = arith.constant 5.000000e-01 : f32
    %230 = vector.broadcast %cst_91 : f32 to vector<8x32xf32>
    %231 = arith.addf %229, %230 : vector<8x32xf32>
    %232 = vector.extract_strided_slice %215 {offsets = [0, 64], sizes = [8, 32], strides = [1, 1]} : vector<8x128xf32> to vector<8x32xf32>
    %233 = math.tanh %232 : vector<8x32xf32>
    %234 = vector.extract_strided_slice %215 {offsets = [0, 96], sizes = [8, 32], strides = [1, 1]} : vector<8x128xf32> to vector<8x32xf32>
    %cst_92 = arith.constant 5.000000e-01 : f32
    %235 = vector.broadcast %cst_92 : f32 to vector<8x32xf32>
    %236 = arith.mulf %235, %234 : vector<8x32xf32>
    %237 = math.tanh %236 : vector<8x32xf32>
    %cst_93 = arith.constant 5.000000e-01 : f32
    %238 = vector.broadcast %cst_93 : f32 to vector<8x32xf32>
    %239 = arith.mulf %238, %237 : vector<8x32xf32>
    %cst_94 = arith.constant 5.000000e-01 : f32
    %240 = vector.broadcast %cst_94 : f32 to vector<8x32xf32>
    %241 = arith.addf %239, %240 : vector<8x32xf32>
    %242 = arith.mulf %231, %163 : vector<8x32xf32>
    %243 = arith.mulf %223, %233 : vector<8x32xf32>
    %244 = arith.addf %242, %243 : vector<8x32xf32>
    %245 = math.tanh %244 : vector<8x32xf32>
    %246 = arith.mulf %241, %245 : vector<8x32xf32>
    %247 = arith.index_cast %171 : i32 to index
    %c0_95 = arith.constant 0 : index
    %248 = vector.load %arg9[%247, %c0_95] : memref<64x64xf32, #tpu.memory_space<vmem>>, vector<8x32xf32>
    tpu.vector_store %arg9[%247, %c0_95], %210 {strides = array<i32>} : memref<64x64xf32, #tpu.memory_space<vmem>>, vector<8x32xf32>,
    %249 = arith.index_cast %174 : i32 to index
    %c32_96 = arith.constant 32 : index
    %250 = vector.load %arg9[%249, %c32_96] : memref<64x64xf32, #tpu.memory_space<vmem>>, vector<8x32xf32>
    tpu.vector_store %arg9[%249, %c32_96], %246 {strides = array<i32>} : memref<64x64xf32, #tpu.memory_space<vmem>>, vector<8x32xf32>,
    %c3_i32 = arith.constant 3 : i32
    %c8_i32_97 = arith.constant 8 : i32
    %251 = arith.muli %c3_i32, %c8_i32_97 : i32
    %252 = tpu.assume_multiple %251, 8 : i32
    %c7_i32_98 = arith.constant 7 : i32
    %253 = arith.subi %c7_i32_98, %c3_i32 : i32
    %c8_i32_99 = arith.constant 8 : i32
    %254 = arith.muli %253, %c8_i32_99 : i32
    %255 = tpu.assume_multiple %254, 8 : i32
    %256 = arith.index_cast %252 : i32 to index
    %c0_100 = arith.constant 0 : index
    %257 = vector.load %arg8[%256, %c0_100] : memref<64x256xf32, #tpu.memory_space<vmem>>, vector<8x128xf32>
    %c0_101 = arith.constant 0 : index
    %c0_102 = arith.constant 0 : index
    %258 = vector.load %arg2[%c0_101, %c0_102] : memref<32x128xf32, #tpu.memory_space<vmem>>, vector<32x128xf32>
    %cst_103 = arith.constant dense<0.000000e+00> : vector<8x128xf32>
    %259 = tpu.matmul %210, %258, %cst_103 {dimension_numbers = #tpu.dot_dimension_numbers<[1], [0], [0], [1], [0, 0, 1, 1], [], []>} : vector<8x32xf32>, vector<32x128xf32>, vector<8x128xf32> -> vector<8x128xf32>
    %260 = arith.addf %257, %259 : vector<8x128xf32>
    %261 = vector.extract_strided_slice %260 {offsets = [0, 0], sizes = [8, 32], strides = [1, 1]} : vector<8x128xf32> to vector<8x32xf32>
    %cst_104 = arith.constant 5.000000e-01 : f32
    %262 = vector.broadcast %cst_104 : f32 to vector<8x32xf32>
    %263 = arith.mulf %262, %261 : vector<8x32xf32>
    %264 = math.tanh %263 : vector<8x32xf32>
    %cst_105 = arith.constant 5.000000e-01 : f32
    %265 = vector.broadcast %cst_105 : f32 to vector<8x32xf32>
    %266 = arith.mulf %265, %264 : vector<8x32xf32>
    %cst_106 = arith.constant 5.000000e-01 : f32
    %267 = vector.broadcast %cst_106 : f32 to vector<8x32xf32>
    %268 = arith.addf %266, %267 : vector<8x32xf32>
    %269 = vector.extract_strided_slice %260 {offsets = [0, 32], sizes = [8, 32], strides = [1, 1]} : vector<8x128xf32> to vector<8x32xf32>
    %cst_107 = arith.constant 5.000000e-01 : f32
    %270 = vector.broadcast %cst_107 : f32 to vector<8x32xf32>
    %271 = arith.mulf %270, %269 : vector<8x32xf32>
    %272 = math.tanh %271 : vector<8x32xf32>
    %cst_108 = arith.constant 5.000000e-01 : f32
    %273 = vector.broadcast %cst_108 : f32 to vector<8x32xf32>
    %274 = arith.mulf %273, %272 : vector<8x32xf32>
    %cst_109 = arith.constant 5.000000e-01 : f32
    %275 = vector.broadcast %cst_109 : f32 to vector<8x32xf32>
    %276 = arith.addf %274, %275 : vector<8x32xf32>
    %277 = vector.extract_strided_slice %260 {offsets = [0, 64], sizes = [8, 32], strides = [1, 1]} : vector<8x128xf32> to vector<8x32xf32>
    %278 = math.tanh %277 : vector<8x32xf32>
    %279 = vector.extract_strided_slice %260 {offsets = [0, 96], sizes = [8, 32], strides = [1, 1]} : vector<8x128xf32> to vector<8x32xf32>
    %cst_110 = arith.constant 5.000000e-01 : f32
    %280 = vector.broadcast %cst_110 : f32 to vector<8x32xf32>
    %281 = arith.mulf %280, %279 : vector<8x32xf32>
    %282 = math.tanh %281 : vector<8x32xf32>
    %cst_111 = arith.constant 5.000000e-01 : f32
    %283 = vector.broadcast %cst_111 : f32 to vector<8x32xf32>
    %284 = arith.mulf %283, %282 : vector<8x32xf32>
    %cst_112 = arith.constant 5.000000e-01 : f32
    %285 = vector.broadcast %cst_112 : f32 to vector<8x32xf32>
    %286 = arith.addf %284, %285 : vector<8x32xf32>
    %287 = arith.mulf %276, %208 : vector<8x32xf32>
    %288 = arith.mulf %268, %278 : vector<8x32xf32>
    %289 = arith.addf %287, %288 : vector<8x32xf32>
    %290 = math.tanh %289 : vector<8x32xf32>
    %291 = arith.mulf %286, %290 : vector<8x32xf32>
    %292 = arith.index_cast %255 : i32 to index
    %c128_113 = arith.constant 128 : index
    %293 = vector.load %arg8[%292, %c128_113] : memref<64x256xf32, #tpu.memory_space<vmem>>, vector<8x128xf32>
    %c0_114 = arith.constant 0 : index
    %c0_115 = arith.constant 0 : index
    %294 = vector.load %arg3[%c0_114, %c0_115] : memref<32x128xf32, #tpu.memory_space<vmem>>, vector<32x128xf32>
    %cst_116 = arith.constant dense<0.000000e+00> : vector<8x128xf32>
    %295 = tpu.matmul %246, %294, %cst_116 {dimension_numbers = #tpu.dot_dimension_numbers<[1], [0], [0], [1], [0, 0, 1, 1], [], []>} : vector<8x32xf32>, vector<32x128xf32>, vector<8x128xf32> -> vector<8x128xf32>
    %296 = arith.addf %293, %295 : vector<8x128xf32>
    %297 = vector.extract_strided_slice %296 {offsets = [0, 0], sizes = [8, 32], strides = [1, 1]} : vector<8x128xf32> to vector<8x32xf32>
    %cst_117 = arith.constant 5.000000e-01 : f32
    %298 = vector.broadcast %cst_117 : f32 to vector<8x32xf32>
    %299 = arith.mulf %298, %297 : vector<8x32xf32>
    %300 = math.tanh %299 : vector<8x32xf32>
    %cst_118 = arith.constant 5.000000e-01 : f32
    %301 = vector.broadcast %cst_118 : f32 to vector<8x32xf32>
    %302 = arith.mulf %301, %300 : vector<8x32xf32>
    %cst_119 = arith.constant 5.000000e-01 : f32
    %303 = vector.broadcast %cst_119 : f32 to vector<8x32xf32>
    %304 = arith.addf %302, %303 : vector<8x32xf32>
    %305 = vector.extract_strided_slice %296 {offsets = [0, 32], sizes = [8, 32], strides = [1, 1]} : vector<8x128xf32> to vector<8x32xf32>
    %cst_120 = arith.constant 5.000000e-01 : f32
    %306 = vector.broadcast %cst_120 : f32 to vector<8x32xf32>
    %307 = arith.mulf %306, %305 : vector<8x32xf32>
    %308 = math.tanh %307 : vector<8x32xf32>
    %cst_121 = arith.constant 5.000000e-01 : f32
    %309 = vector.broadcast %cst_121 : f32 to vector<8x32xf32>
    %310 = arith.mulf %309, %308 : vector<8x32xf32>
    %cst_122 = arith.constant 5.000000e-01 : f32
    %311 = vector.broadcast %cst_122 : f32 to vector<8x32xf32>
    %312 = arith.addf %310, %311 : vector<8x32xf32>
    %313 = vector.extract_strided_slice %296 {offsets = [0, 64], sizes = [8, 32], strides = [1, 1]} : vector<8x128xf32> to vector<8x32xf32>
    %314 = math.tanh %313 : vector<8x32xf32>
    %315 = vector.extract_strided_slice %296 {offsets = [0, 96], sizes = [8, 32], strides = [1, 1]} : vector<8x128xf32> to vector<8x32xf32>
    %cst_123 = arith.constant 5.000000e-01 : f32
    %316 = vector.broadcast %cst_123 : f32 to vector<8x32xf32>
    %317 = arith.mulf %316, %315 : vector<8x32xf32>
    %318 = math.tanh %317 : vector<8x32xf32>
    %cst_124 = arith.constant 5.000000e-01 : f32
    %319 = vector.broadcast %cst_124 : f32 to vector<8x32xf32>
    %320 = arith.mulf %319, %318 : vector<8x32xf32>
    %cst_125 = arith.constant 5.000000e-01 : f32
    %321 = vector.broadcast %cst_125 : f32 to vector<8x32xf32>
    %322 = arith.addf %320, %321 : vector<8x32xf32>
    %323 = arith.mulf %312, %244 : vector<8x32xf32>
    %324 = arith.mulf %304, %314 : vector<8x32xf32>
    %325 = arith.addf %323, %324 : vector<8x32xf32>
    %326 = math.tanh %325 : vector<8x32xf32>
    %327 = arith.mulf %322, %326 : vector<8x32xf32>
    %328 = arith.index_cast %252 : i32 to index
    %c0_126 = arith.constant 0 : index
    %329 = vector.load %arg9[%328, %c0_126] : memref<64x64xf32, #tpu.memory_space<vmem>>, vector<8x32xf32>
    tpu.vector_store %arg9[%328, %c0_126], %291 {strides = array<i32>} : memref<64x64xf32, #tpu.memory_space<vmem>>, vector<8x32xf32>,
    %330 = arith.index_cast %255 : i32 to index
    %c32_127 = arith.constant 32 : index
    %331 = vector.load %arg9[%330, %c32_127] : memref<64x64xf32, #tpu.memory_space<vmem>>, vector<8x32xf32>
    tpu.vector_store %arg9[%330, %c32_127], %327 {strides = array<i32>} : memref<64x64xf32, #tpu.memory_space<vmem>>, vector<8x32xf32>,
    %c4_i32 = arith.constant 4 : i32
    %c8_i32_128 = arith.constant 8 : i32
    %332 = arith.muli %c4_i32, %c8_i32_128 : i32
    %333 = tpu.assume_multiple %332, 8 : i32
    %c7_i32_129 = arith.constant 7 : i32
    %334 = arith.subi %c7_i32_129, %c4_i32 : i32
    %c8_i32_130 = arith.constant 8 : i32
    %335 = arith.muli %334, %c8_i32_130 : i32
    %336 = tpu.assume_multiple %335, 8 : i32
    %337 = arith.index_cast %333 : i32 to index
    %c0_131 = arith.constant 0 : index
    %338 = vector.load %arg8[%337, %c0_131] : memref<64x256xf32, #tpu.memory_space<vmem>>, vector<8x128xf32>
    %c0_132 = arith.constant 0 : index
    %c0_133 = arith.constant 0 : index
    %339 = vector.load %arg2[%c0_132, %c0_133] : memref<32x128xf32, #tpu.memory_space<vmem>>, vector<32x128xf32>
    %cst_134 = arith.constant dense<0.000000e+00> : vector<8x128xf32>
    %340 = tpu.matmul %291, %339, %cst_134 {dimension_numbers = #tpu.dot_dimension_numbers<[1], [0], [0], [1], [0, 0, 1, 1], [], []>} : vector<8x32xf32>, vector<32x128xf32>, vector<8x128xf32> -> vector<8x128xf32>
    %341 = arith.addf %338, %340 : vector<8x128xf32>
    %342 = vector.extract_strided_slice %341 {offsets = [0, 0], sizes = [8, 32], strides = [1, 1]} : vector<8x128xf32> to vector<8x32xf32>
    %cst_135 = arith.constant 5.000000e-01 : f32
    %343 = vector.broadcast %cst_135 : f32 to vector<8x32xf32>
    %344 = arith.mulf %343, %342 : vector<8x32xf32>
    %345 = math.tanh %344 : vector<8x32xf32>
    %cst_136 = arith.constant 5.000000e-01 : f32
    %346 = vector.broadcast %cst_136 : f32 to vector<8x32xf32>
    %347 = arith.mulf %346, %345 : vector<8x32xf32>
    %cst_137 = arith.constant 5.000000e-01 : f32
    %348 = vector.broadcast %cst_137 : f32 to vector<8x32xf32>
    %349 = arith.addf %347, %348 : vector<8x32xf32>
    %350 = vector.extract_strided_slice %341 {offsets = [0, 32], sizes = [8, 32], strides = [1, 1]} : vector<8x128xf32> to vector<8x32xf32>
    %cst_138 = arith.constant 5.000000e-01 : f32
    %351 = vector.broadcast %cst_138 : f32 to vector<8x32xf32>
    %352 = arith.mulf %351, %350 : vector<8x32xf32>
    %353 = math.tanh %352 : vector<8x32xf32>
    %cst_139 = arith.constant 5.000000e-01 : f32
    %354 = vector.broadcast %cst_139 : f32 to vector<8x32xf32>
    %355 = arith.mulf %354, %353 : vector<8x32xf32>
    %cst_140 = arith.constant 5.000000e-01 : f32
    %356 = vector.broadcast %cst_140 : f32 to vector<8x32xf32>
    %357 = arith.addf %355, %356 : vector<8x32xf32>
    %358 = vector.extract_strided_slice %341 {offsets = [0, 64], sizes = [8, 32], strides = [1, 1]} : vector<8x128xf32> to vector<8x32xf32>
    %359 = math.tanh %358 : vector<8x32xf32>
    %360 = vector.extract_strided_slice %341 {offsets = [0, 96], sizes = [8, 32], strides = [1, 1]} : vector<8x128xf32> to vector<8x32xf32>
    %cst_141 = arith.constant 5.000000e-01 : f32
    %361 = vector.broadcast %cst_141 : f32 to vector<8x32xf32>
    %362 = arith.mulf %361, %360 : vector<8x32xf32>
    %363 = math.tanh %362 : vector<8x32xf32>
    %cst_142 = arith.constant 5.000000e-01 : f32
    %364 = vector.broadcast %cst_142 : f32 to vector<8x32xf32>
    %365 = arith.mulf %364, %363 : vector<8x32xf32>
    %cst_143 = arith.constant 5.000000e-01 : f32
    %366 = vector.broadcast %cst_143 : f32 to vector<8x32xf32>
    %367 = arith.addf %365, %366 : vector<8x32xf32>
    %368 = arith.mulf %357, %289 : vector<8x32xf32>
    %369 = arith.mulf %349, %359 : vector<8x32xf32>
    %370 = arith.addf %368, %369 : vector<8x32xf32>
    %371 = math.tanh %370 : vector<8x32xf32>
    %372 = arith.mulf %367, %371 : vector<8x32xf32>
    %373 = arith.index_cast %336 : i32 to index
    %c128_144 = arith.constant 128 : index
    %374 = vector.load %arg8[%373, %c128_144] : memref<64x256xf32, #tpu.memory_space<vmem>>, vector<8x128xf32>
    %c0_145 = arith.constant 0 : index
    %c0_146 = arith.constant 0 : index
    %375 = vector.load %arg3[%c0_145, %c0_146] : memref<32x128xf32, #tpu.memory_space<vmem>>, vector<32x128xf32>
    %cst_147 = arith.constant dense<0.000000e+00> : vector<8x128xf32>
    %376 = tpu.matmul %327, %375, %cst_147 {dimension_numbers = #tpu.dot_dimension_numbers<[1], [0], [0], [1], [0, 0, 1, 1], [], []>} : vector<8x32xf32>, vector<32x128xf32>, vector<8x128xf32> -> vector<8x128xf32>
    %377 = arith.addf %374, %376 : vector<8x128xf32>
    %378 = vector.extract_strided_slice %377 {offsets = [0, 0], sizes = [8, 32], strides = [1, 1]} : vector<8x128xf32> to vector<8x32xf32>
    %cst_148 = arith.constant 5.000000e-01 : f32
    %379 = vector.broadcast %cst_148 : f32 to vector<8x32xf32>
    %380 = arith.mulf %379, %378 : vector<8x32xf32>
    %381 = math.tanh %380 : vector<8x32xf32>
    %cst_149 = arith.constant 5.000000e-01 : f32
    %382 = vector.broadcast %cst_149 : f32 to vector<8x32xf32>
    %383 = arith.mulf %382, %381 : vector<8x32xf32>
    %cst_150 = arith.constant 5.000000e-01 : f32
    %384 = vector.broadcast %cst_150 : f32 to vector<8x32xf32>
    %385 = arith.addf %383, %384 : vector<8x32xf32>
    %386 = vector.extract_strided_slice %377 {offsets = [0, 32], sizes = [8, 32], strides = [1, 1]} : vector<8x128xf32> to vector<8x32xf32>
    %cst_151 = arith.constant 5.000000e-01 : f32
    %387 = vector.broadcast %cst_151 : f32 to vector<8x32xf32>
    %388 = arith.mulf %387, %386 : vector<8x32xf32>
    %389 = math.tanh %388 : vector<8x32xf32>
    %cst_152 = arith.constant 5.000000e-01 : f32
    %390 = vector.broadcast %cst_152 : f32 to vector<8x32xf32>
    %391 = arith.mulf %390, %389 : vector<8x32xf32>
    %cst_153 = arith.constant 5.000000e-01 : f32
    %392 = vector.broadcast %cst_153 : f32 to vector<8x32xf32>
    %393 = arith.addf %391, %392 : vector<8x32xf32>
    %394 = vector.extract_strided_slice %377 {offsets = [0, 64], sizes = [8, 32], strides = [1, 1]} : vector<8x128xf32> to vector<8x32xf32>
    %395 = math.tanh %394 : vector<8x32xf32>
    %396 = vector.extract_strided_slice %377 {offsets = [0, 96], sizes = [8, 32], strides = [1, 1]} : vector<8x128xf32> to vector<8x32xf32>
    %cst_154 = arith.constant 5.000000e-01 : f32
    %397 = vector.broadcast %cst_154 : f32 to vector<8x32xf32>
    %398 = arith.mulf %397, %396 : vector<8x32xf32>
    %399 = math.tanh %398 : vector<8x32xf32>
    %cst_155 = arith.constant 5.000000e-01 : f32
    %400 = vector.broadcast %cst_155 : f32 to vector<8x32xf32>
    %401 = arith.mulf %400, %399 : vector<8x32xf32>
    %cst_156 = arith.constant 5.000000e-01 : f32
    %402 = vector.broadcast %cst_156 : f32 to vector<8x32xf32>
    %403 = arith.addf %401, %402 : vector<8x32xf32>
    %404 = arith.mulf %393, %325 : vector<8x32xf32>
    %405 = arith.mulf %385, %395 : vector<8x32xf32>
    %406 = arith.addf %404, %405 : vector<8x32xf32>
    %407 = math.tanh %406 : vector<8x32xf32>
    %408 = arith.mulf %403, %407 : vector<8x32xf32>
    %409 = arith.index_cast %333 : i32 to index
    %c0_157 = arith.constant 0 : index
    %410 = vector.load %arg9[%409, %c0_157] : memref<64x64xf32, #tpu.memory_space<vmem>>, vector<8x32xf32>
    tpu.vector_store %arg9[%409, %c0_157], %372 {strides = array<i32>} : memref<64x64xf32, #tpu.memory_space<vmem>>, vector<8x32xf32>,
    %411 = arith.index_cast %336 : i32 to index
    %c32_158 = arith.constant 32 : index
    %412 = vector.load %arg9[%411, %c32_158] : memref<64x64xf32, #tpu.memory_space<vmem>>, vector<8x32xf32>
    tpu.vector_store %arg9[%411, %c32_158], %408 {strides = array<i32>} : memref<64x64xf32, #tpu.memory_space<vmem>>, vector<8x32xf32>,
    %c5_i32 = arith.constant 5 : i32
    %c8_i32_159 = arith.constant 8 : i32
    %413 = arith.muli %c5_i32, %c8_i32_159 : i32
    %414 = tpu.assume_multiple %413, 8 : i32
    %c7_i32_160 = arith.constant 7 : i32
    %415 = arith.subi %c7_i32_160, %c5_i32 : i32
    %c8_i32_161 = arith.constant 8 : i32
    %416 = arith.muli %415, %c8_i32_161 : i32
    %417 = tpu.assume_multiple %416, 8 : i32
    %418 = arith.index_cast %414 : i32 to index
    %c0_162 = arith.constant 0 : index
    %419 = vector.load %arg8[%418, %c0_162] : memref<64x256xf32, #tpu.memory_space<vmem>>, vector<8x128xf32>
    %c0_163 = arith.constant 0 : index
    %c0_164 = arith.constant 0 : index
    %420 = vector.load %arg2[%c0_163, %c0_164] : memref<32x128xf32, #tpu.memory_space<vmem>>, vector<32x128xf32>
    %cst_165 = arith.constant dense<0.000000e+00> : vector<8x128xf32>
    %421 = tpu.matmul %372, %420, %cst_165 {dimension_numbers = #tpu.dot_dimension_numbers<[1], [0], [0], [1], [0, 0, 1, 1], [], []>} : vector<8x32xf32>, vector<32x128xf32>, vector<8x128xf32> -> vector<8x128xf32>
    %422 = arith.addf %419, %421 : vector<8x128xf32>
    %423 = vector.extract_strided_slice %422 {offsets = [0, 0], sizes = [8, 32], strides = [1, 1]} : vector<8x128xf32> to vector<8x32xf32>
    %cst_166 = arith.constant 5.000000e-01 : f32
    %424 = vector.broadcast %cst_166 : f32 to vector<8x32xf32>
    %425 = arith.mulf %424, %423 : vector<8x32xf32>
    %426 = math.tanh %425 : vector<8x32xf32>
    %cst_167 = arith.constant 5.000000e-01 : f32
    %427 = vector.broadcast %cst_167 : f32 to vector<8x32xf32>
    %428 = arith.mulf %427, %426 : vector<8x32xf32>
    %cst_168 = arith.constant 5.000000e-01 : f32
    %429 = vector.broadcast %cst_168 : f32 to vector<8x32xf32>
    %430 = arith.addf %428, %429 : vector<8x32xf32>
    %431 = vector.extract_strided_slice %422 {offsets = [0, 32], sizes = [8, 32], strides = [1, 1]} : vector<8x128xf32> to vector<8x32xf32>
    %cst_169 = arith.constant 5.000000e-01 : f32
    %432 = vector.broadcast %cst_169 : f32 to vector<8x32xf32>
    %433 = arith.mulf %432, %431 : vector<8x32xf32>
    %434 = math.tanh %433 : vector<8x32xf32>
    %cst_170 = arith.constant 5.000000e-01 : f32
    %435 = vector.broadcast %cst_170 : f32 to vector<8x32xf32>
    %436 = arith.mulf %435, %434 : vector<8x32xf32>
    %cst_171 = arith.constant 5.000000e-01 : f32
    %437 = vector.broadcast %cst_171 : f32 to vector<8x32xf32>
    %438 = arith.addf %436, %437 : vector<8x32xf32>
    %439 = vector.extract_strided_slice %422 {offsets = [0, 64], sizes = [8, 32], strides = [1, 1]} : vector<8x128xf32> to vector<8x32xf32>
    %440 = math.tanh %439 : vector<8x32xf32>
    %441 = vector.extract_strided_slice %422 {offsets = [0, 96], sizes = [8, 32], strides = [1, 1]} : vector<8x128xf32> to vector<8x32xf32>
    %cst_172 = arith.constant 5.000000e-01 : f32
    %442 = vector.broadcast %cst_172 : f32 to vector<8x32xf32>
    %443 = arith.mulf %442, %441 : vector<8x32xf32>
    %444 = math.tanh %443 : vector<8x32xf32>
    %cst_173 = arith.constant 5.000000e-01 : f32
    %445 = vector.broadcast %cst_173 : f32 to vector<8x32xf32>
    %446 = arith.mulf %445, %444 : vector<8x32xf32>
    %cst_174 = arith.constant 5.000000e-01 : f32
    %447 = vector.broadcast %cst_174 : f32 to vector<8x32xf32>
    %448 = arith.addf %446, %447 : vector<8x32xf32>
    %449 = arith.mulf %438, %370 : vector<8x32xf32>
    %450 = arith.mulf %430, %440 : vector<8x32xf32>
    %451 = arith.addf %449, %450 : vector<8x32xf32>
    %452 = math.tanh %451 : vector<8x32xf32>
    %453 = arith.mulf %448, %452 : vector<8x32xf32>
    %454 = arith.index_cast %417 : i32 to index
    %c128_175 = arith.constant 128 : index
    %455 = vector.load %arg8[%454, %c128_175] : memref<64x256xf32, #tpu.memory_space<vmem>>, vector<8x128xf32>
    %c0_176 = arith.constant 0 : index
    %c0_177 = arith.constant 0 : index
    %456 = vector.load %arg3[%c0_176, %c0_177] : memref<32x128xf32, #tpu.memory_space<vmem>>, vector<32x128xf32>
    %cst_178 = arith.constant dense<0.000000e+00> : vector<8x128xf32>
    %457 = tpu.matmul %408, %456, %cst_178 {dimension_numbers = #tpu.dot_dimension_numbers<[1], [0], [0], [1], [0, 0, 1, 1], [], []>} : vector<8x32xf32>, vector<32x128xf32>, vector<8x128xf32> -> vector<8x128xf32>
    %458 = arith.addf %455, %457 : vector<8x128xf32>
    %459 = vector.extract_strided_slice %458 {offsets = [0, 0], sizes = [8, 32], strides = [1, 1]} : vector<8x128xf32> to vector<8x32xf32>
    %cst_179 = arith.constant 5.000000e-01 : f32
    %460 = vector.broadcast %cst_179 : f32 to vector<8x32xf32>
    %461 = arith.mulf %460, %459 : vector<8x32xf32>
    %462 = math.tanh %461 : vector<8x32xf32>
    %cst_180 = arith.constant 5.000000e-01 : f32
    %463 = vector.broadcast %cst_180 : f32 to vector<8x32xf32>
    %464 = arith.mulf %463, %462 : vector<8x32xf32>
    %cst_181 = arith.constant 5.000000e-01 : f32
    %465 = vector.broadcast %cst_181 : f32 to vector<8x32xf32>
    %466 = arith.addf %464, %465 : vector<8x32xf32>
    %467 = vector.extract_strided_slice %458 {offsets = [0, 32], sizes = [8, 32], strides = [1, 1]} : vector<8x128xf32> to vector<8x32xf32>
    %cst_182 = arith.constant 5.000000e-01 : f32
    %468 = vector.broadcast %cst_182 : f32 to vector<8x32xf32>
    %469 = arith.mulf %468, %467 : vector<8x32xf32>
    %470 = math.tanh %469 : vector<8x32xf32>
    %cst_183 = arith.constant 5.000000e-01 : f32
    %471 = vector.broadcast %cst_183 : f32 to vector<8x32xf32>
    %472 = arith.mulf %471, %470 : vector<8x32xf32>
    %cst_184 = arith.constant 5.000000e-01 : f32
    %473 = vector.broadcast %cst_184 : f32 to vector<8x32xf32>
    %474 = arith.addf %472, %473 : vector<8x32xf32>
    %475 = vector.extract_strided_slice %458 {offsets = [0, 64], sizes = [8, 32], strides = [1, 1]} : vector<8x128xf32> to vector<8x32xf32>
    %476 = math.tanh %475 : vector<8x32xf32>
    %477 = vector.extract_strided_slice %458 {offsets = [0, 96], sizes = [8, 32], strides = [1, 1]} : vector<8x128xf32> to vector<8x32xf32>
    %cst_185 = arith.constant 5.000000e-01 : f32
    %478 = vector.broadcast %cst_185 : f32 to vector<8x32xf32>
    %479 = arith.mulf %478, %477 : vector<8x32xf32>
    %480 = math.tanh %479 : vector<8x32xf32>
    %cst_186 = arith.constant 5.000000e-01 : f32
    %481 = vector.broadcast %cst_186 : f32 to vector<8x32xf32>
    %482 = arith.mulf %481, %480 : vector<8x32xf32>
    %cst_187 = arith.constant 5.000000e-01 : f32
    %483 = vector.broadcast %cst_187 : f32 to vector<8x32xf32>
    %484 = arith.addf %482, %483 : vector<8x32xf32>
    %485 = arith.mulf %474, %406 : vector<8x32xf32>
    %486 = arith.mulf %466, %476 : vector<8x32xf32>
    %487 = arith.addf %485, %486 : vector<8x32xf32>
    %488 = math.tanh %487 : vector<8x32xf32>
    %489 = arith.mulf %484, %488 : vector<8x32xf32>
    %490 = arith.index_cast %414 : i32 to index
    %c0_188 = arith.constant 0 : index
    %491 = vector.load %arg9[%490, %c0_188] : memref<64x64xf32, #tpu.memory_space<vmem>>, vector<8x32xf32>
    tpu.vector_store %arg9[%490, %c0_188], %453 {strides = array<i32>} : memref<64x64xf32, #tpu.memory_space<vmem>>, vector<8x32xf32>,
    %492 = arith.index_cast %417 : i32 to index
    %c32_189 = arith.constant 32 : index
    %493 = vector.load %arg9[%492, %c32_189] : memref<64x64xf32, #tpu.memory_space<vmem>>, vector<8x32xf32>
    tpu.vector_store %arg9[%492, %c32_189], %489 {strides = array<i32>} : memref<64x64xf32, #tpu.memory_space<vmem>>, vector<8x32xf32>,
    %c6_i32 = arith.constant 6 : i32
    %c8_i32_190 = arith.constant 8 : i32
    %494 = arith.muli %c6_i32, %c8_i32_190 : i32
    %495 = tpu.assume_multiple %494, 8 : i32
    %c7_i32_191 = arith.constant 7 : i32
    %496 = arith.subi %c7_i32_191, %c6_i32 : i32
    %c8_i32_192 = arith.constant 8 : i32
    %497 = arith.muli %496, %c8_i32_192 : i32
    %498 = tpu.assume_multiple %497, 8 : i32
    %499 = arith.index_cast %495 : i32 to index
    %c0_193 = arith.constant 0 : index
    %500 = vector.load %arg8[%499, %c0_193] : memref<64x256xf32, #tpu.memory_space<vmem>>, vector<8x128xf32>
    %c0_194 = arith.constant 0 : index
    %c0_195 = arith.constant 0 : index
    %501 = vector.load %arg2[%c0_194, %c0_195] : memref<32x128xf32, #tpu.memory_space<vmem>>, vector<32x128xf32>
    %cst_196 = arith.constant dense<0.000000e+00> : vector<8x128xf32>
    %502 = tpu.matmul %453, %501, %cst_196 {dimension_numbers = #tpu.dot_dimension_numbers<[1], [0], [0], [1], [0, 0, 1, 1], [], []>} : vector<8x32xf32>, vector<32x128xf32>, vector<8x128xf32> -> vector<8x128xf32>
    %503 = arith.addf %500, %502 : vector<8x128xf32>
    %504 = vector.extract_strided_slice %503 {offsets = [0, 0], sizes = [8, 32], strides = [1, 1]} : vector<8x128xf32> to vector<8x32xf32>
    %cst_197 = arith.constant 5.000000e-01 : f32
    %505 = vector.broadcast %cst_197 : f32 to vector<8x32xf32>
    %506 = arith.mulf %505, %504 : vector<8x32xf32>
    %507 = math.tanh %506 : vector<8x32xf32>
    %cst_198 = arith.constant 5.000000e-01 : f32
    %508 = vector.broadcast %cst_198 : f32 to vector<8x32xf32>
    %509 = arith.mulf %508, %507 : vector<8x32xf32>
    %cst_199 = arith.constant 5.000000e-01 : f32
    %510 = vector.broadcast %cst_199 : f32 to vector<8x32xf32>
    %511 = arith.addf %509, %510 : vector<8x32xf32>
    %512 = vector.extract_strided_slice %503 {offsets = [0, 32], sizes = [8, 32], strides = [1, 1]} : vector<8x128xf32> to vector<8x32xf32>
    %cst_200 = arith.constant 5.000000e-01 : f32
    %513 = vector.broadcast %cst_200 : f32 to vector<8x32xf32>
    %514 = arith.mulf %513, %512 : vector<8x32xf32>
    %515 = math.tanh %514 : vector<8x32xf32>
    %cst_201 = arith.constant 5.000000e-01 : f32
    %516 = vector.broadcast %cst_201 : f32 to vector<8x32xf32>
    %517 = arith.mulf %516, %515 : vector<8x32xf32>
    %cst_202 = arith.constant 5.000000e-01 : f32
    %518 = vector.broadcast %cst_202 : f32 to vector<8x32xf32>
    %519 = arith.addf %517, %518 : vector<8x32xf32>
    %520 = vector.extract_strided_slice %503 {offsets = [0, 64], sizes = [8, 32], strides = [1, 1]} : vector<8x128xf32> to vector<8x32xf32>
    %521 = math.tanh %520 : vector<8x32xf32>
    %522 = vector.extract_strided_slice %503 {offsets = [0, 96], sizes = [8, 32], strides = [1, 1]} : vector<8x128xf32> to vector<8x32xf32>
    %cst_203 = arith.constant 5.000000e-01 : f32
    %523 = vector.broadcast %cst_203 : f32 to vector<8x32xf32>
    %524 = arith.mulf %523, %522 : vector<8x32xf32>
    %525 = math.tanh %524 : vector<8x32xf32>
    %cst_204 = arith.constant 5.000000e-01 : f32
    %526 = vector.broadcast %cst_204 : f32 to vector<8x32xf32>
    %527 = arith.mulf %526, %525 : vector<8x32xf32>
    %cst_205 = arith.constant 5.000000e-01 : f32
    %528 = vector.broadcast %cst_205 : f32 to vector<8x32xf32>
    %529 = arith.addf %527, %528 : vector<8x32xf32>
    %530 = arith.mulf %519, %451 : vector<8x32xf32>
    %531 = arith.mulf %511, %521 : vector<8x32xf32>
    %532 = arith.addf %530, %531 : vector<8x32xf32>
    %533 = math.tanh %532 : vector<8x32xf32>
    %534 = arith.mulf %529, %533 : vector<8x32xf32>
    %535 = arith.index_cast %498 : i32 to index
    %c128_206 = arith.constant 128 : index
    %536 = vector.load %arg8[%535, %c128_206] : memref<64x256xf32, #tpu.memory_space<vmem>>, vector<8x128xf32>
    %c0_207 = arith.constant 0 : index
    %c0_208 = arith.constant 0 : index
    %537 = vector.load %arg3[%c0_207, %c0_208] : memref<32x128xf32, #tpu.memory_space<vmem>>, vector<32x128xf32>
    %cst_209 = arith.constant dense<0.000000e+00> : vector<8x128xf32>
    %538 = tpu.matmul %489, %537, %cst_209 {dimension_numbers = #tpu.dot_dimension_numbers<[1], [0], [0], [1], [0, 0, 1, 1], [], []>} : vector<8x32xf32>, vector<32x128xf32>, vector<8x128xf32> -> vector<8x128xf32>
    %539 = arith.addf %536, %538 : vector<8x128xf32>
    %540 = vector.extract_strided_slice %539 {offsets = [0, 0], sizes = [8, 32], strides = [1, 1]} : vector<8x128xf32> to vector<8x32xf32>
    %cst_210 = arith.constant 5.000000e-01 : f32
    %541 = vector.broadcast %cst_210 : f32 to vector<8x32xf32>
    %542 = arith.mulf %541, %540 : vector<8x32xf32>
    %543 = math.tanh %542 : vector<8x32xf32>
    %cst_211 = arith.constant 5.000000e-01 : f32
    %544 = vector.broadcast %cst_211 : f32 to vector<8x32xf32>
    %545 = arith.mulf %544, %543 : vector<8x32xf32>
    %cst_212 = arith.constant 5.000000e-01 : f32
    %546 = vector.broadcast %cst_212 : f32 to vector<8x32xf32>
    %547 = arith.addf %545, %546 : vector<8x32xf32>
    %548 = vector.extract_strided_slice %539 {offsets = [0, 32], sizes = [8, 32], strides = [1, 1]} : vector<8x128xf32> to vector<8x32xf32>
    %cst_213 = arith.constant 5.000000e-01 : f32
    %549 = vector.broadcast %cst_213 : f32 to vector<8x32xf32>
    %550 = arith.mulf %549, %548 : vector<8x32xf32>
    %551 = math.tanh %550 : vector<8x32xf32>
    %cst_214 = arith.constant 5.000000e-01 : f32
    %552 = vector.broadcast %cst_214 : f32 to vector<8x32xf32>
    %553 = arith.mulf %552, %551 : vector<8x32xf32>
    %cst_215 = arith.constant 5.000000e-01 : f32
    %554 = vector.broadcast %cst_215 : f32 to vector<8x32xf32>
    %555 = arith.addf %553, %554 : vector<8x32xf32>
    %556 = vector.extract_strided_slice %539 {offsets = [0, 64], sizes = [8, 32], strides = [1, 1]} : vector<8x128xf32> to vector<8x32xf32>
    %557 = math.tanh %556 : vector<8x32xf32>
    %558 = vector.extract_strided_slice %539 {offsets = [0, 96], sizes = [8, 32], strides = [1, 1]} : vector<8x128xf32> to vector<8x32xf32>
    %cst_216 = arith.constant 5.000000e-01 : f32
    %559 = vector.broadcast %cst_216 : f32 to vector<8x32xf32>
    %560 = arith.mulf %559, %558 : vector<8x32xf32>
    %561 = math.tanh %560 : vector<8x32xf32>
    %cst_217 = arith.constant 5.000000e-01 : f32
    %562 = vector.broadcast %cst_217 : f32 to vector<8x32xf32>
    %563 = arith.mulf %562, %561 : vector<8x32xf32>
    %cst_218 = arith.constant 5.000000e-01 : f32
    %564 = vector.broadcast %cst_218 : f32 to vector<8x32xf32>
    %565 = arith.addf %563, %564 : vector<8x32xf32>
    %566 = arith.mulf %555, %487 : vector<8x32xf32>
    %567 = arith.mulf %547, %557 : vector<8x32xf32>
    %568 = arith.addf %566, %567 : vector<8x32xf32>
    %569 = math.tanh %568 : vector<8x32xf32>
    %570 = arith.mulf %565, %569 : vector<8x32xf32>
    %571 = arith.index_cast %495 : i32 to index
    %c0_219 = arith.constant 0 : index
    %572 = vector.load %arg9[%571, %c0_219] : memref<64x64xf32, #tpu.memory_space<vmem>>, vector<8x32xf32>
    tpu.vector_store %arg9[%571, %c0_219], %534 {strides = array<i32>} : memref<64x64xf32, #tpu.memory_space<vmem>>, vector<8x32xf32>,
    %573 = arith.index_cast %498 : i32 to index
    %c32_220 = arith.constant 32 : index
    %574 = vector.load %arg9[%573, %c32_220] : memref<64x64xf32, #tpu.memory_space<vmem>>, vector<8x32xf32>
    tpu.vector_store %arg9[%573, %c32_220], %570 {strides = array<i32>} : memref<64x64xf32, #tpu.memory_space<vmem>>, vector<8x32xf32>,
    %c7_i32_221 = arith.constant 7 : i32
    %c8_i32_222 = arith.constant 8 : i32
    %575 = arith.muli %c7_i32_221, %c8_i32_222 : i32
    %576 = tpu.assume_multiple %575, 8 : i32
    %c7_i32_223 = arith.constant 7 : i32
    %577 = arith.subi %c7_i32_223, %c7_i32_221 : i32
    %c8_i32_224 = arith.constant 8 : i32
    %578 = arith.muli %577, %c8_i32_224 : i32
    %579 = tpu.assume_multiple %578, 8 : i32
    %580 = arith.index_cast %576 : i32 to index
    %c0_225 = arith.constant 0 : index
    %581 = vector.load %arg8[%580, %c0_225] : memref<64x256xf32, #tpu.memory_space<vmem>>, vector<8x128xf32>
    %c0_226 = arith.constant 0 : index
    %c0_227 = arith.constant 0 : index
    %582 = vector.load %arg2[%c0_226, %c0_227] : memref<32x128xf32, #tpu.memory_space<vmem>>, vector<32x128xf32>
    %cst_228 = arith.constant dense<0.000000e+00> : vector<8x128xf32>
    %583 = tpu.matmul %534, %582, %cst_228 {dimension_numbers = #tpu.dot_dimension_numbers<[1], [0], [0], [1], [0, 0, 1, 1], [], []>} : vector<8x32xf32>, vector<32x128xf32>, vector<8x128xf32> -> vector<8x128xf32>
    %584 = arith.addf %581, %583 : vector<8x128xf32>
    %585 = vector.extract_strided_slice %584 {offsets = [0, 0], sizes = [8, 32], strides = [1, 1]} : vector<8x128xf32> to vector<8x32xf32>
    %cst_229 = arith.constant 5.000000e-01 : f32
    %586 = vector.broadcast %cst_229 : f32 to vector<8x32xf32>
    %587 = arith.mulf %586, %585 : vector<8x32xf32>
    %588 = math.tanh %587 : vector<8x32xf32>
    %cst_230 = arith.constant 5.000000e-01 : f32
    %589 = vector.broadcast %cst_230 : f32 to vector<8x32xf32>
    %590 = arith.mulf %589, %588 : vector<8x32xf32>
    %cst_231 = arith.constant 5.000000e-01 : f32
    %591 = vector.broadcast %cst_231 : f32 to vector<8x32xf32>
    %592 = arith.addf %590, %591 : vector<8x32xf32>
    %593 = vector.extract_strided_slice %584 {offsets = [0, 32], sizes = [8, 32], strides = [1, 1]} : vector<8x128xf32> to vector<8x32xf32>
    %cst_232 = arith.constant 5.000000e-01 : f32
    %594 = vector.broadcast %cst_232 : f32 to vector<8x32xf32>
    %595 = arith.mulf %594, %593 : vector<8x32xf32>
    %596 = math.tanh %595 : vector<8x32xf32>
    %cst_233 = arith.constant 5.000000e-01 : f32
    %597 = vector.broadcast %cst_233 : f32 to vector<8x32xf32>
    %598 = arith.mulf %597, %596 : vector<8x32xf32>
    %cst_234 = arith.constant 5.000000e-01 : f32
    %599 = vector.broadcast %cst_234 : f32 to vector<8x32xf32>
    %600 = arith.addf %598, %599 : vector<8x32xf32>
    %601 = vector.extract_strided_slice %584 {offsets = [0, 64], sizes = [8, 32], strides = [1, 1]} : vector<8x128xf32> to vector<8x32xf32>
    %602 = math.tanh %601 : vector<8x32xf32>
    %603 = vector.extract_strided_slice %584 {offsets = [0, 96], sizes = [8, 32], strides = [1, 1]} : vector<8x128xf32> to vector<8x32xf32>
    %cst_235 = arith.constant 5.000000e-01 : f32
    %604 = vector.broadcast %cst_235 : f32 to vector<8x32xf32>
    %605 = arith.mulf %604, %603 : vector<8x32xf32>
    %606 = math.tanh %605 : vector<8x32xf32>
    %cst_236 = arith.constant 5.000000e-01 : f32
    %607 = vector.broadcast %cst_236 : f32 to vector<8x32xf32>
    %608 = arith.mulf %607, %606 : vector<8x32xf32>
    %cst_237 = arith.constant 5.000000e-01 : f32
    %609 = vector.broadcast %cst_237 : f32 to vector<8x32xf32>
    %610 = arith.addf %608, %609 : vector<8x32xf32>
    %611 = arith.mulf %600, %532 : vector<8x32xf32>
    %612 = arith.mulf %592, %602 : vector<8x32xf32>
    %613 = arith.addf %611, %612 : vector<8x32xf32>
    %614 = math.tanh %613 : vector<8x32xf32>
    %615 = arith.mulf %610, %614 : vector<8x32xf32>
    %616 = arith.index_cast %579 : i32 to index
    %c128_238 = arith.constant 128 : index
    %617 = vector.load %arg8[%616, %c128_238] : memref<64x256xf32, #tpu.memory_space<vmem>>, vector<8x128xf32>
    %c0_239 = arith.constant 0 : index
    %c0_240 = arith.constant 0 : index
    %618 = vector.load %arg3[%c0_239, %c0_240] : memref<32x128xf32, #tpu.memory_space<vmem>>, vector<32x128xf32>
    %cst_241 = arith.constant dense<0.000000e+00> : vector<8x128xf32>
    %619 = tpu.matmul %570, %618, %cst_241 {dimension_numbers = #tpu.dot_dimension_numbers<[1], [0], [0], [1], [0, 0, 1, 1], [], []>} : vector<8x32xf32>, vector<32x128xf32>, vector<8x128xf32> -> vector<8x128xf32>
    %620 = arith.addf %617, %619 : vector<8x128xf32>
    %621 = vector.extract_strided_slice %620 {offsets = [0, 0], sizes = [8, 32], strides = [1, 1]} : vector<8x128xf32> to vector<8x32xf32>
    %cst_242 = arith.constant 5.000000e-01 : f32
    %622 = vector.broadcast %cst_242 : f32 to vector<8x32xf32>
    %623 = arith.mulf %622, %621 : vector<8x32xf32>
    %624 = math.tanh %623 : vector<8x32xf32>
    %cst_243 = arith.constant 5.000000e-01 : f32
    %625 = vector.broadcast %cst_243 : f32 to vector<8x32xf32>
    %626 = arith.mulf %625, %624 : vector<8x32xf32>
    %cst_244 = arith.constant 5.000000e-01 : f32
    %627 = vector.broadcast %cst_244 : f32 to vector<8x32xf32>
    %628 = arith.addf %626, %627 : vector<8x32xf32>
    %629 = vector.extract_strided_slice %620 {offsets = [0, 32], sizes = [8, 32], strides = [1, 1]} : vector<8x128xf32> to vector<8x32xf32>
    %cst_245 = arith.constant 5.000000e-01 : f32
    %630 = vector.broadcast %cst_245 : f32 to vector<8x32xf32>
    %631 = arith.mulf %630, %629 : vector<8x32xf32>
    %632 = math.tanh %631 : vector<8x32xf32>
    %cst_246 = arith.constant 5.000000e-01 : f32
    %633 = vector.broadcast %cst_246 : f32 to vector<8x32xf32>
    %634 = arith.mulf %633, %632 : vector<8x32xf32>
    %cst_247 = arith.constant 5.000000e-01 : f32
    %635 = vector.broadcast %cst_247 : f32 to vector<8x32xf32>
    %636 = arith.addf %634, %635 : vector<8x32xf32>
    %637 = vector.extract_strided_slice %620 {offsets = [0, 64], sizes = [8, 32], strides = [1, 1]} : vector<8x128xf32> to vector<8x32xf32>
    %638 = math.tanh %637 : vector<8x32xf32>
    %639 = vector.extract_strided_slice %620 {offsets = [0, 96], sizes = [8, 32], strides = [1, 1]} : vector<8x128xf32> to vector<8x32xf32>
    %cst_248 = arith.constant 5.000000e-01 : f32
    %640 = vector.broadcast %cst_248 : f32 to vector<8x32xf32>
    %641 = arith.mulf %640, %639 : vector<8x32xf32>
    %642 = math.tanh %641 : vector<8x32xf32>
    %cst_249 = arith.constant 5.000000e-01 : f32
    %643 = vector.broadcast %cst_249 : f32 to vector<8x32xf32>
    %644 = arith.mulf %643, %642 : vector<8x32xf32>
    %cst_250 = arith.constant 5.000000e-01 : f32
    %645 = vector.broadcast %cst_250 : f32 to vector<8x32xf32>
    %646 = arith.addf %644, %645 : vector<8x32xf32>
    %647 = arith.mulf %636, %568 : vector<8x32xf32>
    %648 = arith.mulf %628, %638 : vector<8x32xf32>
    %649 = arith.addf %647, %648 : vector<8x32xf32>
    %650 = math.tanh %649 : vector<8x32xf32>
    %651 = arith.mulf %646, %650 : vector<8x32xf32>
    %652 = arith.index_cast %576 : i32 to index
    %c0_251 = arith.constant 0 : index
    %653 = vector.load %arg9[%652, %c0_251] : memref<64x64xf32, #tpu.memory_space<vmem>>, vector<8x32xf32>
    tpu.vector_store %arg9[%652, %c0_251], %615 {strides = array<i32>} : memref<64x64xf32, #tpu.memory_space<vmem>>, vector<8x32xf32>,
    %654 = arith.index_cast %579 : i32 to index
    %c32_252 = arith.constant 32 : index
    %655 = vector.load %arg9[%654, %c32_252] : memref<64x64xf32, #tpu.memory_space<vmem>>, vector<8x32xf32>
    tpu.vector_store %arg9[%654, %c32_252], %651 {strides = array<i32>} : memref<64x64xf32, #tpu.memory_space<vmem>>, vector<8x32xf32>,
    %c8_i32_253 = arith.constant 8 : i32
    %c0_254 = arith.constant 0 : index
    %c0_255 = arith.constant 0 : index
    %656 = vector.load %arg9[%c0_254, %c0_255] : memref<64x64xf32, #tpu.memory_space<vmem>>, vector<64x64xf32>
    %c0_256 = arith.constant 0 : index
    %c0_257 = arith.constant 0 : index
    %657 = vector.load %arg5[%c0_256, %c0_257] : memref<64x128xf32, #tpu.memory_space<vmem>>, vector<64x128xf32>
    %cst_258 = arith.constant dense<0.000000e+00> : vector<64x128xf32>
    %658 = tpu.matmul %656, %657, %cst_258 {dimension_numbers = #tpu.dot_dimension_numbers<[1], [0], [0], [1], [0, 0, 1, 1], [], []>} : vector<64x64xf32>, vector<64x128xf32>, vector<64x128xf32> -> vector<64x128xf32>
    %c0_259 = arith.constant 0 : index
    %c0_260 = arith.constant 0 : index
    %659 = vector.load %arg6[%c0_259, %c0_260] : memref<1x128xf32, #tpu.memory_space<vmem>>, vector<1x128xf32>
    %660 = vector.broadcast %659 : vector<1x128xf32> to vector<64x128xf32>
    %661 = arith.addf %658, %660 : vector<64x128xf32>
    %c0_261 = arith.constant 0 : index
    %c0_262 = arith.constant 0 : index
    %662 = vector.load %arg7[%c0_261, %c0_262] : memref<64x128xf32, #tpu.memory_space<vmem>>, vector<64x128xf32>
    tpu.vector_store %arg7[%c0_261, %c0_262], %661 {strides = array<i32>} : memref<64x128xf32, #tpu.memory_space<vmem>>, vector<64x128xf32>,
    return
  }
}

</mosaic_0001>

<llo_original>
// kernel: tpu_custom_call.1
$region0: #{tpu_custom_call.1}
  #allocation0 [shape = 'u32[]', space=smem, size = 0x4, offset = 0x4, fixed_abs, tag = 'smem constant byte address 0x4 - core index']
  #allocation1 [shape = 'u32[144,128]{1,0:T(1,128)}', space=vmem, size = 0x12000, scoped, tag = 'internal scratch']
  #allocation2 [shape = 'f32[64,256]{1,0:T(8,128)}', space=vmem, size = 0x10000, scoped, tag = 'scratch operand']
  #allocation3 [shape = 'f32[64,64]{1,0:T(8,128)}', space=vmem, size = 0x8000, scoped, tag = 'scratch operand']
  %s0 = inlined_call_operand.vmem [shape: f32[64,16], index: 0, kind: input, shape index: {}]
  %s1 = inlined_call_operand.vmem [shape: f32[16,256], index: 1, kind: input, shape index: {}]
  %s2 = inlined_call_operand.hbm [shape: f32[32,128], index: 2, kind: input, shape index: {}]
  %s3 = inlined_call_operand.hbm [shape: f32[32,128], index: 3, kind: input, shape index: {}]
  %s4 = inlined_call_operand.vmem [shape: f32[1,256], index: 4, kind: input, shape index: {}]
  %s5 = inlined_call_operand.vmem [shape: f32[64,128], index: 5, kind: input, shape index: {}]
  %s6 = inlined_call_operand.vmem [shape: f32[1,128], index: 6, kind: input, shape index: {}]
  %s7 = inlined_call_operand.hbm [shape: f32[64,128], index: 7, kind: output, shape index: {}]
  %s8 = sld [smem:[#allocation0]]
  $region46: #{tpu_custom_call.1} parent=0
    _
  %s10 = ssub.s32 1, %s8
  %s11 = scalar_select 0, %s10, %s8
  $region1: #{tpu_custom_call.1} parent=0
    #allocation4 [shape = 'u8[16384]{0}', space=vmem, size = 0x4000, scoped, tag = 'input window, operand 2, single buffered']
    #allocation5 [shape = 's32[1]{0}', space=sflag, size = 0x4, scoped, tag = 'scoped memory for tpu_custom_call.1']
    #allocation6 [shape = 's32[1]{0}', space=sflag, size = 0x4, scoped, tag = 'scoped memory for tpu_custom_call.1']
    #allocation7 [shape = 'u8[16384]{0}', space=vmem, size = 0x4000, scoped, tag = 'input window, operand 3, single buffered']
    #allocation8 [shape = 's32[1]{0}', space=sflag, size = 0x4, scoped, tag = 'scoped memory for tpu_custom_call.1']
    #allocation9 [shape = 'u8[32768]{0}', space=vmem, size = 0x8000, scoped, tag = 'output window, operand 0, single buffered']
    %12 = vsyncpa [#allocation5], 0
    %13 = vsyncpa [#allocation8], 0
    %14 = vsyncpa [#allocation6], 0
    // Predicated region
    $region2: #{tpu_custom_call.1} parent=1 // pred_check
      _
    $region3: #{tpu_custom_call.1} parent=1 // pred_check_branch
      %16 = sbr.rel (0) target = $region5
    $region4: #{tpu_custom_call.1} parent=1 // pred_region
      _
    $region5: #{tpu_custom_call.1} parent=1 // pred_fallthru
      _
    // Predicated region
    $region6: #{tpu_custom_call.1} parent=1 // pred_check
      _
    $region7: #{tpu_custom_call.1} parent=1 // pred_check_branch
      %18 = sbr.rel (0) target = $region9
    $region8: #{tpu_custom_call.1} parent=1 // pred_region
      _
    $region9: #{tpu_custom_call.1} parent=1 // pred_fallthru
      _
    // Predicated region
    $region10: #{tpu_custom_call.1} parent=1 // pred_check
      _
    $region11: #{tpu_custom_call.1} parent=1 // pred_check_branch
      %20 = sbr.rel (0) target = $region13
    $region12: #{tpu_custom_call.1} parent=1 // pred_region
      %s22 = ssub.s32 512, 512
      %23 = vsyncadd [#allocation5], %s22
      %s24 = sshll.u32 [#allocation4], 4
      %s25 = int_to_ptr.vmem [resolvable:$true] %s24
      %30 = dma.hbm_to_vmem [thread:$0]  %s2, 512, %s25, [#allocation5], 128, 128, 8
    $region13: #{tpu_custom_call.1} parent=1 // pred_fallthru
      _
    // Predicated region
    $region14: #{tpu_custom_call.1} parent=1 // pred_check
      _
    $region15: #{tpu_custom_call.1} parent=1 // pred_check_branch
      %32 = sbr.rel (0) target = $region17
    $region16: #{tpu_custom_call.1} parent=1 // pred_region
      %s34 = ssub.s32 512, 512
      %35 = vsyncadd [#allocation8], %s34
      %s36 = sshll.u32 [#allocation7], 4
      %s37 = int_to_ptr.vmem [resolvable:$true] %s36
      %42 = dma.hbm_to_vmem [thread:$0]  %s3, 512, %s37, [#allocation8], 128, 128, 8
    $region17: #{tpu_custom_call.1} parent=1 // pred_fallthru
      _
    // Predicated region
    $region18: #{tpu_custom_call.1} parent=1 // pred_check
      _
    $region19: #{tpu_custom_call.1} parent=1 // pred_check_branch
      %44 = sbr.rel (0) target = $region21
    $region20: #{tpu_custom_call.1} parent=1 // pred_region
      _
    $region21: #{tpu_custom_call.1} parent=1 // pred_fallthru
      _
    // Predicated region
    $region22: #{tpu_custom_call.1} parent=1 // pred_check
      _
    $region23: #{tpu_custom_call.1} parent=1 // pred_check_branch
      %46 = sbr.rel (0) target = $region25
    $region24: #{tpu_custom_call.1} parent=1 // pred_region
      _
    $region25: #{tpu_custom_call.1} parent=1 // pred_fallthru
      _
    // Predicated region
    $region26: #{tpu_custom_call.1} parent=1 // pred_check
      _
    $region27: #{tpu_custom_call.1} parent=1 // pred_check_branch
      %48 = sbr.rel (0) target = $region29
    $region28: #{tpu_custom_call.1} parent=1 // pred_region
      _
    $region29: #{tpu_custom_call.1} parent=1 // pred_fallthru
      _
    // Predicated region
    $region30: #{tpu_custom_call.1} parent=1 // pred_check
      _
    $region31: #{tpu_custom_call.1} parent=1 // pred_check_branch
      %50 = sbr.rel (0) target = $region33
    $region32: #{tpu_custom_call.1} parent=1 // pred_region
      %51 = dma.done [#allocation5], 512
    $region33: #{tpu_custom_call.1} parent=1 // pred_fallthru
      _
    // Predicated region
    $region34: #{tpu_custom_call.1} parent=1 // pred_check
      _
    $region35: #{tpu_custom_call.1} parent=1 // pred_check_branch
      %53 = sbr.rel (0) target = $region37
    $region36: #{tpu_custom_call.1} parent=1 // pred_region
      %54 = dma.done [#allocation8], 512
    $region37: #{tpu_custom_call.1} parent=1 // pred_fallthru
      _
    %v55 = vld [vmem:[%s0] sm:$0xff]
    %v56 = vld [vmem:[%s0 + $0x8] sm:$0xff]
    %v57 = vld [vmem:[%s0 + $0x10] sm:$0xff]
    %v58 = vld [vmem:[%s0 + $0x18] sm:$0xff]
    %v59 = vld [vmem:[%s0 + $0x20] sm:$0xff]
    %v60 = vld [vmem:[%s0 + $0x28] sm:$0xff]
    %v61 = vld [vmem:[%s0 + $0x30] sm:$0xff]
    %v62 = vld [vmem:[%s0 + $0x38] sm:$0xff]
    %v63 = vld [vmem:[%s1] sm:$0xff]
    %v64 = vld [vmem:[%s1 + $0x8] sm:$0xff]
    %v65 = vld [vmem:[%s1 + $0x10] sm:$0xff]
    %v66 = vld [vmem:[%s1 + $0x18] sm:$0xff]
    %v67 = vld [vmem:[%s4] sm:$0x3]
    %v69 = vlaneseq
    %v70 = vshrl.u32 %v69, 7
    %v71 = vsub.s32 0, %v70
    %v72 = vrot.slane %v67, %v71
    %v73 = vlaneseq
    %v74 = vshrl.u32 %v73, 7
    %v75 = vsub.s32 1, %v74
    %v76 = vrot.slane %v67, %v75
    %vm79 = vcmask 130048
    %v81 = vsel %vm79, %v55, 0
    %v84 = vsel %vm79, %v56, 0
    %v87 = vsel %vm79, %v57, 0
    %v90 = vsel %vm79, %v58, 0
    %v93 = vsel %vm79, %v59, 0
    %v96 = vsel %vm79, %v60, 0
    %v99 = vsel %vm79, %v61, 0
    %v102 = vsel %vm79, %v62, 0
    %104 = vmatprep.subr.mxu0 %v64
    %105 = vmatpush1.msra.mxu0 %v63
    %106 = vmatprep.subr.mxu0 %v66
    %107 = vmatpush1.msra.mxu0 %v65
    %108 = vmatprep.subr.mxu0 0.0
    %109 = vmatpush1.msra.mxu0 0.0
    %110 = vmatprep.subr.mxu0 0.0
    %111 = vmatpush1.msra.mxu0 0.0
    %112 = vmatprep.subr.mxu0 0.0
    %113 = vmatpush1.msra.mxu0 0.0
    %114 = vmatprep.subr.mxu0 0.0
    %115 = vmatpush1.msra.mxu0 0.0
    %116 = vmatprep.subr.mxu0 0.0
    %117 = vmatpush1.msra.mxu0 0.0
    %118 = vmatprep.subr.mxu0 0.0
    %119 = vmatpush1.msra.mxu0 0.0
    %120 = vmatprep.subr.mxu0 0.0
    %121 = vmatpush1.msra.mxu0 0.0
    %122 = vmatprep.subr.mxu0 0.0
    %123 = vmatpush1.msra.mxu0 0.0
    %124 = vmatprep.subr.mxu0 0.0
    %125 = vmatpush1.msra.mxu0 0.0
    %126 = vmatprep.subr.mxu0 0.0
    %127 = vmatpush1.msra.mxu0 0.0
    %128 = vmatprep.subr.mxu0 0.0
    %129 = vmatpush1.msra.mxu0 0.0
    %130 = vmatprep.subr.mxu0 0.0
    %131 = vmatpush1.msra.mxu0 0.0
    %132 = vmatprep.subr.mxu0 0.0
    %133 = vmatpush1.msra.mxu0 0.0
    %134 = vmatprep.subr.mxu0 0.0
    %135 = vmatpush1.msra.mxu0 0.0
    %136 = vmatprep.subr.mxu0 0.0
    %137 = vmatpush1.msra.mxu0 0.0
    %138 = vmatprep.subr.mxu0 0.0
    %139 = vmatpush1.msra.mxu0 0.0
    %140 = vmatprep.subr.mxu0 0.0
    %141 = vmatpush1.msra.mxu0 0.0
    %142 = vmatprep.subr.mxu0 0.0
    %143 = vmatpush1.msra.mxu0 0.0
    %144 = vmatprep.subr.mxu0 0.0
    %145 = vmatpush1.msra.mxu0 0.0
    %146 = vmatprep.subr.mxu0 0.0
    %147 = vmatpush1.msra.mxu0 0.0
    %148 = vmatprep.subr.mxu0 0.0
    %149 = vmatpush1.msra.mxu0 0.0
    %150 = vmatprep.subr.mxu0 0.0
    %151 = vmatpush1.msra.mxu0 0.0
    %152 = vmatprep.subr.mxu0 0.0
    %153 = vmatpush1.msra.mxu0 0.0
    %154 = vmatprep.subr.mxu0 0.0
    %155 = vmatpush1.msra.mxu0 0.0
    %156 = vmatprep.subr.mxu0 0.0
    %157 = vmatpush1.msra.mxu0 0.0
    %158 = vmatprep.subr.mxu0 0.0
    %159 = vmatpush1.msra.mxu0 0.0
    %160 = vmatprep.subr.mxu0 0.0
    %161 = vmatpush1.msra.mxu0 0.0
    %162 = vmatprep.subr.mxu0 0.0
    %163 = vmatpush1.msra.mxu0 0.0
    %164 = vmatprep.subr.mxu0 0.0
    %165 = vmatpush1.msra.mxu0 0.0
    %166 = vmatprep.subr.mxu0 0.0
    %167 = vmatpush1.msra.mxu0 0.0
    %168 = vmatprep.mubr.f32.mxu0 0.0
    %169 = vmatmul.mubr.f32.gmra.mrb[0].mxu0 %v81
    %v170 = vpop.f32.mrb[0].mxu0
    %v171 = vadd.f32 %v72, %v170
    %v172 = vpop.f32.mrb[0].mxu0
    %v173 = vadd.f32 %v76, %v172
    %174 = vmatprep.mubr.f32.mxu0 0.0
    %175 = vmatmul.mubr.f32.gmra.mrb[0].mxu0 %v84
    %v176 = vpop.f32.mrb[0].mxu0
    %v177 = vadd.f32 %v72, %v176
    %v178 = vpop.f32.mrb[0].mxu0
    %v179 = vadd.f32 %v76, %v178
    %180 = vmatprep.mubr.f32.mxu0 0.0
    %181 = vmatmul.mubr.f32.gmra.mrb[0].mxu0 %v87
    %v182 = vpop.f32.mrb[0].mxu0
    %v183 = vadd.f32 %v72, %v182
    %v184 = vpop.f32.mrb[0].mxu0
    %v185 = vadd.f32 %v76, %v184
    %186 = vmatprep.mubr.f32.mxu0 0.0
    %187 = vmatmul.mubr.f32.gmra.mrb[0].mxu0 %v90
    %v188 = vpop.f32.mrb[0].mxu0
    %v189 = vadd.f32 %v72, %v188
    %v190 = vpop.f32.mrb[0].mxu0
    %v191 = vadd.f32 %v76, %v190
    %192 = vmatprep.mubr.f32.mxu0 0.0
    %193 = vmatmul.mubr.f32.gmra.mrb[0].mxu0 %v93
    %v194 = vpop.f32.mrb[0].mxu0
    %v195 = vadd.f32 %v72, %v194
    %v196 = vpop.f32.mrb[0].mxu0
    %v197 = vadd.f32 %v76, %v196
    %198 = vmatprep.mubr.f32.mxu0 0.0
    %199 = vmatmul.mubr.f32.gmra.mrb[0].mxu0 %v96
    %v200 = vpop.f32.mrb[0].mxu0
    %v201 = vadd.f32 %v72, %v200
    %v202 = vpop.f32.mrb[0].mxu0
    %v203 = vadd.f32 %v76, %v202
    %204 = vmatprep.mubr.f32.mxu0 0.0
    %205 = vmatmul.mubr.f32.gmra.mrb[0].mxu0 %v99
    %v206 = vpop.f32.mrb[0].mxu0
    %v207 = vadd.f32 %v72, %v206
    %v208 = vpop.f32.mrb[0].mxu0
    %v209 = vadd.f32 %v76, %v208
    %210 = vmatprep.mubr.f32.mxu0 0.0
    %211 = vmatmul.mubr.f32.gmra.mrb[0].mxu0 %v102
    %v212 = vpop.f32.mrb[0].mxu0
    %v213 = vadd.f32 %v72, %v212
    %v214 = vpop.f32.mrb[0].mxu0
    %v215 = vadd.f32 %v76, %v214
    %216 = vdwg.mxu0
    %217 = vst [vmem:[#allocation2] sm:$0xff] %v171
    %218 = vst [vmem:[#allocation2 + $0x8] sm:$0xff] %v173
    %219 = vst [vmem:[#allocation2 + $0x10] sm:$0xff] %v177
    %220 = vst [vmem:[#allocation2 + $0x18] sm:$0xff] %v179
    %221 = vst [vmem:[#allocation2 + $0x20] sm:$0xff] %v183
    %222 = vst [vmem:[#allocation2 + $0x28] sm:$0xff] %v185
    %223 = vst [vmem:[#allocation2 + $0x30] sm:$0xff] %v189
    %224 = vst [vmem:[#allocation2 + $0x38] sm:$0xff] %v191
    %225 = vst [vmem:[#allocation2 + $0x40] sm:$0xff] %v195
    %226 = vst [vmem:[#allocation2 + $0x48] sm:$0xff] %v197
    %227 = vst [vmem:[#allocation2 + $0x50] sm:$0xff] %v201
    %228 = vst [vmem:[#allocation2 + $0x58] sm:$0xff] %v203
    %229 = vst [vmem:[#allocation2 + $0x60] sm:$0xff] %v207
    %230 = vst [vmem:[#allocation2 + $0x68] sm:$0xff] %v209
    %231 = vst [vmem:[#allocation2 + $0x70] sm:$0xff] %v213
    %232 = vst [vmem:[#allocation2 + $0x78] sm:$0xff] %v215
    %s233 = smul.u32 0, 2
    %s234 = smul.addr %s233, 8
    %s235 = scalar_lea.vmem [#allocation2], %s234
    %v236 = vld [vmem:[%s235] sm:$0xff]
    %v237 = vld [vmem:[#allocation4] sm:$0xff]
    %v238 = vld [vmem:[#allocation4 + $0x8] sm:$0xff]
    %v239 = vld [vmem:[#allocation4 + $0x10] sm:$0xff]
    %v240 = vld [vmem:[#allocation4 + $0x18] sm:$0xff]
    %vm241 = vcmask 261120
    %v243 = vsel %vm241, 0.0, 0
    %245 = vmatprep.subr.mxu0 0.0
    %246 = vmatpush1.msra.mxu0 %v237
    %247 = vmatprep.subr.mxu0 0.0
    %248 = vmatpush1.msra.mxu0 %v238
    %249 = vmatprep.subr.mxu0 0.0
    %250 = vmatpush1.msra.mxu0 %v239
    %251 = vmatprep.subr.mxu0 0.0
    %252 = vmatpush1.msra.mxu0 %v240
    %253 = vmatprep.subr.mxu0 0.0
    %254 = vmatpush1.msra.mxu0 0.0
    %255 = vmatprep.subr.mxu0 0.0
    %256 = vmatpush1.msra.mxu0 0.0
    %257 = vmatprep.subr.mxu0 0.0
    %258 = vmatpush1.msra.mxu0 0.0
    %259 = vmatprep.subr.mxu0 0.0
    %260 = vmatpush1.msra.mxu0 0.0
    %261 = vmatprep.subr.mxu0 0.0
    %262 = vmatpush1.msra.mxu0 0.0
    %263 = vmatprep.subr.mxu0 0.0
    %264 = vmatpush1.msra.mxu0 0.0
    %265 = vmatprep.subr.mxu0 0.0
    %266 = vmatpush1.msra.mxu0 0.0
    %267 = vmatprep.subr.mxu0 0.0
    %268 = vmatpush1.msra.mxu0 0.0
    %269 = vmatprep.subr.mxu0 0.0
    %270 = vmatpush1.msra.mxu0 0.0
    %271 = vmatprep.subr.mxu0 0.0
    %272 = vmatpush1.msra.mxu0 0.0
    %273 = vmatprep.subr.mxu0 0.0
    %274 = vmatpush1.msra.mxu0 0.0
    %275 = vmatprep.subr.mxu0 0.0
    %276 = vmatpush1.msra.mxu0 0.0
    %277 = vmatprep.subr.mxu0 0.0
    %278 = vmatpush1.msra.mxu0 0.0
    %279 = vmatprep.subr.mxu0 0.0
    %280 = vmatpush1.msra.mxu0 0.0
    %281 = vmatprep.subr.mxu0 0.0
    %282 = vmatpush1.msra.mxu0 0.0
    %283 = vmatprep.subr.mxu0 0.0
    %284 = vmatpush1.msra.mxu0 0.0
    %285 = vmatprep.subr.mxu0 0.0
    %286 = vmatpush1.msra.mxu0 0.0
    %287 = vmatprep.subr.mxu0 0.0
    %288 = vmatpush1.msra.mxu0 0.0
    %289 = vmatprep.subr.mxu0 0.0
    %290 = vmatpush1.msra.mxu0 0.0
    %291 = vmatprep.subr.mxu0 0.0
    %292 = vmatpush1.msra.mxu0 0.0
    %293 = vmatprep.subr.mxu0 0.0
    %294 = vmatpush1.msra.mxu0 0.0
    %295 = vmatprep.subr.mxu0 0.0
    %296 = vmatpush1.msra.mxu0 0.0
    %297 = vmatprep.subr.mxu0 0.0
    %298 = vmatpush1.msra.mxu0 0.0
    %299 = vmatprep.subr.mxu0 0.0
    %300 = vmatpush1.msra.mxu0 0.0
    %301 = vmatprep.subr.mxu0 0.0
    %302 = vmatpush1.msra.mxu0 0.0
    %303 = vmatprep.subr.mxu0 0.0
    %304 = vmatpush1.msra.mxu0 0.0
    %305 = vmatprep.subr.mxu0 0.0
    %306 = vmatpush1.msra.mxu0 0.0
    %307 = vmatprep.subr.mxu0 0.0
    %308 = vmatpush1.msra.mxu0 0.0
    %309 = vmatprep.mubr.f32.mxu0 0.0
    %310 = vmatmul.mubr.f32.gmra.mrb[0].mxu0 %v243
    %v311 = vpop.f32.mrb[0].mxu0
    %v312 = vadd.f32 0.0, %v311
    %v313 = vpop.f32.mrb[0].mxu0
    %314 = vdwg.mxu0
    %v315 = vadd.f32 %v236, %v312
    %v316 = vmul.f32 %v315, 0.5
    %v317 = vtanh.pop %v316
    %v318 = vmul.f32 %v317, 0.5
    %v319 = vadd.f32 %v318, 0.5
    %v320 = vtanh.pop %v315
    %v321 = vmul.f32 %v319, 0.0
    %323 = vrot.lane.b32.xlu0 %v320, 64
    %v324 = vpop.permute.xlu0 %323
    %v326 = vmul.f32 %v319, %v324
    %328 = vrot.lane.b32.xlu0 %v326, 32
    %v329 = vpop.permute.xlu0 %328
    %v331 = vadd.f32 %v321, %v329
    %v332 = vtanh.pop %v331
    %334 = vrot.lane.b32.xlu0 %v332, 64
    %v335 = vpop.permute.xlu0 %334
    %v337 = vmul.f32 %v319, %v335
    %s338 = smul.u32 7, 2
    %s339 = smul.addr %s338, 8
    %s340 = scalar_lea.vmem [#allocation2], %s339
    %v341 = vld [vmem:[%s340 + $0x8] sm:$0xff]
    %v342 = vld [vmem:[#allocation7] sm:$0xff]
    %v343 = vld [vmem:[#allocation7 + $0x8] sm:$0xff]
    %v344 = vld [vmem:[#allocation7 + $0x10] sm:$0xff]
    %v345 = vld [vmem:[#allocation7 + $0x18] sm:$0xff]
    %346 = vmatprep.subr.mxu0 0.0
    %347 = vmatpush1.msra.mxu0 %v342
    %348 = vmatprep.subr.mxu0 0.0
    %349 = vmatpush1.msra.mxu0 %v343
    %350 = vmatprep.subr.mxu0 0.0
    %351 = vmatpush1.msra.mxu0 %v344
    %352 = vmatprep.subr.mxu0 0.0
    %353 = vmatpush1.msra.mxu0 %v345
    %354 = vmatprep.subr.mxu0 0.0
    %355 = vmatpush1.msra.mxu0 0.0
    %356 = vmatprep.subr.mxu0 0.0
    %357 = vmatpush1.msra.mxu0 0.0
    %358 = vmatprep.subr.mxu0 0.0
    %359 = vmatpush1.msra.mxu0 0.0
    %360 = vmatprep.subr.mxu0 0.0
    %361 = vmatpush1.msra.mxu0 0.0
    %362 = vmatprep.subr.mxu0 0.0
    %363 = vmatpush1.msra.mxu0 0.0
    %364 = vmatprep.subr.mxu0 0.0
    %365 = vmatpush1.msra.mxu0 0.0
    %366 = vmatprep.subr.mxu0 0.0
    %367 = vmatpush1.msra.mxu0 0.0
    %368 = vmatprep.subr.mxu0 0.0
    %369 = vmatpush1.msra.mxu0 0.0
    %370 = vmatprep.subr.mxu0 0.0
    %371 = vmatpush1.msra.mxu0 0.0
    %372 = vmatprep.subr.mxu0 0.0
    %373 = vmatpush1.msra.mxu0 0.0
    %374 = vmatprep.subr.mxu0 0.0
    %375 = vmatpush1.msra.mxu0 0.0
    %376 = vmatprep.subr.mxu0 0.0
    %377 = vmatpush1.msra.mxu0 0.0
    %378 = vmatprep.subr.mxu0 0.0
    %379 = vmatpush1.msra.mxu0 0.0
    %380 = vmatprep.subr.mxu0 0.0
    %381 = vmatpush1.msra.mxu0 0.0
    %382 = vmatprep.subr.mxu0 0.0
    %383 = vmatpush1.msra.mxu0 0.0
    %384 = vmatprep.subr.mxu0 0.0
    %385 = vmatpush1.msra.mxu0 0.0
    %386 = vmatprep.subr.mxu0 0.0
    %387 = vmatpush1.msra.mxu0 0.0
    %388 = vmatprep.subr.mxu0 0.0
    %389 = vmatpush1.msra.mxu0 0.0
    %390 = vmatprep.subr.mxu0 0.0
    %391 = vmatpush1.msra.mxu0 0.0
    %392 = vmatprep.subr.mxu0 0.0
    %393 = vmatpush1.msra.mxu0 0.0
    %394 = vmatprep.subr.mxu0 0.0
    %395 = vmatpush1.msra.mxu0 0.0
    %396 = vmatprep.subr.mxu0 0.0
    %397 = vmatpush1.msra.mxu0 0.0
    %398 = vmatprep.subr.mxu0 0.0
    %399 = vmatpush1.msra.mxu0 0.0
    %400 = vmatprep.subr.mxu0 0.0
    %401 = vmatpush1.msra.mxu0 0.0
    %402 = vmatprep.subr.mxu0 0.0
    %403 = vmatpush1.msra.mxu0 0.0
    %404 = vmatprep.subr.mxu0 0.0
    %405 = vmatpush1.msra.mxu0 0.0
    %406 = vmatprep.subr.mxu0 0.0
    %407 = vmatpush1.msra.mxu0 0.0
    %408 = vmatprep.subr.mxu0 0.0
    %409 = vmatpush1.msra.mxu0 0.0
    %410 = vmatprep.mubr.f32.mxu0 0.0
    %411 = vmatmul.mubr.f32.gmra.mrb[0].mxu0 %v243
    %v412 = vpop.f32.mrb[0].mxu0
    %v413 = vadd.f32 0.0, %v412
    %v414 = vpop.f32.mrb[0].mxu0
    %415 = vdwg.mxu0
    %v416 = vadd.f32 %v341, %v413
    %v417 = vmul.f32 %v416, 0.5
    %v418 = vtanh.pop %v417
    %v419 = vmul.f32 %v418, 0.5
    %v420 = vadd.f32 %v419, 0.5
    %v421 = vtanh.pop %v416
    %v422 = vmul.f32 %v420, 0.0
    %424 = vrot.lane.b32.xlu0 %v421, 64
    %v425 = vpop.permute.xlu0 %424
    %v427 = vmul.f32 %v420, %v425
    %429 = vrot.lane.b32.xlu0 %v427, 32
    %v430 = vpop.permute.xlu0 %429
    %v432 = vadd.f32 %v422, %v430
    %v433 = vtanh.pop %v432
    %435 = vrot.lane.b32.xlu0 %v433, 64
    %v436 = vpop.permute.xlu0 %435
    %v438 = vmul.f32 %v420, %v436
    %440 = vrot.lane.b32.xlu0 %v337, 32
    %v441 = vpop.permute.xlu0 %440
    %443 = vst.msk [vmem:[#allocation3] sm:$0xff] %vm241, %v441
    %445 = vrot.lane.b32.xlu0 %v438, 64
    %v446 = vpop.permute.xlu0 %445
    %s448 = scalar_lea.vmem [#allocation3], 56
    %vm449 = vcmask 523520
    %450 = vst.msk [vmem:[%s448] sm:$0xff] %vm449, %v446
    %s451 = smul.u32 1, 2
    %s452 = smul.addr %s451, 8
    %s453 = scalar_lea.vmem [#allocation2], %s452
    %v454 = vld [vmem:[%s453] sm:$0xff]
    %v455 = vld [vmem:[#allocation4] sm:$0xff]
    %v456 = vld [vmem:[#allocation4 + $0x8] sm:$0xff]
    %v457 = vld [vmem:[#allocation4 + $0x10] sm:$0xff]
    %v458 = vld [vmem:[#allocation4 + $0x18] sm:$0xff]
    %v459 = vsel %vm241, %v441, 0
    %461 = vmatprep.subr.mxu0 0.0
    %462 = vmatpush1.msra.mxu0 %v455
    %463 = vmatprep.subr.mxu0 0.0
    %464 = vmatpush1.msra.mxu0 %v456
    %465 = vmatprep.subr.mxu0 0.0
    %466 = vmatpush1.msra.mxu0 %v457
    %467 = vmatprep.subr.mxu0 0.0
    %468 = vmatpush1.msra.mxu0 %v458
    %469 = vmatprep.subr.mxu0 0.0
    %470 = vmatpush1.msra.mxu0 0.0
    %471 = vmatprep.subr.mxu0 0.0
    %472 = vmatpush1.msra.mxu0 0.0
    %473 = vmatprep.subr.mxu0 0.0
    %474 = vmatpush1.msra.mxu0 0.0
    %475 = vmatprep.subr.mxu0 0.0
    %476 = vmatpush1.msra.mxu0 0.0
    %477 = vmatprep.subr.mxu0 0.0
    %478 = vmatpush1.msra.mxu0 0.0
    %479 = vmatprep.subr.mxu0 0.0
    %480 = vmatpush1.msra.mxu0 0.0
    %481 = vmatprep.subr.mxu0 0.0
    %482 = vmatpush1.msra.mxu0 0.0
    %483 = vmatprep.subr.mxu0 0.0
    %484 = vmatpush1.msra.mxu0 0.0
    %485 = vmatprep.subr.mxu0 0.0
    %486 = vmatpush1.msra.mxu0 0.0
    %487 = vmatprep.subr.mxu0 0.0
    %488 = vmatpush1.msra.mxu0 0.0
    %489 = vmatprep.subr.mxu0 0.0
    %490 = vmatpush1.msra.mxu0 0.0
    %491 = vmatprep.subr.mxu0 0.0
    %492 = vmatpush1.msra.mxu0 0.0
    %493 = vmatprep.subr.mxu0 0.0
    %494 = vmatpush1.msra.mxu0 0.0
    %495 = vmatprep.subr.mxu0 0.0
    %496 = vmatpush1.msra.mxu0 0.0
    %497 = vmatprep.subr.mxu0 0.0
    %498 = vmatpush1.msra.mxu0 0.0
    %499 = vmatprep.subr.mxu0 0.0
    %500 = vmatpush1.msra.mxu0 0.0
    %501 = vmatprep.subr.mxu0 0.0
    %502 = vmatpush1.msra.mxu0 0.0
    %503 = vmatprep.subr.mxu0 0.0
    %504 = vmatpush1.msra.mxu0 0.0
    %505 = vmatprep.subr.mxu0 0.0
    %506 = vmatpush1.msra.mxu0 0.0
    %507 = vmatprep.subr.mxu0 0.0
    %508 = vmatpush1.msra.mxu0 0.0
    %509 = vmatprep.subr.mxu0 0.0
    %510 = vmatpush1.msra.mxu0 0.0
    %511 = vmatprep.subr.mxu0 0.0
    %512 = vmatpush1.msra.mxu0 0.0
    %513 = vmatprep.subr.mxu0 0.0
    %514 = vmatpush1.msra.mxu0 0.0
    %515 = vmatprep.subr.mxu0 0.0
    %516 = vmatpush1.msra.mxu0 0.0
    %517 = vmatprep.subr.mxu0 0.0
    %518 = vmatpush1.msra.mxu0 0.0
    %519 = vmatprep.subr.mxu0 0.0
    %520 = vmatpush1.msra.mxu0 0.0
    %521 = vmatprep.subr.mxu0 0.0
    %522 = vmatpush1.msra.mxu0 0.0
    %523 = vmatprep.subr.mxu0 0.0
    %524 = vmatpush1.msra.mxu0 0.0
    %525 = vmatprep.mubr.f32.mxu0 0.0
    %526 = vmatmul.mubr.f32.gmra.mrb[0].mxu0 %v459
    %v527 = vpop.f32.mrb[0].mxu0
    %v528 = vadd.f32 0.0, %v527
    %v529 = vpop.f32.mrb[0].mxu0
    %530 = vdwg.mxu0
    %v531 = vadd.f32 %v454, %v528
    %v532 = vmul.f32 %v531, 0.5
    %v533 = vtanh.pop %v532
    %v534 = vmul.f32 %v533, 0.5
    %v535 = vadd.f32 %v534, 0.5
    %v536 = vtanh.pop %v531
    %v537 = vmul.f32 %v535, %v331
    %539 = vrot.lane.b32.xlu0 %v536, 64
    %v540 = vpop.permute.xlu0 %539
    %v542 = vmul.f32 %v535, %v540
    %544 = vrot.lane.b32.xlu0 %v542, 32
    %v545 = vpop.permute.xlu0 %544
    %v547 = vadd.f32 %v537, %v545
    %v548 = vtanh.pop %v547
    %550 = vrot.lane.b32.xlu0 %v548, 64
    %v551 = vpop.permute.xlu0 %550
    %v553 = vmul.f32 %v535, %v551
    %s554 = smul.u32 6, 2
    %s555 = smul.addr %s554, 8
    %s556 = scalar_lea.vmem [#allocation2], %s555
    %v557 = vld [vmem:[%s556 + $0x8] sm:$0xff]
    %v558 = vld [vmem:[#allocation7] sm:$0xff]
    %v559 = vld [vmem:[#allocation7 + $0x8] sm:$0xff]
    %v560 = vld [vmem:[#allocation7 + $0x10] sm:$0xff]
    %v561 = vld [vmem:[#allocation7 + $0x18] sm:$0xff]
    %562 = vrot.lane.b32.xlu0 %v438, 32
    %v563 = vpop.permute.xlu0 %562
    %v564 = vsel %vm241, %v563, 0
    %566 = vmatprep.subr.mxu0 0.0
    %567 = vmatpush1.msra.mxu0 %v558
    %568 = vmatprep.subr.mxu0 0.0
    %569 = vmatpush1.msra.mxu0 %v559
    %570 = vmatprep.subr.mxu0 0.0
    %571 = vmatpush1.msra.mxu0 %v560
    %572 = vmatprep.subr.mxu0 0.0
    %573 = vmatpush1.msra.mxu0 %v561
    %574 = vmatprep.subr.mxu0 0.0
    %575 = vmatpush1.msra.mxu0 0.0
    %576 = vmatprep.subr.mxu0 0.0
    %577 = vmatpush1.msra.mxu0 0.0
    %578 = vmatprep.subr.mxu0 0.0
    %579 = vmatpush1.msra.mxu0 0.0
    %580 = vmatprep.subr.mxu0 0.0
    %581 = vmatpush1.msra.mxu0 0.0
    %582 = vmatprep.subr.mxu0 0.0
    %583 = vmatpush1.msra.mxu0 0.0
    %584 = vmatprep.subr.mxu0 0.0
    %585 = vmatpush1.msra.mxu0 0.0
    %586 = vmatprep.subr.mxu0 0.0
    %587 = vmatpush1.msra.mxu0 0.0
    %588 = vmatprep.subr.mxu0 0.0
    %589 = vmatpush1.msra.mxu0 0.0
    %590 = vmatprep.subr.mxu0 0.0
    %591 = vmatpush1.msra.mxu0 0.0
    %592 = vmatprep.subr.mxu0 0.0
    %593 = vmatpush1.msra.mxu0 0.0
    %594 = vmatprep.subr.mxu0 0.0
    %595 = vmatpush1.msra.mxu0 0.0
    %596 = vmatprep.subr.mxu0 0.0
    %597 = vmatpush1.msra.mxu0 0.0
    %598 = vmatprep.subr.mxu0 0.0
    %599 = vmatpush1.msra.mxu0 0.0
    %600 = vmatprep.subr.mxu0 0.0
    %601 = vmatpush1.msra.mxu0 0.0
    %602 = vmatprep.subr.mxu0 0.0
    %603 = vmatpush1.msra.mxu0 0.0
    %604 = vmatprep.subr.mxu0 0.0
    %605 = vmatpush1.msra.mxu0 0.0
    %606 = vmatprep.subr.mxu0 0.0
    %607 = vmatpush1.msra.mxu0 0.0
    %608 = vmatprep.subr.mxu0 0.0
    %609 = vmatpush1.msra.mxu0 0.0
    %610 = vmatprep.subr.mxu0 0.0
    %611 = vmatpush1.msra.mxu0 0.0
    %612 = vmatprep.subr.mxu0 0.0
    %613 = vmatpush1.msra.mxu0 0.0
    %614 = vmatprep.subr.mxu0 0.0
    %615 = vmatpush1.msra.mxu0 0.0
    %616 = vmatprep.subr.mxu0 0.0
    %617 = vmatpush1.msra.mxu0 0.0
    %618 = vmatprep.subr.mxu0 0.0
    %619 = vmatpush1.msra.mxu0 0.0
    %620 = vmatprep.subr.mxu0 0.0
    %621 = vmatpush1.msra.mxu0 0.0
    %622 = vmatprep.subr.mxu0 0.0
    %623 = vmatpush1.msra.mxu0 0.0
    %624 = vmatprep.subr.mxu0 0.0
    %625 = vmatpush1.msra.mxu0 0.0
    %626 = vmatprep.subr.mxu0 0.0
    %627 = vmatpush1.msra.mxu0 0.0
    %628 = vmatprep.subr.mxu0 0.0
    %629 = vmatpush1.msra.mxu0 0.0
    %630 = vmatprep.mubr.f32.mxu0 0.0
    %631 = vmatmul.mubr.f32.gmra.mrb[0].mxu0 %v564
    %v632 = vpop.f32.mrb[0].mxu0
    %v633 = vadd.f32 0.0, %v632
    %v634 = vpop.f32.mrb[0].mxu0
    %635 = vdwg.mxu0
    %v636 = vadd.f32 %v557, %v633
    %v637 = vmul.f32 %v636, 0.5
    %v638 = vtanh.pop %v637
    %v639 = vmul.f32 %v638, 0.5
    %v640 = vadd.f32 %v639, 0.5
    %v641 = vtanh.pop %v636
    %v642 = vmul.f32 %v640, %v432
    %644 = vrot.lane.b32.xlu0 %v641, 64
    %v645 = vpop.permute.xlu0 %644
    %v647 = vmul.f32 %v640, %v645
    %649 = vrot.lane.b32.xlu0 %v647, 32
    %v650 = vpop.permute.xlu0 %649
    %v652 = vadd.f32 %v642, %v650
    %v653 = vtanh.pop %v652
    %655 = vrot.lane.b32.xlu0 %v653, 64
    %v656 = vpop.permute.xlu0 %655
    %v658 = vmul.f32 %v640, %v656
    %660 = vrot.lane.b32.xlu0 %v553, 32
    %v661 = vpop.permute.xlu0 %660
    %s663 = scalar_lea.vmem [#allocation3], 8
    %664 = vst.msk [vmem:[%s663] sm:$0xff] %vm241, %v661
    %666 = vrot.lane.b32.xlu0 %v658, 64
    %v667 = vpop.permute.xlu0 %666
    %s669 = scalar_lea.vmem [#allocation3], 48
    %670 = vst.msk [vmem:[%s669] sm:$0xff] %vm449, %v667
    %s671 = smul.u32 2, 2
    %s672 = smul.addr %s671, 8
    %s673 = scalar_lea.vmem [#allocation2], %s672
    %v674 = vld [vmem:[%s673] sm:$0xff]
    %v675 = vld [vmem:[#allocation4] sm:$0xff]
    %v676 = vld [vmem:[#allocation4 + $0x8] sm:$0xff]
    %v677 = vld [vmem:[#allocation4 + $0x10] sm:$0xff]
    %v678 = vld [vmem:[#allocation4 + $0x18] sm:$0xff]
    %v679 = vsel %vm241, %v661, 0
    %681 = vmatprep.subr.mxu0 0.0
    %682 = vmatpush1.msra.mxu0 %v675
    %683 = vmatprep.subr.mxu0 0.0
    %684 = vmatpush1.msra.mxu0 %v676
    %685 = vmatprep.subr.mxu0 0.0
    %686 = vmatpush1.msra.mxu0 %v677
    %687 = vmatprep.subr.mxu0 0.0
    %688 = vmatpush1.msra.mxu0 %v678
    %689 = vmatprep.subr.mxu0 0.0
    %690 = vmatpush1.msra.mxu0 0.0
    %691 = vmatprep.subr.mxu0 0.0
    %692 = vmatpush1.msra.mxu0 0.0
    %693 = vmatprep.subr.mxu0 0.0
    %694 = vmatpush1.msra.mxu0 0.0
    %695 = vmatprep.subr.mxu0 0.0
    %696 = vmatpush1.msra.mxu0 0.0
    %697 = vmatprep.subr.mxu0 0.0
    %698 = vmatpush1.msra.mxu0 0.0
    %699 = vmatprep.subr.mxu0 0.0
    %700 = vmatpush1.msra.mxu0 0.0
    %701 = vmatprep.subr.mxu0 0.0
    %702 = vmatpush1.msra.mxu0 0.0
    %703 = vmatprep.subr.mxu0 0.0
    %704 = vmatpush1.msra.mxu0 0.0
    %705 = vmatprep.subr.mxu0 0.0
    %706 = vmatpush1.msra.mxu0 0.0
    %707 = vmatprep.subr.mxu0 0.0
    %708 = vmatpush1.msra.mxu0 0.0
    %709 = vmatprep.subr.mxu0 0.0
    %710 = vmatpush1.msra.mxu0 0.0
    %711 = vmatprep.subr.mxu0 0.0
    %712 = vmatpush1.msra.mxu0 0.0
    %713 = vmatprep.subr.mxu0 0.0
    %714 = vmatpush1.msra.mxu0 0.0
    %715 = vmatprep.subr.mxu0 0.0
    %716 = vmatpush1.msra.mxu0 0.0
    %717 = vmatprep.subr.mxu0 0.0
    %718 = vmatpush1.msra.mxu0 0.0
    %719 = vmatprep.subr.mxu0 0.0
    %720 = vmatpush1.msra.mxu0 0.0
    %721 = vmatprep.subr.mxu0 0.0
    %722 = vmatpush1.msra.mxu0 0.0
    %723 = vmatprep.subr.mxu0 0.0
    %724 = vmatpush1.msra.mxu0 0.0
    %725 = vmatprep.subr.mxu0 0.0
    %726 = vmatpush1.msra.mxu0 0.0
    %727 = vmatprep.subr.mxu0 0.0
    %728 = vmatpush1.msra.mxu0 0.0
    %729 = vmatprep.subr.mxu0 0.0
    %730 = vmatpush1.msra.mxu0 0.0
    %731 = vmatprep.subr.mxu0 0.0
    %732 = vmatpush1.msra.mxu0 0.0
    %733 = vmatprep.subr.mxu0 0.0
    %734 = vmatpush1.msra.mxu0 0.0
    %735 = vmatprep.subr.mxu0 0.0
    %736 = vmatpush1.msra.mxu0 0.0
    %737 = vmatprep.subr.mxu0 0.0
    %738 = vmatpush1.msra.mxu0 0.0
    %739 = vmatprep.subr.mxu0 0.0
    %740 = vmatpush1.msra.mxu0 0.0
    %741 = vmatprep.subr.mxu0 0.0
    %742 = vmatpush1.msra.mxu0 0.0
    %743 = vmatprep.subr.mxu0 0.0
    %744 = vmatpush1.msra.mxu0 0.0
    %745 = vmatprep.mubr.f32.mxu0 0.0
    %746 = vmatmul.mubr.f32.gmra.mrb[0].mxu0 %v679
    %v747 = vpop.f32.mrb[0].mxu0
    %v748 = vadd.f32 0.0, %v747
    %v749 = vpop.f32.mrb[0].mxu0
    %750 = vdwg.mxu0
    %v751 = vadd.f32 %v674, %v748
    %v752 = vmul.f32 %v751, 0.5
    %v753 = vtanh.pop %v752
    %v754 = vmul.f32 %v753, 0.5
    %v755 = vadd.f32 %v754, 0.5
    %v756 = vtanh.pop %v751
    %v757 = vmul.f32 %v755, %v547
    %759 = vrot.lane.b32.xlu0 %v756, 64
    %v760 = vpop.permute.xlu0 %759
    %v762 = vmul.f32 %v755, %v760
    %764 = vrot.lane.b32.xlu0 %v762, 32
    %v765 = vpop.permute.xlu0 %764
    %v767 = vadd.f32 %v757, %v765
    %v768 = vtanh.pop %v767
    %770 = vrot.lane.b32.xlu0 %v768, 64
    %v771 = vpop.permute.xlu0 %770
    %v773 = vmul.f32 %v755, %v771
    %s774 = smul.u32 5, 2
    %s775 = smul.addr %s774, 8
    %s776 = scalar_lea.vmem [#allocation2], %s775
    %v777 = vld [vmem:[%s776 + $0x8] sm:$0xff]
    %v778 = vld [vmem:[#allocation7] sm:$0xff]
    %v779 = vld [vmem:[#allocation7 + $0x8] sm:$0xff]
    %v780 = vld [vmem:[#allocation7 + $0x10] sm:$0xff]
    %v781 = vld [vmem:[#allocation7 + $0x18] sm:$0xff]
    %782 = vrot.lane.b32.xlu0 %v658, 32
    %v783 = vpop.permute.xlu0 %782
    %v784 = vsel %vm241, %v783, 0
    %786 = vmatprep.subr.mxu0 0.0
    %787 = vmatpush1.msra.mxu0 %v778
    %788 = vmatprep.subr.mxu0 0.0
    %789 = vmatpush1.msra.mxu0 %v779
    %790 = vmatprep.subr.mxu0 0.0
    %791 = vmatpush1.msra.mxu0 %v780
    %792 = vmatprep.subr.mxu0 0.0
    %793 = vmatpush1.msra.mxu0 %v781
    %794 = vmatprep.subr.mxu0 0.0
    %795 = vmatpush1.msra.mxu0 0.0
    %796 = vmatprep.subr.mxu0 0.0
    %797 = vmatpush1.msra.mxu0 0.0
    %798 = vmatprep.subr.mxu0 0.0
    %799 = vmatpush1.msra.mxu0 0.0
    %800 = vmatprep.subr.mxu0 0.0
    %801 = vmatpush1.msra.mxu0 0.0
    %802 = vmatprep.subr.mxu0 0.0
    %803 = vmatpush1.msra.mxu0 0.0
    %804 = vmatprep.subr.mxu0 0.0
    %805 = vmatpush1.msra.mxu0 0.0
    %806 = vmatprep.subr.mxu0 0.0
    %807 = vmatpush1.msra.mxu0 0.0
    %808 = vmatprep.subr.mxu0 0.0
    %809 = vmatpush1.msra.mxu0 0.0
    %810 = vmatprep.subr.mxu0 0.0
    %811 = vmatpush1.msra.mxu0 0.0
    %812 = vmatprep.subr.mxu0 0.0
    %813 = vmatpush1.msra.mxu0 0.0
    %814 = vmatprep.subr.mxu0 0.0
    %815 = vmatpush1.msra.mxu0 0.0
    %816 = vmatprep.subr.mxu0 0.0
    %817 = vmatpush1.msra.mxu0 0.0
    %818 = vmatprep.subr.mxu0 0.0
    %819 = vmatpush1.msra.mxu0 0.0
    %820 = vmatprep.subr.mxu0 0.0
    %821 = vmatpush1.msra.mxu0 0.0
    %822 = vmatprep.subr.mxu0 0.0
    %823 = vmatpush1.msra.mxu0 0.0
    %824 = vmatprep.subr.mxu0 0.0
    %825 = vmatpush1.msra.mxu0 0.0
    %826 = vmatprep.subr.mxu0 0.0
    %827 = vmatpush1.msra.mxu0 0.0
    %828 = vmatprep.subr.mxu0 0.0
    %829 = vmatpush1.msra.mxu0 0.0
    %830 = vmatprep.subr.mxu0 0.0
    %831 = vmatpush1.msra.mxu0 0.0
    %832 = vmatprep.subr.mxu0 0.0
    %833 = vmatpush1.msra.mxu0 0.0
    %834 = vmatprep.subr.mxu0 0.0
    %835 = vmatpush1.msra.mxu0 0.0
    %836 = vmatprep.subr.mxu0 0.0
    %837 = vmatpush1.msra.mxu0 0.0
    %838 = vmatprep.subr.mxu0 0.0
    %839 = vmatpush1.msra.mxu0 0.0
    %840 = vmatprep.subr.mxu0 0.0
    %841 = vmatpush1.msra.mxu0 0.0
    %842 = vmatprep.subr.mxu0 0.0
    %843 = vmatpush1.msra.mxu0 0.0
    %844 = vmatprep.subr.mxu0 0.0
    %845 = vmatpush1.msra.mxu0 0.0
    %846 = vmatprep.subr.mxu0 0.0
    %847 = vmatpush1.msra.mxu0 0.0
    %848 = vmatprep.subr.mxu0 0.0
    %849 = vmatpush1.msra.mxu0 0.0
    %850 = vmatprep.mubr.f32.mxu0 0.0
    %851 = vmatmul.mubr.f32.gmra.mrb[0].mxu0 %v784
    %v852 = vpop.f32.mrb[0].mxu0
    %v853 = vadd.f32 0.0, %v852
    %v854 = vpop.f32.mrb[0].mxu0
    %855 = vdwg.mxu0
    %v856 = vadd.f32 %v777, %v853
    %v857 = vmul.f32 %v856, 0.5
    %v858 = vtanh.pop %v857
    %v859 = vmul.f32 %v858, 0.5
    %v860 = vadd.f32 %v859, 0.5
    %v861 = vtanh.pop %v856
    %v862 = vmul.f32 %v860, %v652
    %864 = vrot.lane.b32.xlu0 %v861, 64
    %v865 = vpop.permute.xlu0 %864
    %v867 = vmul.f32 %v860, %v865
    %869 = vrot.lane.b32.xlu0 %v867, 32
    %v870 = vpop.permute.xlu0 %869
    %v872 = vadd.f32 %v862, %v870
    %v873 = vtanh.pop %v872
    %875 = vrot.lane.b32.xlu0 %v873, 64
    %v876 = vpop.permute.xlu0 %875
    %v878 = vmul.f32 %v860, %v876
    %880 = vrot.lane.b32.xlu0 %v773, 32
    %v881 = vpop.permute.xlu0 %880
    %s883 = scalar_lea.vmem [#allocation3], 16
    %884 = vst.msk [vmem:[%s883] sm:$0xff] %vm241, %v881
    %886 = vrot.lane.b32.xlu0 %v878, 64
    %v887 = vpop.permute.xlu0 %886
    %s889 = scalar_lea.vmem [#allocation3], 40
    %890 = vst.msk [vmem:[%s889] sm:$0xff] %vm449, %v887
    %s891 = smul.u32 3, 2
    %s892 = smul.addr %s891, 8
    %s893 = scalar_lea.vmem [#allocation2], %s892
    %v894 = vld [vmem:[%s893] sm:$0xff]
    %v895 = vld [vmem:[#allocation4] sm:$0xff]
    %v896 = vld [vmem:[#allocation4 + $0x8] sm:$0xff]
    %v897 = vld [vmem:[#allocation4 + $0x10] sm:$0xff]
    %v898 = vld [vmem:[#allocation4 + $0x18] sm:$0xff]
    %v899 = vsel %vm241, %v881, 0
    %901 = vmatprep.subr.mxu0 0.0
    %902 = vmatpush1.msra.mxu0 %v895
    %903 = vmatprep.subr.mxu0 0.0
    %904 = vmatpush1.msra.mxu0 %v896
    %905 = vmatprep.subr.mxu0 0.0
    %906 = vmatpush1.msra.mxu0 %v897
    %907 = vmatprep.subr.mxu0 0.0
    %908 = vmatpush1.msra.mxu0 %v898
    %909 = vmatprep.subr.mxu0 0.0
    %910 = vmatpush1.msra.mxu0 0.0
    %911 = vmatprep.subr.mxu0 0.0
    %912 = vmatpush1.msra.mxu0 0.0
    %913 = vmatprep.subr.mxu0 0.0
    %914 = vmatpush1.msra.mxu0 0.0
    %915 = vmatprep.subr.mxu0 0.0
    %916 = vmatpush1.msra.mxu0 0.0
    %917 = vmatprep.subr.mxu0 0.0
    %918 = vmatpush1.msra.mxu0 0.0
    %919 = vmatprep.subr.mxu0 0.0
    %920 = vmatpush1.msra.mxu0 0.0
    %921 = vmatprep.subr.mxu0 0.0
    %922 = vmatpush1.msra.mxu0 0.0
    %923 = vmatprep.subr.mxu0 0.0
    %924 = vmatpush1.msra.mxu0 0.0
    %925 = vmatprep.subr.mxu0 0.0
    %926 = vmatpush1.msra.mxu0 0.0
    %927 = vmatprep.subr.mxu0 0.0
    %928 = vmatpush1.msra.mxu0 0.0
    %929 = vmatprep.subr.mxu0 0.0
    %930 = vmatpush1.msra.mxu0 0.0
    %931 = vmatprep.subr.mxu0 0.0
    %932 = vmatpush1.msra.mxu0 0.0
    %933 = vmatprep.subr.mxu0 0.0
    %934 = vmatpush1.msra.mxu0 0.0
    %935 = vmatprep.subr.mxu0 0.0
    %936 = vmatpush1.msra.mxu0 0.0
    %937 = vmatprep.subr.mxu0 0.0
    %938 = vmatpush1.msra.mxu0 0.0
    %939 = vmatprep.subr.mxu0 0.0
    %940 = vmatpush1.msra.mxu0 0.0
    %941 = vmatprep.subr.mxu0 0.0
    %942 = vmatpush1.msra.mxu0 0.0
    %943 = vmatprep.subr.mxu0 0.0
    %944 = vmatpush1.msra.mxu0 0.0
    %945 = vmatprep.subr.mxu0 0.0
    %946 = vmatpush1.msra.mxu0 0.0
    %947 = vmatprep.subr.mxu0 0.0
    %948 = vmatpush1.msra.mxu0 0.0
    %949 = vmatprep.subr.mxu0 0.0
    %950 = vmatpush1.msra.mxu0 0.0
    %951 = vmatprep.subr.mxu0 0.0
    %952 = vmatpush1.msra.mxu0 0.0
    %953 = vmatprep.subr.mxu0 0.0
    %954 = vmatpush1.msra.mxu0 0.0
    %955 = vmatprep.subr.mxu0 0.0
    %956 = vmatpush1.msra.mxu0 0.0
    %957 = vmatprep.subr.mxu0 0.0
    %958 = vmatpush1.msra.mxu0 0.0
    %959 = vmatprep.subr.mxu0 0.0
    %960 = vmatpush1.msra.mxu0 0.0
    %961 = vmatprep.subr.mxu0 0.0
    %962 = vmatpush1.msra.mxu0 0.0
    %963 = vmatprep.subr.mxu0 0.0
    %964 = vmatpush1.msra.mxu0 0.0
    %965 = vmatprep.mubr.f32.mxu0 0.0
    %966 = vmatmul.mubr.f32.gmra.mrb[0].mxu0 %v899
    %v967 = vpop.f32.mrb[0].mxu0
    %v968 = vadd.f32 0.0, %v967
    %v969 = vpop.f32.mrb[0].mxu0
    %970 = vdwg.mxu0
    %v971 = vadd.f32 %v894, %v968
    %v972 = vmul.f32 %v971, 0.5
    %v973 = vtanh.pop %v972
    %v974 = vmul.f32 %v973, 0.5
    %v975 = vadd.f32 %v974, 0.5
    %v976 = vtanh.pop %v971
    %v977 = vmul.f32 %v975, %v767
    %979 = vrot.lane.b32.xlu0 %v976, 64
    %v980 = vpop.permute.xlu0 %979
    %v982 = vmul.f32 %v975, %v980
    %984 = vrot.lane.b32.xlu0 %v982, 32
    %v985 = vpop.permute.xlu0 %984
    %v987 = vadd.f32 %v977, %v985
    %v988 = vtanh.pop %v987
    %990 = vrot.lane.b32.xlu0 %v988, 64
    %v991 = vpop.permute.xlu0 %990
    %v993 = vmul.f32 %v975, %v991
    %s994 = smul.u32 4, 2
    %s995 = smul.addr %s994, 8
    %s996 = scalar_lea.vmem [#allocation2], %s995
    %v997 = vld [vmem:[%s996 + $0x8] sm:$0xff]
    %v998 = vld [vmem:[#allocation7] sm:$0xff]
    %v999 = vld [vmem:[#allocation7 + $0x8] sm:$0xff]
    %v1000 = vld [vmem:[#allocation7 + $0x10] sm:$0xff]
    %v1001 = vld [vmem:[#allocation7 + $0x18] sm:$0xff]
    %1002 = vrot.lane.b32.xlu0 %v878, 32
    %v1003 = vpop.permute.xlu0 %1002
    %v1004 = vsel %vm241, %v1003, 0
    %1006 = vmatprep.subr.mxu0 0.0
    %1007 = vmatpush1.msra.mxu0 %v998
    %1008 = vmatprep.subr.mxu0 0.0
    %1009 = vmatpush1.msra.mxu0 %v999
    %1010 = vmatprep.subr.mxu0 0.0
    %1011 = vmatpush1.msra.mxu0 %v1000
    %1012 = vmatprep.subr.mxu0 0.0
    %1013 = vmatpush1.msra.mxu0 %v1001
    %1014 = vmatprep.subr.mxu0 0.0
    %1015 = vmatpush1.msra.mxu0 0.0
    %1016 = vmatprep.subr.mxu0 0.0
    %1017 = vmatpush1.msra.mxu0 0.0
    %1018 = vmatprep.subr.mxu0 0.0
    %1019 = vmatpush1.msra.mxu0 0.0
    %1020 = vmatprep.subr.mxu0 0.0
    %1021 = vmatpush1.msra.mxu0 0.0
    %1022 = vmatprep.subr.mxu0 0.0
    %1023 = vmatpush1.msra.mxu0 0.0
    %1024 = vmatprep.subr.mxu0 0.0
    %1025 = vmatpush1.msra.mxu0 0.0
    %1026 = vmatprep.subr.mxu0 0.0
    %1027 = vmatpush1.msra.mxu0 0.0
    %1028 = vmatprep.subr.mxu0 0.0
    %1029 = vmatpush1.msra.mxu0 0.0
    %1030 = vmatprep.subr.mxu0 0.0
    %1031 = vmatpush1.msra.mxu0 0.0
    %1032 = vmatprep.subr.mxu0 0.0
    %1033 = vmatpush1.msra.mxu0 0.0
    %1034 = vmatprep.subr.mxu0 0.0
    %1035 = vmatpush1.msra.mxu0 0.0
    %1036 = vmatprep.subr.mxu0 0.0
    %1037 = vmatpush1.msra.mxu0 0.0
    %1038 = vmatprep.subr.mxu0 0.0
    %1039 = vmatpush1.msra.mxu0 0.0
    %1040 = vmatprep.subr.mxu0 0.0
    %1041 = vmatpush1.msra.mxu0 0.0
    %1042 = vmatprep.subr.mxu0 0.0
    %1043 = vmatpush1.msra.mxu0 0.0
    %1044 = vmatprep.subr.mxu0 0.0
    %1045 = vmatpush1.msra.mxu0 0.0
    %1046 = vmatprep.subr.mxu0 0.0
    %1047 = vmatpush1.msra.mxu0 0.0
    %1048 = vmatprep.subr.mxu0 0.0
    %1049 = vmatpush1.msra.mxu0 0.0
    %1050 = vmatprep.subr.mxu0 0.0
    %1051 = vmatpush1.msra.mxu0 0.0
    %1052 = vmatprep.subr.mxu0 0.0
    %1053 = vmatpush1.msra.mxu0 0.0
    %1054 = vmatprep.subr.mxu0 0.0
    %1055 = vmatpush1.msra.mxu0 0.0
    %1056 = vmatprep.subr.mxu0 0.0
    %1057 = vmatpush1.msra.mxu0 0.0
    %1058 = vmatprep.subr.mxu0 0.0
    %1059 = vmatpush1.msra.mxu0 0.0
    %1060 = vmatprep.subr.mxu0 0.0
    %1061 = vmatpush1.msra.mxu0 0.0
    %1062 = vmatprep.subr.mxu0 0.0
    %1063 = vmatpush1.msra.mxu0 0.0
    %1064 = vmatprep.subr.mxu0 0.0
    %1065 = vmatpush1.msra.mxu0 0.0
    %1066 = vmatprep.subr.mxu0 0.0
    %1067 = vmatpush1.msra.mxu0 0.0
    %1068 = vmatprep.subr.mxu0 0.0
    %1069 = vmatpush1.msra.mxu0 0.0
    %1070 = vmatprep.mubr.f32.mxu0 0.0
    %1071 = vmatmul.mubr.f32.gmra.mrb[0].mxu0 %v1004
    %v1072 = vpop.f32.mrb[0].mxu0
    %v1073 = vadd.f32 0.0, %v1072
    %v1074 = vpop.f32.mrb[0].mxu0
    %1075 = vdwg.mxu0
    %v1076 = vadd.f32 %v997, %v1073
    %v1077 = vmul.f32 %v1076, 0.5
    %v1078 = vtanh.pop %v1077
    %v1079 = vmul.f32 %v1078, 0.5
    %v1080 = vadd.f32 %v1079, 0.5
    %v1081 = vtanh.pop %v1076
    %v1082 = vmul.f32 %v1080, %v872
    %1084 = vrot.lane.b32.xlu0 %v1081, 64
    %v1085 = vpop.permute.xlu0 %1084
    %v1087 = vmul.f32 %v1080, %v1085
    %1089 = vrot.lane.b32.xlu0 %v1087, 32
    %v1090 = vpop.permute.xlu0 %1089
    %v1092 = vadd.f32 %v1082, %v1090
    %v1093 = vtanh.pop %v1092
    %1095 = vrot.lane.b32.xlu0 %v1093, 64
    %v1096 = vpop.permute.xlu0 %1095
    %v1098 = vmul.f32 %v1080, %v1096
    %1100 = vrot.lane.b32.xlu0 %v993, 32
    %v1101 = vpop.permute.xlu0 %1100
    %s1103 = scalar_lea.vmem [#allocation3], 24
    %1104 = vst.msk [vmem:[%s1103] sm:$0xff] %vm241, %v1101
    %1106 = vrot.lane.b32.xlu0 %v1098, 64
    %v1107 = vpop.permute.xlu0 %1106
    %s1109 = scalar_lea.vmem [#allocation3], 32
    %1110 = vst.msk [vmem:[%s1109] sm:$0xff] %vm449, %v1107
    %v1111 = vld [vmem:[%s996] sm:$0xff]
    %v1112 = vld [vmem:[#allocation4] sm:$0xff]
    %v1113 = vld [vmem:[#allocation4 + $0x8] sm:$0xff]
    %v1114 = vld [vmem:[#allocation4 + $0x10] sm:$0xff]
    %v1115 = vld [vmem:[#allocation4 + $0x18] sm:$0xff]
    %v1116 = vsel %vm241, %v1101, 0
    %1118 = vmatprep.subr.mxu0 0.0
    %1119 = vmatpush1.msra.mxu0 %v1112
    %1120 = vmatprep.subr.mxu0 0.0
    %1121 = vmatpush1.msra.mxu0 %v1113
    %1122 = vmatprep.subr.mxu0 0.0
    %1123 = vmatpush1.msra.mxu0 %v1114
    %1124 = vmatprep.subr.mxu0 0.0
    %1125 = vmatpush1.msra.mxu0 %v1115
    %1126 = vmatprep.subr.mxu0 0.0
    %1127 = vmatpush1.msra.mxu0 0.0
    %1128 = vmatprep.subr.mxu0 0.0
    %1129 = vmatpush1.msra.mxu0 0.0
    %1130 = vmatprep.subr.mxu0 0.0
    %1131 = vmatpush1.msra.mxu0 0.0
    %1132 = vmatprep.subr.mxu0 0.0
    %1133 = vmatpush1.msra.mxu0 0.0
    %1134 = vmatprep.subr.mxu0 0.0
    %1135 = vmatpush1.msra.mxu0 0.0
    %1136 = vmatprep.subr.mxu0 0.0
    %1137 = vmatpush1.msra.mxu0 0.0
    %1138 = vmatprep.subr.mxu0 0.0
    %1139 = vmatpush1.msra.mxu0 0.0
    %1140 = vmatprep.subr.mxu0 0.0
    %1141 = vmatpush1.msra.mxu0 0.0
    %1142 = vmatprep.subr.mxu0 0.0
    %1143 = vmatpush1.msra.mxu0 0.0
    %1144 = vmatprep.subr.mxu0 0.0
    %1145 = vmatpush1.msra.mxu0 0.0
    %1146 = vmatprep.subr.mxu0 0.0
    %1147 = vmatpush1.msra.mxu0 0.0
    %1148 = vmatprep.subr.mxu0 0.0
    %1149 = vmatpush1.msra.mxu0 0.0
    %1150 = vmatprep.subr.mxu0 0.0
    %1151 = vmatpush1.msra.mxu0 0.0
    %1152 = vmatprep.subr.mxu0 0.0
    %1153 = vmatpush1.msra.mxu0 0.0
    %1154 = vmatprep.subr.mxu0 0.0
    %1155 = vmatpush1.msra.mxu0 0.0
    %1156 = vmatprep.subr.mxu0 0.0
    %1157 = vmatpush1.msra.mxu0 0.0
    %1158 = vmatprep.subr.mxu0 0.0
    %1159 = vmatpush1.msra.mxu0 0.0
    %1160 = vmatprep.subr.mxu0 0.0
    %1161 = vmatpush1.msra.mxu0 0.0
    %1162 = vmatprep.subr.mxu0 0.0
    %1163 = vmatpush1.msra.mxu0 0.0
    %1164 = vmatprep.subr.mxu0 0.0
    %1165 = vmatpush1.msra.mxu0 0.0
    %1166 = vmatprep.subr.mxu0 0.0
    %1167 = vmatpush1.msra.mxu0 0.0
    %1168 = vmatprep.subr.mxu0 0.0
    %1169 = vmatpush1.msra.mxu0 0.0
    %1170 = vmatprep.subr.mxu0 0.0
    %1171 = vmatpush1.msra.mxu0 0.0
    %1172 = vmatprep.subr.mxu0 0.0
    %1173 = vmatpush1.msra.mxu0 0.0
    %1174 = vmatprep.subr.mxu0 0.0
    %1175 = vmatpush1.msra.mxu0 0.0
    %1176 = vmatprep.subr.mxu0 0.0
    %1177 = vmatpush1.msra.mxu0 0.0
    %1178 = vmatprep.subr.mxu0 0.0
    %1179 = vmatpush1.msra.mxu0 0.0
    %1180 = vmatprep.subr.mxu0 0.0
    %1181 = vmatpush1.msra.mxu0 0.0
    %1182 = vmatprep.mubr.f32.mxu0 0.0
    %1183 = vmatmul.mubr.f32.gmra.mrb[0].mxu0 %v1116
    %v1184 = vpop.f32.mrb[0].mxu0
    %v1185 = vadd.f32 0.0, %v1184
    %v1186 = vpop.f32.mrb[0].mxu0
    %1187 = vdwg.mxu0
    %v1188 = vadd.f32 %v1111, %v1185
    %v1189 = vmul.f32 %v1188, 0.5
    %v1190 = vtanh.pop %v1189
    %v1191 = vmul.f32 %v1190, 0.5
    %v1192 = vadd.f32 %v1191, 0.5
    %v1193 = vtanh.pop %v1188
    %v1194 = vmul.f32 %v1192, %v987
    %1196 = vrot.lane.b32.xlu0 %v1193, 64
    %v1197 = vpop.permute.xlu0 %1196
    %v1199 = vmul.f32 %v1192, %v1197
    %1201 = vrot.lane.b32.xlu0 %v1199, 32
    %v1202 = vpop.permute.xlu0 %1201
    %v1204 = vadd.f32 %v1194, %v1202
    %v1205 = vtanh.pop %v1204
    %1207 = vrot.lane.b32.xlu0 %v1205, 64
    %v1208 = vpop.permute.xlu0 %1207
    %v1210 = vmul.f32 %v1192, %v1208
    %v1211 = vld [vmem:[%s893 + $0x8] sm:$0xff]
    %v1212 = vld [vmem:[#allocation7] sm:$0xff]
    %v1213 = vld [vmem:[#allocation7 + $0x8] sm:$0xff]
    %v1214 = vld [vmem:[#allocation7 + $0x10] sm:$0xff]
    %v1215 = vld [vmem:[#allocation7 + $0x18] sm:$0xff]
    %1216 = vrot.lane.b32.xlu0 %v1098, 32
    %v1217 = vpop.permute.xlu0 %1216
    %v1218 = vsel %vm241, %v1217, 0
    %1220 = vmatprep.subr.mxu0 0.0
    %1221 = vmatpush1.msra.mxu0 %v1212
    %1222 = vmatprep.subr.mxu0 0.0
    %1223 = vmatpush1.msra.mxu0 %v1213
    %1224 = vmatprep.subr.mxu0 0.0
    %1225 = vmatpush1.msra.mxu0 %v1214
    %1226 = vmatprep.subr.mxu0 0.0
    %1227 = vmatpush1.msra.mxu0 %v1215
    %1228 = vmatprep.subr.mxu0 0.0
    %1229 = vmatpush1.msra.mxu0 0.0
    %1230 = vmatprep.subr.mxu0 0.0
    %1231 = vmatpush1.msra.mxu0 0.0
    %1232 = vmatprep.subr.mxu0 0.0
    %1233 = vmatpush1.msra.mxu0 0.0
    %1234 = vmatprep.subr.mxu0 0.0
    %1235 = vmatpush1.msra.mxu0 0.0
    %1236 = vmatprep.subr.mxu0 0.0
    %1237 = vmatpush1.msra.mxu0 0.0
    %1238 = vmatprep.subr.mxu0 0.0
    %1239 = vmatpush1.msra.mxu0 0.0
    %1240 = vmatprep.subr.mxu0 0.0
    %1241 = vmatpush1.msra.mxu0 0.0
    %1242 = vmatprep.subr.mxu0 0.0
    %1243 = vmatpush1.msra.mxu0 0.0
    %1244 = vmatprep.subr.mxu0 0.0
    %1245 = vmatpush1.msra.mxu0 0.0
    %1246 = vmatprep.subr.mxu0 0.0
    %1247 = vmatpush1.msra.mxu0 0.0
    %1248 = vmatprep.subr.mxu0 0.0
    %1249 = vmatpush1.msra.mxu0 0.0
    %1250 = vmatprep.subr.mxu0 0.0
    %1251 = vmatpush1.msra.mxu0 0.0
    %1252 = vmatprep.subr.mxu0 0.0
    %1253 = vmatpush1.msra.mxu0 0.0
    %1254 = vmatprep.subr.mxu0 0.0
    %1255 = vmatpush1.msra.mxu0 0.0
    %1256 = vmatprep.subr.mxu0 0.0
    %1257 = vmatpush1.msra.mxu0 0.0
    %1258 = vmatprep.subr.mxu0 0.0
    %1259 = vmatpush1.msra.mxu0 0.0
    %1260 = vmatprep.subr.mxu0 0.0
    %1261 = vmatpush1.msra.mxu0 0.0
    %1262 = vmatprep.subr.mxu0 0.0
    %1263 = vmatpush1.msra.mxu0 0.0
    %1264 = vmatprep.subr.mxu0 0.0
    %1265 = vmatpush1.msra.mxu0 0.0
    %1266 = vmatprep.subr.mxu0 0.0
    %1267 = vmatpush1.msra.mxu0 0.0
    %1268 = vmatprep.subr.mxu0 0.0
    %1269 = vmatpush1.msra.mxu0 0.0
    %1270 = vmatprep.subr.mxu0 0.0
    %1271 = vmatpush1.msra.mxu0 0.0
    %1272 = vmatprep.subr.mxu0 0.0
    %1273 = vmatpush1.msra.mxu0 0.0
    %1274 = vmatprep.subr.mxu0 0.0
    %1275 = vmatpush1.msra.mxu0 0.0
    %1276 = vmatprep.subr.mxu0 0.0
    %1277 = vmatpush1.msra.mxu0 0.0
    %1278 = vmatprep.subr.mxu0 0.0
    %1279 = vmatpush1.msra.mxu0 0.0
    %1280 = vmatprep.subr.mxu0 0.0
    %1281 = vmatpush1.msra.mxu0 0.0
    %1282 = vmatprep.subr.mxu0 0.0
    %1283 = vmatpush1.msra.mxu0 0.0
    %1284 = vmatprep.mubr.f32.mxu0 0.0
    %1285 = vmatmul.mubr.f32.gmra.mrb[0].mxu0 %v1218
    %v1286 = vpop.f32.mrb[0].mxu0
    %v1287 = vadd.f32 0.0, %v1286
    %v1288 = vpop.f32.mrb[0].mxu0
    %1289 = vdwg.mxu0
    %v1290 = vadd.f32 %v1211, %v1287
    %v1291 = vmul.f32 %v1290, 0.5
    %v1292 = vtanh.pop %v1291
    %v1293 = vmul.f32 %v1292, 0.5
    %v1294 = vadd.f32 %v1293, 0.5
    %v1295 = vtanh.pop %v1290
    %v1296 = vmul.f32 %v1294, %v1092
    %1298 = vrot.lane.b32.xlu0 %v1295, 64
    %v1299 = vpop.permute.xlu0 %1298
    %v1301 = vmul.f32 %v1294, %v1299
    %1303 = vrot.lane.b32.xlu0 %v1301, 32
    %v1304 = vpop.permute.xlu0 %1303
    %v1306 = vadd.f32 %v1296, %v1304
    %v1307 = vtanh.pop %v1306
    %1309 = vrot.lane.b32.xlu0 %v1307, 64
    %v1310 = vpop.permute.xlu0 %1309
    %v1312 = vmul.f32 %v1294, %v1310
    %1314 = vrot.lane.b32.xlu0 %v1210, 32
    %v1315 = vpop.permute.xlu0 %1314
    %1317 = vst.msk [vmem:[%s1109] sm:$0xff] %vm241, %v1315
    %1319 = vrot.lane.b32.xlu0 %v1312, 64
    %v1320 = vpop.permute.xlu0 %1319
    %1322 = vst.msk [vmem:[%s1103] sm:$0xff] %vm449, %v1320
    %v1323 = vld [vmem:[%s776] sm:$0xff]
    %v1324 = vld [vmem:[#allocation4] sm:$0xff]
    %v1325 = vld [vmem:[#allocation4 + $0x8] sm:$0xff]
    %v1326 = vld [vmem:[#allocation4 + $0x10] sm:$0xff]
    %v1327 = vld [vmem:[#allocation4 + $0x18] sm:$0xff]
    %v1328 = vsel %vm241, %v1315, 0
    %1330 = vmatprep.subr.mxu0 0.0
    %1331 = vmatpush1.msra.mxu0 %v1324
    %1332 = vmatprep.subr.mxu0 0.0
    %1333 = vmatpush1.msra.mxu0 %v1325
    %1334 = vmatprep.subr.mxu0 0.0
    %1335 = vmatpush1.msra.mxu0 %v1326
    %1336 = vmatprep.subr.mxu0 0.0
    %1337 = vmatpush1.msra.mxu0 %v1327
    %1338 = vmatprep.subr.mxu0 0.0
    %1339 = vmatpush1.msra.mxu0 0.0
    %1340 = vmatprep.subr.mxu0 0.0
    %1341 = vmatpush1.msra.mxu0 0.0
    %1342 = vmatprep.subr.mxu0 0.0
    %1343 = vmatpush1.msra.mxu0 0.0
    %1344 = vmatprep.subr.mxu0 0.0
    %1345 = vmatpush1.msra.mxu0 0.0
    %1346 = vmatprep.subr.mxu0 0.0
    %1347 = vmatpush1.msra.mxu0 0.0
    %1348 = vmatprep.subr.mxu0 0.0
    %1349 = vmatpush1.msra.mxu0 0.0
    %1350 = vmatprep.subr.mxu0 0.0
    %1351 = vmatpush1.msra.mxu0 0.0
    %1352 = vmatprep.subr.mxu0 0.0
    %1353 = vmatpush1.msra.mxu0 0.0
    %1354 = vmatprep.subr.mxu0 0.0
    %1355 = vmatpush1.msra.mxu0 0.0
    %1356 = vmatprep.subr.mxu0 0.0
    %1357 = vmatpush1.msra.mxu0 0.0
    %1358 = vmatprep.subr.mxu0 0.0
    %1359 = vmatpush1.msra.mxu0 0.0
    %1360 = vmatprep.subr.mxu0 0.0
    %1361 = vmatpush1.msra.mxu0 0.0
    %1362 = vmatprep.subr.mxu0 0.0
    %1363 = vmatpush1.msra.mxu0 0.0
    %1364 = vmatprep.subr.mxu0 0.0
    %1365 = vmatpush1.msra.mxu0 0.0
    %1366 = vmatprep.subr.mxu0 0.0
    %1367 = vmatpush1.msra.mxu0 0.0
    %1368 = vmatprep.subr.mxu0 0.0
    %1369 = vmatpush1.msra.mxu0 0.0
    %1370 = vmatprep.subr.mxu0 0.0
    %1371 = vmatpush1.msra.mxu0 0.0
    %1372 = vmatprep.subr.mxu0 0.0
    %1373 = vmatpush1.msra.mxu0 0.0
    %1374 = vmatprep.subr.mxu0 0.0
    %1375 = vmatpush1.msra.mxu0 0.0
    %1376 = vmatprep.subr.mxu0 0.0
    %1377 = vmatpush1.msra.mxu0 0.0
    %1378 = vmatprep.subr.mxu0 0.0
    %1379 = vmatpush1.msra.mxu0 0.0
    %1380 = vmatprep.subr.mxu0 0.0
    %1381 = vmatpush1.msra.mxu0 0.0
    %1382 = vmatprep.subr.mxu0 0.0
    %1383 = vmatpush1.msra.mxu0 0.0
    %1384 = vmatprep.subr.mxu0 0.0
    %1385 = vmatpush1.msra.mxu0 0.0
    %1386 = vmatprep.subr.mxu0 0.0
    %1387 = vmatpush1.msra.mxu0 0.0
    %1388 = vmatprep.subr.mxu0 0.0
    %1389 = vmatpush1.msra.mxu0 0.0
    %1390 = vmatprep.subr.mxu0 0.0
    %1391 = vmatpush1.msra.mxu0 0.0
    %1392 = vmatprep.subr.mxu0 0.0
    %1393 = vmatpush1.msra.mxu0 0.0
    %1394 = vmatprep.mubr.f32.mxu0 0.0
    %1395 = vmatmul.mubr.f32.gmra.mrb[0].mxu0 %v1328
    %v1396 = vpop.f32.mrb[0].mxu0
    %v1397 = vadd.f32 0.0, %v1396
    %v1398 = vpop.f32.mrb[0].mxu0
    %1399 = vdwg.mxu0
    %v1400 = vadd.f32 %v1323, %v1397
    %v1401 = vmul.f32 %v1400, 0.5
    %v1402 = vtanh.pop %v1401
    %v1403 = vmul.f32 %v1402, 0.5
    %v1404 = vadd.f32 %v1403, 0.5
    %v1405 = vtanh.pop %v1400
    %v1406 = vmul.f32 %v1404, %v1204
    %1408 = vrot.lane.b32.xlu0 %v1405, 64
    %v1409 = vpop.permute.xlu0 %1408
    %v1411 = vmul.f32 %v1404, %v1409
    %1413 = vrot.lane.b32.xlu0 %v1411, 32
    %v1414 = vpop.permute.xlu0 %1413
    %v1416 = vadd.f32 %v1406, %v1414
    %v1417 = vtanh.pop %v1416
    %1419 = vrot.lane.b32.xlu0 %v1417, 64
    %v1420 = vpop.permute.xlu0 %1419
    %v1422 = vmul.f32 %v1404, %v1420
    %v1423 = vld [vmem:[%s673 + $0x8] sm:$0xff]
    %v1424 = vld [vmem:[#allocation7] sm:$0xff]
    %v1425 = vld [vmem:[#allocation7 + $0x8] sm:$0xff]
    %v1426 = vld [vmem:[#allocation7 + $0x10] sm:$0xff]
    %v1427 = vld [vmem:[#allocation7 + $0x18] sm:$0xff]
    %1428 = vrot.lane.b32.xlu0 %v1312, 32
    %v1429 = vpop.permute.xlu0 %1428
    %v1430 = vsel %vm241, %v1429, 0
    %1432 = vmatprep.subr.mxu0 0.0
    %1433 = vmatpush1.msra.mxu0 %v1424
    %1434 = vmatprep.subr.mxu0 0.0
    %1435 = vmatpush1.msra.mxu0 %v1425
    %1436 = vmatprep.subr.mxu0 0.0
    %1437 = vmatpush1.msra.mxu0 %v1426
    %1438 = vmatprep.subr.mxu0 0.0
    %1439 = vmatpush1.msra.mxu0 %v1427
    %1440 = vmatprep.subr.mxu0 0.0
    %1441 = vmatpush1.msra.mxu0 0.0
    %1442 = vmatprep.subr.mxu0 0.0
    %1443 = vmatpush1.msra.mxu0 0.0
    %1444 = vmatprep.subr.mxu0 0.0
    %1445 = vmatpush1.msra.mxu0 0.0
    %1446 = vmatprep.subr.mxu0 0.0
    %1447 = vmatpush1.msra.mxu0 0.0
    %1448 = vmatprep.subr.mxu0 0.0
    %1449 = vmatpush1.msra.mxu0 0.0
    %1450 = vmatprep.subr.mxu0 0.0
    %1451 = vmatpush1.msra.mxu0 0.0
    %1452 = vmatprep.subr.mxu0 0.0
    %1453 = vmatpush1.msra.mxu0 0.0
    %1454 = vmatprep.subr.mxu0 0.0
    %1455 = vmatpush1.msra.mxu0 0.0
    %1456 = vmatprep.subr.mxu0 0.0
    %1457 = vmatpush1.msra.mxu0 0.0
    %1458 = vmatprep.subr.mxu0 0.0
    %1459 = vmatpush1.msra.mxu0 0.0
    %1460 = vmatprep.subr.mxu0 0.0
    %1461 = vmatpush1.msra.mxu0 0.0
    %1462 = vmatprep.subr.mxu0 0.0
    %1463 = vmatpush1.msra.mxu0 0.0
    %1464 = vmatprep.subr.mxu0 0.0
    %1465 = vmatpush1.msra.mxu0 0.0
    %1466 = vmatprep.subr.mxu0 0.0
    %1467 = vmatpush1.msra.mxu0 0.0
    %1468 = vmatprep.subr.mxu0 0.0
    %1469 = vmatpush1.msra.mxu0 0.0
    %1470 = vmatprep.subr.mxu0 0.0
    %1471 = vmatpush1.msra.mxu0 0.0
    %1472 = vmatprep.subr.mxu0 0.0
    %1473 = vmatpush1.msra.mxu0 0.0
    %1474 = vmatprep.subr.mxu0 0.0
    %1475 = vmatpush1.msra.mxu0 0.0
    %1476 = vmatprep.subr.mxu0 0.0
    %1477 = vmatpush1.msra.mxu0 0.0
    %1478 = vmatprep.subr.mxu0 0.0
    %1479 = vmatpush1.msra.mxu0 0.0
    %1480 = vmatprep.subr.mxu0 0.0
    %1481 = vmatpush1.msra.mxu0 0.0
    %1482 = vmatprep.subr.mxu0 0.0
    %1483 = vmatpush1.msra.mxu0 0.0
    %1484 = vmatprep.subr.mxu0 0.0
    %1485 = vmatpush1.msra.mxu0 0.0
    %1486 = vmatprep.subr.mxu0 0.0
    %1487 = vmatpush1.msra.mxu0 0.0
    %1488 = vmatprep.subr.mxu0 0.0
    %1489 = vmatpush1.msra.mxu0 0.0
    %1490 = vmatprep.subr.mxu0 0.0
    %1491 = vmatpush1.msra.mxu0 0.0
    %1492 = vmatprep.subr.mxu0 0.0
    %1493 = vmatpush1.msra.mxu0 0.0
    %1494 = vmatprep.subr.mxu0 0.0
    %1495 = vmatpush1.msra.mxu0 0.0
    %1496 = vmatprep.mubr.f32.mxu0 0.0
    %1497 = vmatmul.mubr.f32.gmra.mrb[0].mxu0 %v1430
    %v1498 = vpop.f32.mrb[0].mxu0
    %v1499 = vadd.f32 0.0, %v1498
    %v1500 = vpop.f32.mrb[0].mxu0
    %1501 = vdwg.mxu0
    %v1502 = vadd.f32 %v1423, %v1499
    %v1503 = vmul.f32 %v1502, 0.5
    %v1504 = vtanh.pop %v1503
    %v1505 = vmul.f32 %v1504, 0.5
    %v1506 = vadd.f32 %v1505, 0.5
    %v1507 = vtanh.pop %v1502
    %v1508 = vmul.f32 %v1506, %v1306
    %1510 = vrot.lane.b32.xlu0 %v1507, 64
    %v1511 = vpop.permute.xlu0 %1510
    %v1513 = vmul.f32 %v1506, %v1511
    %1515 = vrot.lane.b32.xlu0 %v1513, 32
    %v1516 = vpop.permute.xlu0 %1515
    %v1518 = vadd.f32 %v1508, %v1516
    %v1519 = vtanh.pop %v1518
    %1521 = vrot.lane.b32.xlu0 %v1519, 64
    %v1522 = vpop.permute.xlu0 %1521
    %v1524 = vmul.f32 %v1506, %v1522
    %1526 = vrot.lane.b32.xlu0 %v1422, 32
    %v1527 = vpop.permute.xlu0 %1526
    %1529 = vst.msk [vmem:[%s889] sm:$0xff] %vm241, %v1527
    %1531 = vrot.lane.b32.xlu0 %v1524, 64
    %v1532 = vpop.permute.xlu0 %1531
    %1534 = vst.msk [vmem:[%s883] sm:$0xff] %vm449, %v1532
    %v1535 = vld [vmem:[%s556] sm:$0xff]
    %v1536 = vld [vmem:[#allocation4] sm:$0xff]
    %v1537 = vld [vmem:[#allocation4 + $0x8] sm:$0xff]
    %v1538 = vld [vmem:[#allocation4 + $0x10] sm:$0xff]
    %v1539 = vld [vmem:[#allocation4 + $0x18] sm:$0xff]
    %v1540 = vsel %vm241, %v1527, 0
    %1542 = vmatprep.subr.mxu0 0.0
    %1543 = vmatpush1.msra.mxu0 %v1536
    %1544 = vmatprep.subr.mxu0 0.0
    %1545 = vmatpush1.msra.mxu0 %v1537
    %1546 = vmatprep.subr.mxu0 0.0
    %1547 = vmatpush1.msra.mxu0 %v1538
    %1548 = vmatprep.subr.mxu0 0.0
    %1549 = vmatpush1.msra.mxu0 %v1539
    %1550 = vmatprep.subr.mxu0 0.0
    %1551 = vmatpush1.msra.mxu0 0.0
    %1552 = vmatprep.subr.mxu0 0.0
    %1553 = vmatpush1.msra.mxu0 0.0
    %1554 = vmatprep.subr.mxu0 0.0
    %1555 = vmatpush1.msra.mxu0 0.0
    %1556 = vmatprep.subr.mxu0 0.0
    %1557 = vmatpush1.msra.mxu0 0.0
    %1558 = vmatprep.subr.mxu0 0.0
    %1559 = vmatpush1.msra.mxu0 0.0
    %1560 = vmatprep.subr.mxu0 0.0
    %1561 = vmatpush1.msra.mxu0 0.0
    %1562 = vmatprep.subr.mxu0 0.0
    %1563 = vmatpush1.msra.mxu0 0.0
    %1564 = vmatprep.subr.mxu0 0.0
    %1565 = vmatpush1.msra.mxu0 0.0
    %1566 = vmatprep.subr.mxu0 0.0
    %1567 = vmatpush1.msra.mxu0 0.0
    %1568 = vmatprep.subr.mxu0 0.0
    %1569 = vmatpush1.msra.mxu0 0.0
    %1570 = vmatprep.subr.mxu0 0.0
    %1571 = vmatpush1.msra.mxu0 0.0
    %1572 = vmatprep.subr.mxu0 0.0
    %1573 = vmatpush1.msra.mxu0 0.0
    %1574 = vmatprep.subr.mxu0 0.0
    %1575 = vmatpush1.msra.mxu0 0.0
    %1576 = vmatprep.subr.mxu0 0.0
    %1577 = vmatpush1.msra.mxu0 0.0
    %1578 = vmatprep.subr.mxu0 0.0
    %1579 = vmatpush1.msra.mxu0 0.0
    %1580 = vmatprep.subr.mxu0 0.0
    %1581 = vmatpush1.msra.mxu0 0.0
    %1582 = vmatprep.subr.mxu0 0.0
    %1583 = vmatpush1.msra.mxu0 0.0
    %1584 = vmatprep.subr.mxu0 0.0
    %1585 = vmatpush1.msra.mxu0 0.0
    %1586 = vmatprep.subr.mxu0 0.0
    %1587 = vmatpush1.msra.mxu0 0.0
    %1588 = vmatprep.subr.mxu0 0.0
    %1589 = vmatpush1.msra.mxu0 0.0
    %1590 = vmatprep.subr.mxu0 0.0
    %1591 = vmatpush1.msra.mxu0 0.0
    %1592 = vmatprep.subr.mxu0 0.0
    %1593 = vmatpush1.msra.mxu0 0.0
    %1594 = vmatprep.subr.mxu0 0.0
    %1595 = vmatpush1.msra.mxu0 0.0
    %1596 = vmatprep.subr.mxu0 0.0
    %1597 = vmatpush1.msra.mxu0 0.0
    %1598 = vmatprep.subr.mxu0 0.0
    %1599 = vmatpush1.msra.mxu0 0.0
    %1600 = vmatprep.subr.mxu0 0.0
    %1601 = vmatpush1.msra.mxu0 0.0
    %1602 = vmatprep.subr.mxu0 0.0
    %1603 = vmatpush1.msra.mxu0 0.0
    %1604 = vmatprep.subr.mxu0 0.0
    %1605 = vmatpush1.msra.mxu0 0.0
    %1606 = vmatprep.mubr.f32.mxu0 0.0
    %1607 = vmatmul.mubr.f32.gmra.mrb[0].mxu0 %v1540
    %v1608 = vpop.f32.mrb[0].mxu0
    %v1609 = vadd.f32 0.0, %v1608
    %v1610 = vpop.f32.mrb[0].mxu0
    %1611 = vdwg.mxu0
    %v1612 = vadd.f32 %v1535, %v1609
    %v1613 = vmul.f32 %v1612, 0.5
    %v1614 = vtanh.pop %v1613
    %v1615 = vmul.f32 %v1614, 0.5
    %v1616 = vadd.f32 %v1615, 0.5
    %v1617 = vtanh.pop %v1612
    %v1618 = vmul.f32 %v1616, %v1416
    %1620 = vrot.lane.b32.xlu0 %v1617, 64
    %v1621 = vpop.permute.xlu0 %1620
    %v1623 = vmul.f32 %v1616, %v1621
    %1625 = vrot.lane.b32.xlu0 %v1623, 32
    %v1626 = vpop.permute.xlu0 %1625
    %v1628 = vadd.f32 %v1618, %v1626
    %v1629 = vtanh.pop %v1628
    %1631 = vrot.lane.b32.xlu0 %v1629, 64
    %v1632 = vpop.permute.xlu0 %1631
    %v1634 = vmul.f32 %v1616, %v1632
    %v1635 = vld [vmem:[%s453 + $0x8] sm:$0xff]
    %v1636 = vld [vmem:[#allocation7] sm:$0xff]
    %v1637 = vld [vmem:[#allocation7 + $0x8] sm:$0xff]
    %v1638 = vld [vmem:[#allocation7 + $0x10] sm:$0xff]
    %v1639 = vld [vmem:[#allocation7 + $0x18] sm:$0xff]
    %1640 = vrot.lane.b32.xlu0 %v1524, 32
    %v1641 = vpop.permute.xlu0 %1640
    %v1642 = vsel %vm241, %v1641, 0
    %1644 = vmatprep.subr.mxu0 0.0
    %1645 = vmatpush1.msra.mxu0 %v1636
    %1646 = vmatprep.subr.mxu0 0.0
    %1647 = vmatpush1.msra.mxu0 %v1637
    %1648 = vmatprep.subr.mxu0 0.0
    %1649 = vmatpush1.msra.mxu0 %v1638
    %1650 = vmatprep.subr.mxu0 0.0
    %1651 = vmatpush1.msra.mxu0 %v1639
    %1652 = vmatprep.subr.mxu0 0.0
    %1653 = vmatpush1.msra.mxu0 0.0
    %1654 = vmatprep.subr.mxu0 0.0
    %1655 = vmatpush1.msra.mxu0 0.0
    %1656 = vmatprep.subr.mxu0 0.0
    %1657 = vmatpush1.msra.mxu0 0.0
    %1658 = vmatprep.subr.mxu0 0.0
    %1659 = vmatpush1.msra.mxu0 0.0
    %1660 = vmatprep.subr.mxu0 0.0
    %1661 = vmatpush1.msra.mxu0 0.0
    %1662 = vmatprep.subr.mxu0 0.0
    %1663 = vmatpush1.msra.mxu0 0.0
    %1664 = vmatprep.subr.mxu0 0.0
    %1665 = vmatpush1.msra.mxu0 0.0
    %1666 = vmatprep.subr.mxu0 0.0
    %1667 = vmatpush1.msra.mxu0 0.0
    %1668 = vmatprep.subr.mxu0 0.0
    %1669 = vmatpush1.msra.mxu0 0.0
    %1670 = vmatprep.subr.mxu0 0.0
    %1671 = vmatpush1.msra.mxu0 0.0
    %1672 = vmatprep.subr.mxu0 0.0
    %1673 = vmatpush1.msra.mxu0 0.0
    %1674 = vmatprep.subr.mxu0 0.0
    %1675 = vmatpush1.msra.mxu0 0.0
    %1676 = vmatprep.subr.mxu0 0.0
    %1677 = vmatpush1.msra.mxu0 0.0
    %1678 = vmatprep.subr.mxu0 0.0
    %1679 = vmatpush1.msra.mxu0 0.0
    %1680 = vmatprep.subr.mxu0 0.0
    %1681 = vmatpush1.msra.mxu0 0.0
    %1682 = vmatprep.subr.mxu0 0.0
    %1683 = vmatpush1.msra.mxu0 0.0
    %1684 = vmatprep.subr.mxu0 0.0
    %1685 = vmatpush1.msra.mxu0 0.0
    %1686 = vmatprep.subr.mxu0 0.0
    %1687 = vmatpush1.msra.mxu0 0.0
    %1688 = vmatprep.subr.mxu0 0.0
    %1689 = vmatpush1.msra.mxu0 0.0
    %1690 = vmatprep.subr.mxu0 0.0
    %1691 = vmatpush1.msra.mxu0 0.0
    %1692 = vmatprep.subr.mxu0 0.0
    %1693 = vmatpush1.msra.mxu0 0.0
    %1694 = vmatprep.subr.mxu0 0.0
    %1695 = vmatpush1.msra.mxu0 0.0
    %1696 = vmatprep.subr.mxu0 0.0
    %1697 = vmatpush1.msra.mxu0 0.0
    %1698 = vmatprep.subr.mxu0 0.0
    %1699 = vmatpush1.msra.mxu0 0.0
    %1700 = vmatprep.subr.mxu0 0.0
    %1701 = vmatpush1.msra.mxu0 0.0
    %1702 = vmatprep.subr.mxu0 0.0
    %1703 = vmatpush1.msra.mxu0 0.0
    %1704 = vmatprep.subr.mxu0 0.0
    %1705 = vmatpush1.msra.mxu0 0.0
    %1706 = vmatprep.subr.mxu0 0.0
    %1707 = vmatpush1.msra.mxu0 0.0
    %1708 = vmatprep.mubr.f32.mxu0 0.0
    %1709 = vmatmul.mubr.f32.gmra.mrb[0].mxu0 %v1642
    %v1710 = vpop.f32.mrb[0].mxu0
    %v1711 = vadd.f32 0.0, %v1710
    %v1712 = vpop.f32.mrb[0].mxu0
    %1713 = vdwg.mxu0
    %v1714 = vadd.f32 %v1635, %v1711
    %v1715 = vmul.f32 %v1714, 0.5
    %v1716 = vtanh.pop %v1715
    %v1717 = vmul.f32 %v1716, 0.5
    %v1718 = vadd.f32 %v1717, 0.5
    %v1719 = vtanh.pop %v1714
    %v1720 = vmul.f32 %v1718, %v1518
    %1722 = vrot.lane.b32.xlu0 %v1719, 64
    %v1723 = vpop.permute.xlu0 %1722
    %v1725 = vmul.f32 %v1718, %v1723
    %1727 = vrot.lane.b32.xlu0 %v1725, 32
    %v1728 = vpop.permute.xlu0 %1727
    %v1730 = vadd.f32 %v1720, %v1728
    %v1731 = vtanh.pop %v1730
    %1733 = vrot.lane.b32.xlu0 %v1731, 64
    %v1734 = vpop.permute.xlu0 %1733
    %v1736 = vmul.f32 %v1718, %v1734
    %1738 = vrot.lane.b32.xlu0 %v1634, 32
    %v1739 = vpop.permute.xlu0 %1738
    %1741 = vst.msk [vmem:[%s669] sm:$0xff] %vm241, %v1739
    %1743 = vrot.lane.b32.xlu0 %v1736, 64
    %v1744 = vpop.permute.xlu0 %1743
    %1746 = vst.msk [vmem:[%s663] sm:$0xff] %vm449, %v1744
    %v1747 = vld [vmem:[%s340] sm:$0xff]
    %v1748 = vld [vmem:[#allocation4] sm:$0xff]
    %v1749 = vld [vmem:[#allocation4 + $0x8] sm:$0xff]
    %v1750 = vld [vmem:[#allocation4 + $0x10] sm:$0xff]
    %v1751 = vld [vmem:[#allocation4 + $0x18] sm:$0xff]
    %v1752 = vsel %vm241, %v1739, 0
    %1754 = vmatprep.subr.mxu0 0.0
    %1755 = vmatpush1.msra.mxu0 %v1748
    %1756 = vmatprep.subr.mxu0 0.0
    %1757 = vmatpush1.msra.mxu0 %v1749
    %1758 = vmatprep.subr.mxu0 0.0
    %1759 = vmatpush1.msra.mxu0 %v1750
    %1760 = vmatprep.subr.mxu0 0.0
    %1761 = vmatpush1.msra.mxu0 %v1751
    %1762 = vmatprep.subr.mxu0 0.0
    %1763 = vmatpush1.msra.mxu0 0.0
    %1764 = vmatprep.subr.mxu0 0.0
    %1765 = vmatpush1.msra.mxu0 0.0
    %1766 = vmatprep.subr.mxu0 0.0
    %1767 = vmatpush1.msra.mxu0 0.0
    %1768 = vmatprep.subr.mxu0 0.0
    %1769 = vmatpush1.msra.mxu0 0.0
    %1770 = vmatprep.subr.mxu0 0.0
    %1771 = vmatpush1.msra.mxu0 0.0
    %1772 = vmatprep.subr.mxu0 0.0
    %1773 = vmatpush1.msra.mxu0 0.0
    %1774 = vmatprep.subr.mxu0 0.0
    %1775 = vmatpush1.msra.mxu0 0.0
    %1776 = vmatprep.subr.mxu0 0.0
    %1777 = vmatpush1.msra.mxu0 0.0
    %1778 = vmatprep.subr.mxu0 0.0
    %1779 = vmatpush1.msra.mxu0 0.0
    %1780 = vmatprep.subr.mxu0 0.0
    %1781 = vmatpush1.msra.mxu0 0.0
    %1782 = vmatprep.subr.mxu0 0.0
    %1783 = vmatpush1.msra.mxu0 0.0
    %1784 = vmatprep.subr.mxu0 0.0
    %1785 = vmatpush1.msra.mxu0 0.0
    %1786 = vmatprep.subr.mxu0 0.0
    %1787 = vmatpush1.msra.mxu0 0.0
    %1788 = vmatprep.subr.mxu0 0.0
    %1789 = vmatpush1.msra.mxu0 0.0
    %1790 = vmatprep.subr.mxu0 0.0
    %1791 = vmatpush1.msra.mxu0 0.0
    %1792 = vmatprep.subr.mxu0 0.0
    %1793 = vmatpush1.msra.mxu0 0.0
    %1794 = vmatprep.subr.mxu0 0.0
    %1795 = vmatpush1.msra.mxu0 0.0
    %1796 = vmatprep.subr.mxu0 0.0
    %1797 = vmatpush1.msra.mxu0 0.0
    %1798 = vmatprep.subr.mxu0 0.0
    %1799 = vmatpush1.msra.mxu0 0.0
    %1800 = vmatprep.subr.mxu0 0.0
    %1801 = vmatpush1.msra.mxu0 0.0
    %1802 = vmatprep.subr.mxu0 0.0
    %1803 = vmatpush1.msra.mxu0 0.0
    %1804 = vmatprep.subr.mxu0 0.0
    %1805 = vmatpush1.msra.mxu0 0.0
    %1806 = vmatprep.subr.mxu0 0.0
    %1807 = vmatpush1.msra.mxu0 0.0
    %1808 = vmatprep.subr.mxu0 0.0
    %1809 = vmatpush1.msra.mxu0 0.0
    %1810 = vmatprep.subr.mxu0 0.0
    %1811 = vmatpush1.msra.mxu0 0.0
    %1812 = vmatprep.subr.mxu0 0.0
    %1813 = vmatpush1.msra.mxu0 0.0
    %1814 = vmatprep.subr.mxu0 0.0
    %1815 = vmatpush1.msra.mxu0 0.0
    %1816 = vmatprep.subr.mxu0 0.0
    %1817 = vmatpush1.msra.mxu0 0.0
    %1818 = vmatprep.mubr.f32.mxu0 0.0
    %1819 = vmatmul.mubr.f32.gmra.mrb[0].mxu0 %v1752
    %v1820 = vpop.f32.mrb[0].mxu0
    %v1821 = vadd.f32 0.0, %v1820
    %v1822 = vpop.f32.mrb[0].mxu0
    %1823 = vdwg.mxu0
    %v1824 = vadd.f32 %v1747, %v1821
    %v1825 = vmul.f32 %v1824, 0.5
    %v1826 = vtanh.pop %v1825
    %v1827 = vmul.f32 %v1826, 0.5
    %v1828 = vadd.f32 %v1827, 0.5
    %v1829 = vtanh.pop %v1824
    %v1830 = vmul.f32 %v1828, %v1628
    %1832 = vrot.lane.b32.xlu0 %v1829, 64
    %v1833 = vpop.permute.xlu0 %1832
    %v1835 = vmul.f32 %v1828, %v1833
    %1837 = vrot.lane.b32.xlu0 %v1835, 32
    %v1838 = vpop.permute.xlu0 %1837
    %v1840 = vadd.f32 %v1830, %v1838
    %v1841 = vtanh.pop %v1840
    %1843 = vrot.lane.b32.xlu0 %v1841, 64
    %v1844 = vpop.permute.xlu0 %1843
    %v1846 = vmul.f32 %v1828, %v1844
    %v1847 = vld [vmem:[%s235 + $0x8] sm:$0xff]
    %v1848 = vld [vmem:[#allocation7] sm:$0xff]
    %v1849 = vld [vmem:[#allocation7 + $0x8] sm:$0xff]
    %v1850 = vld [vmem:[#allocation7 + $0x10] sm:$0xff]
    %v1851 = vld [vmem:[#allocation7 + $0x18] sm:$0xff]
    %1852 = vrot.lane.b32.xlu0 %v1736, 32
    %v1853 = vpop.permute.xlu0 %1852
    %v1854 = vsel %vm241, %v1853, 0
    %1856 = vmatprep.subr.mxu0 0.0
    %1857 = vmatpush1.msra.mxu0 %v1848
    %1858 = vmatprep.subr.mxu0 0.0
    %1859 = vmatpush1.msra.mxu0 %v1849
    %1860 = vmatprep.subr.mxu0 0.0
    %1861 = vmatpush1.msra.mxu0 %v1850
    %1862 = vmatprep.subr.mxu0 0.0
    %1863 = vmatpush1.msra.mxu0 %v1851
    %1864 = vmatprep.subr.mxu0 0.0
    %1865 = vmatpush1.msra.mxu0 0.0
    %1866 = vmatprep.subr.mxu0 0.0
    %1867 = vmatpush1.msra.mxu0 0.0
    %1868 = vmatprep.subr.mxu0 0.0
    %1869 = vmatpush1.msra.mxu0 0.0
    %1870 = vmatprep.subr.mxu0 0.0
    %1871 = vmatpush1.msra.mxu0 0.0
    %1872 = vmatprep.subr.mxu0 0.0
    %1873 = vmatpush1.msra.mxu0 0.0
    %1874 = vmatprep.subr.mxu0 0.0
    %1875 = vmatpush1.msra.mxu0 0.0
    %1876 = vmatprep.subr.mxu0 0.0
    %1877 = vmatpush1.msra.mxu0 0.0
    %1878 = vmatprep.subr.mxu0 0.0
    %1879 = vmatpush1.msra.mxu0 0.0
    %1880 = vmatprep.subr.mxu0 0.0
    %1881 = vmatpush1.msra.mxu0 0.0
    %1882 = vmatprep.subr.mxu0 0.0
    %1883 = vmatpush1.msra.mxu0 0.0
    %1884 = vmatprep.subr.mxu0 0.0
    %1885 = vmatpush1.msra.mxu0 0.0
    %1886 = vmatprep.subr.mxu0 0.0
    %1887 = vmatpush1.msra.mxu0 0.0
    %1888 = vmatprep.subr.mxu0 0.0
    %1889 = vmatpush1.msra.mxu0 0.0
    %1890 = vmatprep.subr.mxu0 0.0
    %1891 = vmatpush1.msra.mxu0 0.0
    %1892 = vmatprep.subr.mxu0 0.0
    %1893 = vmatpush1.msra.mxu0 0.0
    %1894 = vmatprep.subr.mxu0 0.0
    %1895 = vmatpush1.msra.mxu0 0.0
    %1896 = vmatprep.subr.mxu0 0.0
    %1897 = vmatpush1.msra.mxu0 0.0
    %1898 = vmatprep.subr.mxu0 0.0
    %1899 = vmatpush1.msra.mxu0 0.0
    %1900 = vmatprep.subr.mxu0 0.0
    %1901 = vmatpush1.msra.mxu0 0.0
    %1902 = vmatprep.subr.mxu0 0.0
    %1903 = vmatpush1.msra.mxu0 0.0
    %1904 = vmatprep.subr.mxu0 0.0
    %1905 = vmatpush1.msra.mxu0 0.0
    %1906 = vmatprep.subr.mxu0 0.0
    %1907 = vmatpush1.msra.mxu0 0.0
    %1908 = vmatprep.subr.mxu0 0.0
    %1909 = vmatpush1.msra.mxu0 0.0
    %1910 = vmatprep.subr.mxu0 0.0
    %1911 = vmatpush1.msra.mxu0 0.0
    %1912 = vmatprep.subr.mxu0 0.0
    %1913 = vmatpush1.msra.mxu0 0.0
    %1914 = vmatprep.subr.mxu0 0.0
    %1915 = vmatpush1.msra.mxu0 0.0
    %1916 = vmatprep.subr.mxu0 0.0
    %1917 = vmatpush1.msra.mxu0 0.0
    %1918 = vmatprep.subr.mxu0 0.0
    %1919 = vmatpush1.msra.mxu0 0.0
    %1920 = vmatprep.mubr.f32.mxu0 0.0
    %1921 = vmatmul.mubr.f32.gmra.mrb[0].mxu0 %v1854
    %v1922 = vpop.f32.mrb[0].mxu0
    %v1923 = vadd.f32 0.0, %v1922
    %v1924 = vpop.f32.mrb[0].mxu0
    %1925 = vdwg.mxu0
    %v1926 = vadd.f32 %v1847, %v1923
    %v1927 = vmul.f32 %v1926, 0.5
    %v1928 = vtanh.pop %v1927
    %v1929 = vmul.f32 %v1928, 0.5
    %v1930 = vadd.f32 %v1929, 0.5
    %v1931 = vtanh.pop %v1926
    %v1932 = vmul.f32 %v1930, %v1730
    %1934 = vrot.lane.b32.xlu0 %v1931, 64
    %v1935 = vpop.permute.xlu0 %1934
    %v1937 = vmul.f32 %v1930, %v1935
    %1939 = vrot.lane.b32.xlu0 %v1937, 32
    %v1940 = vpop.permute.xlu0 %1939
    %v1942 = vadd.f32 %v1932, %v1940
    %v1943 = vtanh.pop %v1942
    %1945 = vrot.lane.b32.xlu0 %v1943, 64
    %v1946 = vpop.permute.xlu0 %1945
    %v1948 = vmul.f32 %v1930, %v1946
    %1950 = vrot.lane.b32.xlu0 %v1846, 32
    %v1951 = vpop.permute.xlu0 %1950
    %1953 = vst.msk [vmem:[%s448] sm:$0xff] %vm241, %v1951
    %1955 = vrot.lane.b32.xlu0 %v1948, 64
    %v1956 = vpop.permute.xlu0 %1955
    %1958 = vst.msk [vmem:[#allocation3] sm:$0xff] %vm449, %v1956
    %v1959 = vld [vmem:[#allocation3] sm:$0xff]
    %v1960 = vld [vmem:[#allocation3 + $0x8] sm:$0xff]
    %v1961 = vld [vmem:[#allocation3 + $0x10] sm:$0xff]
    %v1962 = vld [vmem:[#allocation3 + $0x18] sm:$0xff]
    %v1963 = vld [vmem:[#allocation3 + $0x20] sm:$0xff]
    %v1964 = vld [vmem:[#allocation3 + $0x28] sm:$0xff]
    %v1965 = vld [vmem:[#allocation3 + $0x30] sm:$0xff]
    %v1966 = vld [vmem:[#allocation3 + $0x38] sm:$0xff]
    %v1967 = vld [vmem:[%s5] sm:$0xff]
    %v1968 = vld [vmem:[%s5 + $0x8] sm:$0xff]
    %v1969 = vld [vmem:[%s5 + $0x10] sm:$0xff]
    %v1970 = vld [vmem:[%s5 + $0x18] sm:$0xff]
    %v1971 = vld [vmem:[%s5 + $0x20] sm:$0xff]
    %v1972 = vld [vmem:[%s5 + $0x28] sm:$0xff]
    %v1973 = vld [vmem:[%s5 + $0x30] sm:$0xff]
    %v1974 = vld [vmem:[%s5 + $0x38] sm:$0xff]
    %v1975 = vld [vmem:[%s6] sm:$0x1]
    %v1977 = vlaneseq
    %v1978 = vshrl.u32 %v1977, 7
    %v1979 = vsub.s32 0, %v1978
    %v1980 = vrot.slane %v1975, %v1979
    %vm1982 = vcmask 523264
    %v1984 = vsel %vm1982, %v1959, 0
    %v1987 = vsel %vm1982, %v1960, 0
    %v1990 = vsel %vm1982, %v1961, 0
    %v1993 = vsel %vm1982, %v1962, 0
    %v1996 = vsel %vm1982, %v1963, 0
    %v1999 = vsel %vm1982, %v1964, 0
    %v2002 = vsel %vm1982, %v1965, 0
    %v2005 = vsel %vm1982, %v1966, 0
    %2007 = vmatprep.subr.mxu0 0.0
    %2008 = vmatpush1.msra.mxu0 %v1967
    %2009 = vmatprep.subr.mxu0 0.0
    %2010 = vmatpush1.msra.mxu0 %v1968
    %2011 = vmatprep.subr.mxu0 0.0
    %2012 = vmatpush1.msra.mxu0 %v1969
    %2013 = vmatprep.subr.mxu0 0.0
    %2014 = vmatpush1.msra.mxu0 %v1970
    %2015 = vmatprep.subr.mxu0 0.0
    %2016 = vmatpush1.msra.mxu0 %v1971
    %2017 = vmatprep.subr.mxu0 0.0
    %2018 = vmatpush1.msra.mxu0 %v1972
    %2019 = vmatprep.subr.mxu0 0.0
    %2020 = vmatpush1.msra.mxu0 %v1973
    %2021 = vmatprep.subr.mxu0 0.0
    %2022 = vmatpush1.msra.mxu0 %v1974
    %2023 = vmatprep.subr.mxu0 0.0
    %2024 = vmatpush1.msra.mxu0 0.0
    %2025 = vmatprep.subr.mxu0 0.0
    %2026 = vmatpush1.msra.mxu0 0.0
    %2027 = vmatprep.subr.mxu0 0.0
    %2028 = vmatpush1.msra.mxu0 0.0
    %2029 = vmatprep.subr.mxu0 0.0
    %2030 = vmatpush1.msra.mxu0 0.0
    %2031 = vmatprep.subr.mxu0 0.0
    %2032 = vmatpush1.msra.mxu0 0.0
    %2033 = vmatprep.subr.mxu0 0.0
    %2034 = vmatpush1.msra.mxu0 0.0
    %2035 = vmatprep.subr.mxu0 0.0
    %2036 = vmatpush1.msra.mxu0 0.0
    %2037 = vmatprep.subr.mxu0 0.0
    %2038 = vmatpush1.msra.mxu0 0.0
    %2039 = vmatprep.subr.mxu0 0.0
    %2040 = vmatpush1.msra.mxu0 0.0
    %2041 = vmatprep.subr.mxu0 0.0
    %2042 = vmatpush1.msra.mxu0 0.0
    %2043 = vmatprep.subr.mxu0 0.0
    %2044 = vmatpush1.msra.mxu0 0.0
    %2045 = vmatprep.subr.mxu0 0.0
    %2046 = vmatpush1.msra.mxu0 0.0
    %2047 = vmatprep.subr.mxu0 0.0
    %2048 = vmatpush1.msra.mxu0 0.0
    %2049 = vmatprep.subr.mxu0 0.0
    %2050 = vmatpush1.msra.mxu0 0.0
    %2051 = vmatprep.subr.mxu0 0.0
    %2052 = vmatpush1.msra.mxu0 0.0
    %2053 = vmatprep.subr.mxu0 0.0
    %2054 = vmatpush1.msra.mxu0 0.0
    %2055 = vmatprep.subr.mxu0 0.0
    %2056 = vmatpush1.msra.mxu0 0.0
    %2057 = vmatprep.subr.mxu0 0.0
    %2058 = vmatpush1.msra.mxu0 0.0
    %2059 = vmatprep.subr.mxu0 0.0
    %2060 = vmatpush1.msra.mxu0 0.0
    %2061 = vmatprep.subr.mxu0 0.0
    %2062 = vmatpush1.msra.mxu0 0.0
    %2063 = vmatprep.subr.mxu0 0.0
    %2064 = vmatpush1.msra.mxu0 0.0
    %2065 = vmatprep.subr.mxu0 0.0
    %2066 = vmatpush1.msra.mxu0 0.0
    %2067 = vmatprep.subr.mxu0 0.0
    %2068 = vmatpush1.msra.mxu0 0.0
    %2069 = vmatprep.subr.mxu0 0.0
    %2070 = vmatpush1.msra.mxu0 0.0
    %2071 = vmatprep.mubr.f32.mxu0 0.0
    %2072 = vmatmul.mubr.f32.gmra.mrb[0].mxu0 %v1984
    %v2073 = vpop.f32.mrb[0].mxu0
    %v2074 = vadd.f32 %v1980, %v2073
    %v2075 = vpop.f32.mrb[0].mxu0
    %2076 = vmatprep.mubr.f32.mxu0 0.0
    %2077 = vmatmul.mubr.f32.gmra.mrb[0].mxu0 %v1987
    %v2078 = vpop.f32.mrb[0].mxu0
    %v2079 = vadd.f32 %v1980, %v2078
    %v2080 = vpop.f32.mrb[0].mxu0
    %2081 = vmatprep.mubr.f32.mxu0 0.0
    %2082 = vmatmul.mubr.f32.gmra.mrb[0].mxu0 %v1990
    %v2083 = vpop.f32.mrb[0].mxu0
    %v2084 = vadd.f32 %v1980, %v2083
    %v2085 = vpop.f32.mrb[0].mxu0
    %2086 = vmatprep.mubr.f32.mxu0 0.0
    %2087 = vmatmul.mubr.f32.gmra.mrb[0].mxu0 %v1993
    %v2088 = vpop.f32.mrb[0].mxu0
    %v2089 = vadd.f32 %v1980, %v2088
    %v2090 = vpop.f32.mrb[0].mxu0
    %2091 = vmatprep.mubr.f32.mxu0 0.0
    %2092 = vmatmul.mubr.f32.gmra.mrb[0].mxu0 %v1996
    %v2093 = vpop.f32.mrb[0].mxu0
    %v2094 = vadd.f32 %v1980, %v2093
    %v2095 = vpop.f32.mrb[0].mxu0
    %2096 = vmatprep.mubr.f32.mxu0 0.0
    %2097 = vmatmul.mubr.f32.gmra.mrb[0].mxu0 %v1999
    %v2098 = vpop.f32.mrb[0].mxu0
    %v2099 = vadd.f32 %v1980, %v2098
    %v2100 = vpop.f32.mrb[0].mxu0
    %2101 = vmatprep.mubr.f32.mxu0 0.0
    %2102 = vmatmul.mubr.f32.gmra.mrb[0].mxu0 %v2002
    %v2103 = vpop.f32.mrb[0].mxu0
    %v2104 = vadd.f32 %v1980, %v2103
    %v2105 = vpop.f32.mrb[0].mxu0
    %2106 = vmatprep.mubr.f32.mxu0 0.0
    %2107 = vmatmul.mubr.f32.gmra.mrb[0].mxu0 %v2005
    %v2108 = vpop.f32.mrb[0].mxu0
    %v2109 = vadd.f32 %v1980, %v2108
    %v2110 = vpop.f32.mrb[0].mxu0
    %2111 = vdwg.mxu0
    %2112 = vst [vmem:[#allocation9] sm:$0xff] %v2074
    %2113 = vst [vmem:[#allocation9 + $0x8] sm:$0xff] %v2079
    %2114 = vst [vmem:[#allocation9 + $0x10] sm:$0xff] %v2084
    %2115 = vst [vmem:[#allocation9 + $0x18] sm:$0xff] %v2089
    %2116 = vst [vmem:[#allocation9 + $0x20] sm:$0xff] %v2094
    %2117 = vst [vmem:[#allocation9 + $0x28] sm:$0xff] %v2099
    %2118 = vst [vmem:[#allocation9 + $0x30] sm:$0xff] %v2104
    %2119 = vst [vmem:[#allocation9 + $0x38] sm:$0xff] %v2109
    // Predicated region
    $region38: #{tpu_custom_call.1} parent=1 // pred_check
      _
    $region39: #{tpu_custom_call.1} parent=1 // pred_check_branch
      %2121 = sbr.rel (0) target = $region41
    $region40: #{tpu_custom_call.1} parent=1 // pred_region
      %s2123 = ssub.s32 1024, 1024
      %2124 = vsyncadd [#allocation6], %s2123
      %s2125 = sshll.u32 [#allocation9], 4
      %s2126 = int_to_ptr.vmem [resolvable:$true] %s2125
      %2131 = dma.vmem_to_hbm [thread:$0]  %s2126, 1024, %s7, [#allocation6], 128, 128, 8
    $region41: #{tpu_custom_call.1} parent=1 // pred_fallthru
      _
    // Predicated region
    $region42: #{tpu_custom_call.1} parent=1 // pred_check
      _
    $region43: #{tpu_custom_call.1} parent=1 // pred_check_branch
      %2133 = sbr.rel (0) target = $region45
    $region44: #{tpu_custom_call.1} parent=1 // pred_region
      %2134 = dma.done [#allocation6], 1024
    $region45: #{tpu_custom_call.1} parent=1 // pred_fallthru
      _
    %2135 = vsyncpa [#allocation5], 1
    %2136 = vsyncpa [#allocation8], 1
    %2137 = vsyncpa [#allocation6], 1

</llo_original>
